<compile_context>
chip_gen: v6e
topology: v6e:2x2x1
jax: 0.10.0
libtpu: 0.0.40
codegen_flags: <defaults>
</compile_context>

<pallas_src>
import functools

import jax
import jax.numpy as jnp
from jax import lax
from jax.experimental import pallas as pl
from jax.experimental.pallas import tpu as pltpu


# ----------------------------------------------------------------------------
# In-kernel math helpers
# ----------------------------------------------------------------------------
def _gelu_tanh(x):
    # tanh-approx GELU; tanh lowers to the EUP (separate bundle slot from the VALU).
    c = 0.7978845608028654  # sqrt(2/pi)
    inner = c * (x + 0.044715 * (x * x * x))
    return 0.5 * x * (1.0 + jnp.tanh(inner))


def _bias_gelu(acc_f32, b_ref, dtype):
    # f32 MXU accumulator -> compute dtype once, bias add + GELU in that dtype.
    h = acc_f32.astype(dtype) + b_ref[...].astype(dtype)
    return _gelu_tanh(h)


# ----------------------------------------------------------------------------
# Fused RefinementNet kernel
# ----------------------------------------------------------------------------
def _refinement_kernel(x_ref, g_ref, bn_ref,
                       w1_ref, b1_ref, w2_ref, b2_ref, w3_ref, b3_ref,
                       o_ref, *, add_residual, compute_dtype):
    x = x_ref[...].astype(jnp.float32)                       # (tm, D_in)
    inv_d = 1.0 / x.shape[1]

    # LayerNorm(input_dim), eps = 1e-5 (PyTorch default), single-pass stats.
    s1 = jnp.sum(x, axis=1, keepdims=True)
    s2 = jnp.sum(x * x, axis=1, keepdims=True)
    mu = s1 * inv_d
    var = jnp.maximum(s2 * inv_d - mu * mu, 0.0)
    xn = (x - mu) * lax.rsqrt(var + 1e-5)
    xn = xn * g_ref[...] + bn_ref[...]

    # Linear(D_in, H) -> GELU   (Dropout(0.1): identity at inference)
    h = jnp.dot(xn.astype(jnp.bfloat16), w1_ref[...],
                preferred_element_type=jnp.float32)
    h = _bias_gelu(h, b1_ref, compute_dtype)

    # Linear(H, H) -> GELU      (Dropout(0.1): identity at inference)
    h = jnp.dot(h.astype(jnp.bfloat16), w2_ref[...],
                preferred_element_type=jnp.float32)
    h = _bias_gelu(h, b2_ref, compute_dtype)

    # Linear(H, D_out)
    y = jnp.dot(h.astype(jnp.bfloat16), w3_ref[...],
                preferred_element_type=jnp.float32)
    y = y + b3_ref[...]

    if add_residual:                                         # input_dim == output_dim
        y = y + x

    # F.normalize(p=2, dim=1), eps = 1e-12  (one rsqrt on the EUP; no sqrt+divide)
    sumsq = jnp.sum(y * y, axis=1, keepdims=True)
    o_ref[...] = (y * lax.rsqrt(jnp.maximum(sumsq, 1e-24))).astype(o_ref.dtype)


def _round_up(v, m):
    return ((v + m - 1) // m) * m


def refinement_forward(x, params, *, block_rows=512, out_dtype=None,
                       compute_dtype=jnp.bfloat16):
    """out = F.normalize(MLP(x) (+ x if D_in == D_out), p=2, dim=1).

    compute_dtype: dtype for the bias+GELU elementwise phase.  bf16 is right for
    v6e / v7x; pass jnp.float32 on v5e (no bf16 VPU/EUP there).
    """
    B, d_in = x.shape
    h = params["w1"].shape[1]
    d_out = params["w3"].shape[1]
    add_residual = (d_in == d_out)
    out_dtype = out_dtype or x.dtype

    # Row tile: multiple of 8 sublanes; sized so there are >= 2 grid blocks whenever
    # B > 8 (both v7x TensorCores get work via the "parallel" axis).  No host pad:
    # Pallas handles the partial last block, rows are independent.
    tm = min(block_rows, max(8, _round_up(pl.cdiv(B, 2), 8)))
    grid = (pl.cdiv(B, tm),)

    # VMEM budget: half of physical (64 MiB on v5e/v6e, 32 MiB on v7x per TC).
    try:
        phys_vmem = pltpu.get_tpu_info().vmem_capacity_bytes
    except Exception:  # noqa: BLE001 - conservative fallback
        phys_vmem = 128 * 1024 * 1024
    vmem_limit = int(min(64 * 1024 * 1024, phys_vmem // 2))

    kernel = functools.partial(_refinement_kernel,
                               add_residual=add_residual,
                               compute_dtype=compute_dtype)

    def _build(pipeline_mode):
        kw = {} if pipeline_mode is None else {"pipeline_mode": pipeline_mode}

        def const(shape):
            # Resident operands (weights / biases / LN params): constant block index,
            # so single-buffering them saves VMEM with zero cost.
            return pl.BlockSpec(shape, lambda i: (0, 0), **kw)

        return pl.pallas_call(
            kernel,
            out_shape=jax.ShapeDtypeStruct((B, d_out), out_dtype),
            grid=grid,
            in_specs=[
                pl.BlockSpec((tm, d_in), lambda i: (i, 0)),   # x rows
                const((1, d_in)),                             # LN gamma
                const((1, d_in)),                             # LN beta
                const((d_in, h)),                             # W1 (bf16)
                const((1, h)),                                # b1
                const((h, h)),                                # W2 (bf16)
                const((1, h)),                                # b2
                const((h, d_out)),                            # W3 (bf16)
                const((1, d_out)),                            # b3
            ],
            out_specs=pl.BlockSpec((tm, d_out), lambda i: (i, 0)),
            compiler_params=pltpu.CompilerParams(
                dimension_semantics=("parallel",),
                vmem_limit_bytes=vmem_limit,
            ),
        )

    args = (x,
            params["ln_g"].reshape(1, -1), params["ln_b"].reshape(1, -1),
            params["w1"], params["b1"].reshape(1, -1),
            params["w2"], params["b2"].reshape(1, -1),
            params["w3"], params["b3"].reshape(1, -1))

    try:
        return _build(pl.Buffered(1))(*args)
    except Exception:  # noqa: BLE001 - pipeline_mode unsupported -> default buffering
        return _build(None)(*args)


# ----------------------------------------------------------------------------
# Pure-JAX reference (f32, exact erf GELU) for a correctness cross-check
# ----------------------------------------------------------------------------
def refinement_reference(x, params):
    xf = x.astype(jnp.float32)
    mu = jnp.mean(xf, axis=1, keepdims=True)
    var = jnp.mean((xf - mu) ** 2, axis=1, keepdims=True)
    xn = (xf - mu) / jnp.sqrt(var + 1e-5)
    xn = xn * params["ln_g"][None, :] + params["ln_b"][None, :]
    h = jax.nn.gelu(xn @ params["w1"].astype(jnp.float32) + params["b1"],
                    approximate=False)
    h = jax.nn.gelu(h @ params["w2"].astype(jnp.float32) + params["b2"],
                    approximate=False)
    y = h @ params["w3"].astype(jnp.float32) + params["b3"]
    if x.shape[1] == y.shape[1]:
        y = y + xf
    n = jnp.sqrt(jnp.sum(y * y, axis=1, keepdims=True))
    return y / jnp.maximum(n, 1e-12)


# ----------------------------------------------------------------------------
# Deterministic synthetic parameters (same shapes as the PyTorch module)
# ----------------------------------------------------------------------------
def make_params(key, d_in, d_hidden, d_out):
    ks = jax.random.split(key, 3)

    def linear(k, fan_in, fan_out):
        kw, kb = jax.random.split(k)
        lim = (1.0 / fan_in) ** 0.5
        w = jax.random.uniform(kw, (fan_in, fan_out), jnp.float32, -lim, lim)
        b = jax.random.uniform(kb, (fan_out,), jnp.float32, -lim, lim)
        return w.astype(jnp.bfloat16), b     # weights stored bf16 for the MXU

    w1, b1 = linear(ks[0], d_in, d_hidden)
    w2, b2 = linear(ks[1], d_hidden, d_hidden)
    w3, b3 = linear(ks[2], d_hidden, d_out)
    return {
        "ln_g": jnp.ones((d_in,), jnp.float32),
        "ln_b": jnp.zeros((d_in,), jnp.float32),
        "w1": w1, "b1": b1,
        "w2": w2, "b2": b2,
        "w3": w3, "b3": b3,
        # nn.Parameter temperature = 20.0 exists on the module but is unused in
        # forward(); kept only for parameter-shape parity.
        "temperature": jnp.array([20.0], jnp.float32),
    }


# ----------------------------------------------------------------------------
if __name__ == "__main__":
    key = jax.random.PRNGKey(0)
    k_p1, k_p2, k_x1, k_x2 = jax.random.split(key, 4)

    # Config 1: input_dim != output_dim -> no residual (module defaults, scaled down).
    B, D_IN, D_HID, D_OUT = 16, 256, 512, 128
    params = make_params(k_p1, D_IN, D_HID, D_OUT)
    x = jax.random.normal(k_x1, (B, D_IN), jnp.float32)
    out = jax.block_until_ready(refinement_forward(x, params))
    assert out.shape == (B, D_OUT)
    assert bool(jnp.all(jnp.isfinite(out)))
    norms = jnp.linalg.norm(out, axis=1)
    assert bool(jnp.all(jnp.abs(norms - 1.0) < 1e-3))
    ref = refinement_reference(x, params)
    assert float(jnp.max(jnp.abs(out - ref))) < 2e-2   # bf16 + tanh-GELU tolerance

    # Config 2: input_dim == output_dim -> residual path; B=10 exercises the
    # partial last grid block (no host-side padding).
    params_r = make_params(k_p2, 128, 256, 128)
    xr = jax.random.normal(k_x2, (10, 128), jnp.float32)
    out_r = jax.block_until_ready(refinement_forward(xr, params_r))
    assert out_r.shape == (10, 128)
    assert bool(jnp.all(jnp.isfinite(out_r)))
    norms_r = jnp.linalg.norm(out_r, axis=1)
    assert bool(jnp.all(jnp.abs(norms_r - 1.0) < 1e-3))
    ref_r = refinement_reference(xr, params_r)
    assert float(jnp.max(jnp.abs(out_r - ref_r))) < 2e-2

    # TODO(synk): training-mode Dropout(0.1) (pltpu.prng_*) is not implemented;
    # this kernel is the inference forward pass only.
    print("KERNEL_OK")
</pallas_src>

<mosaic_0001>
module attributes {stable_mosaic.version = 11 : i64} {
  func.func @_refinement_kernel(%arg0: i32, %arg1: memref<8x256xf32, #tpu.memory_space<vmem>>, %arg2: memref<1x256xf32, #tpu.memory_space<vmem>>, %arg3: memref<1x256xf32, #tpu.memory_space<vmem>>, %arg4: memref<256x512xbf16, #tpu.memory_space<vmem>>, %arg5: memref<1x512xf32, #tpu.memory_space<vmem>>, %arg6: memref<512x512xbf16, #tpu.memory_space<vmem>>, %arg7: memref<1x512xf32, #tpu.memory_space<vmem>>, %arg8: memref<512x128xbf16, #tpu.memory_space<vmem>>, %arg9: memref<1x128xf32, #tpu.memory_space<vmem>>, %arg10: memref<8x128xf32, #tpu.memory_space<vmem>>) attributes {dimension_semantics = [#tpu.dimension_semantics<parallel>], iteration_bounds = array<i64: 2>, scalar_prefetch = 0 : i64, scratch_operands = 0 : i64, tpu.core_type = #tpu.core_type<tc>, window_params = [{transform_indices = @transform_0, window_bounds = array<i64: 8, 256>}, {pipeline_mode = #tpu.pipeline_mode<synchronous>, transform_indices = @transform_1, window_bounds = array<i64: 1, 256>}, {pipeline_mode = #tpu.pipeline_mode<synchronous>, transform_indices = @transform_2, window_bounds = array<i64: 1, 256>}, {pipeline_mode = #tpu.pipeline_mode<synchronous>, transform_indices = @transform_3, window_bounds = array<i64: 256, 512>}, {pipeline_mode = #tpu.pipeline_mode<synchronous>, transform_indices = @transform_4, window_bounds = array<i64: 1, 512>}, {pipeline_mode = #tpu.pipeline_mode<synchronous>, transform_indices = @transform_5, window_bounds = array<i64: 512, 512>}, {pipeline_mode = #tpu.pipeline_mode<synchronous>, transform_indices = @transform_6, window_bounds = array<i64: 1, 512>}, {pipeline_mode = #tpu.pipeline_mode<synchronous>, transform_indices = @transform_7, window_bounds = array<i64: 512, 128>}, {pipeline_mode = #tpu.pipeline_mode<synchronous>, transform_indices = @transform_8, window_bounds = array<i64: 1, 128>}, {transform_indices = @transform_9, window_bounds = array<i64: 8, 128>}]} {
    %c0 = arith.constant 0 : index
    %c0_0 = arith.constant 0 : index
    %0 = vector.load %arg1[%c0, %c0_0] : memref<8x256xf32, #tpu.memory_space<vmem>>, vector<8x256xf32>
    %cst = arith.constant dense<0.000000e+00> : vector<8xf32>
    %1 = vector.multi_reduction <add>, %0, %cst [1] : vector<8x256xf32> to vector<8xf32>
    %2 = vector.shape_cast %1 : vector<8xf32> to vector<8x1xf32>
    %3 = arith.mulf %0, %0 : vector<8x256xf32>
    %cst_1 = arith.constant dense<0.000000e+00> : vector<8xf32>
    %4 = vector.multi_reduction <add>, %3, %cst_1 [1] : vector<8x256xf32> to vector<8xf32>
    %5 = vector.shape_cast %4 : vector<8xf32> to vector<8x1xf32>
    %cst_2 = arith.constant 3.906250e-03 : f32
    %6 = vector.broadcast %cst_2 : f32 to vector<8x1xf32>
    %7 = arith.mulf %2, %6 : vector<8x1xf32>
    %cst_3 = arith.constant 3.906250e-03 : f32
    %8 = vector.broadcast %cst_3 : f32 to vector<8x1xf32>
    %9 = arith.mulf %5, %8 : vector<8x1xf32>
    %10 = arith.mulf %7, %7 : vector<8x1xf32>
    %11 = arith.subf %9, %10 : vector<8x1xf32>
    %cst_4 = arith.constant 0.000000e+00 : f32
    %12 = vector.broadcast %cst_4 : f32 to vector<8x1xf32>
    %13 = arith.maximumf %11, %12 : vector<8x1xf32>
    %14 = vector.broadcast %7 : vector<8x1xf32> to vector<8x256xf32>
    %15 = arith.subf %0, %14 : vector<8x256xf32>
    %cst_5 = arith.constant 9.99999974E-6 : f32
    %16 = vector.broadcast %cst_5 : f32 to vector<8x1xf32>
    %17 = arith.addf %13, %16 : vector<8x1xf32>
    %18 = math.rsqrt %17 : vector<8x1xf32>
    %19 = vector.broadcast %18 : vector<8x1xf32> to vector<8x256xf32>
    %20 = arith.mulf %15, %19 : vector<8x256xf32>
    %c0_6 = arith.constant 0 : index
    %c0_7 = arith.constant 0 : index
    %21 = vector.load %arg2[%c0_6, %c0_7] : memref<1x256xf32, #tpu.memory_space<vmem>>, vector<1x256xf32>
    %22 = vector.broadcast %21 : vector<1x256xf32> to vector<8x256xf32>
    %23 = arith.mulf %20, %22 : vector<8x256xf32>
    %c0_8 = arith.constant 0 : index
    %c0_9 = arith.constant 0 : index
    %24 = vector.load %arg3[%c0_8, %c0_9] : memref<1x256xf32, #tpu.memory_space<vmem>>, vector<1x256xf32>
    %25 = vector.broadcast %24 : vector<1x256xf32> to vector<8x256xf32>
    %26 = arith.addf %23, %25 : vector<8x256xf32>
    %27 = arith.truncf %26 : vector<8x256xf32> to vector<8x256xbf16>
    %c0_10 = arith.constant 0 : index
    %c0_11 = arith.constant 0 : index
    %28 = vector.load %arg4[%c0_10, %c0_11] : memref<256x512xbf16, #tpu.memory_space<vmem>>, vector<256x512xbf16>
    %cst_12 = arith.constant dense<0.000000e+00> : vector<8x512xf32>
    %29 = tpu.matmul %27, %28, %cst_12 {dimension_numbers = #tpu.dot_dimension_numbers<[1], [0], [0], [1], [0, 0, 1, 1], [], []>} : vector<8x256xbf16>, vector<256x512xbf16>, vector<8x512xf32> -> vector<8x512xf32>
    %30 = arith.truncf %29 : vector<8x512xf32> to vector<8x512xbf16>
    %c0_13 = arith.constant 0 : index
    %c0_14 = arith.constant 0 : index
    %31 = vector.load %arg5[%c0_13, %c0_14] : memref<1x512xf32, #tpu.memory_space<vmem>>, vector<1x512xf32>
    %32 = arith.truncf %31 : vector<1x512xf32> to vector<1x512xbf16>
    %33 = vector.broadcast %32 : vector<1x512xbf16> to vector<8x512xbf16>
    %34 = arith.addf %30, %33 : vector<8x512xbf16>
    %35 = arith.mulf %34, %34 : vector<8x512xbf16>
    %36 = arith.mulf %35, %34 : vector<8x512xbf16>
    %cst_15 = arith.constant 4.467770e-02 : bf16
    %37 = vector.broadcast %cst_15 : bf16 to vector<8x512xbf16>
    %38 = arith.mulf %37, %36 : vector<8x512xbf16>
    %39 = arith.addf %34, %38 : vector<8x512xbf16>
    %cst_16 = arith.constant 7.968750e-01 : bf16
    %40 = vector.broadcast %cst_16 : bf16 to vector<8x512xbf16>
    %41 = arith.mulf %40, %39 : vector<8x512xbf16>
    %cst_17 = arith.constant 5.000000e-01 : bf16
    %42 = vector.broadcast %cst_17 : bf16 to vector<8x512xbf16>
    %43 = arith.mulf %42, %34 : vector<8x512xbf16>
    %44 = math.tanh %41 : vector<8x512xbf16>
    %cst_18 = arith.constant 1.000000e+00 : bf16
    %45 = vector.broadcast %cst_18 : bf16 to vector<8x512xbf16>
    %46 = arith.addf %45, %44 : vector<8x512xbf16>
    %47 = arith.mulf %43, %46 : vector<8x512xbf16>
    %c0_19 = arith.constant 0 : index
    %c0_20 = arith.constant 0 : index
    %48 = vector.load %arg6[%c0_19, %c0_20] : memref<512x512xbf16, #tpu.memory_space<vmem>>, vector<512x512xbf16>
    %cst_21 = arith.constant dense<0.000000e+00> : vector<8x512xf32>
    %49 = tpu.matmul %47, %48, %cst_21 {dimension_numbers = #tpu.dot_dimension_numbers<[1], [0], [0], [1], [0, 0, 1, 1], [], []>} : vector<8x512xbf16>, vector<512x512xbf16>, vector<8x512xf32> -> vector<8x512xf32>
    %50 = arith.truncf %49 : vector<8x512xf32> to vector<8x512xbf16>
    %c0_22 = arith.constant 0 : index
    %c0_23 = arith.constant 0 : index
    %51 = vector.load %arg7[%c0_22, %c0_23] : memref<1x512xf32, #tpu.memory_space<vmem>>, vector<1x512xf32>
    %52 = arith.truncf %51 : vector<1x512xf32> to vector<1x512xbf16>
    %53 = vector.broadcast %52 : vector<1x512xbf16> to vector<8x512xbf16>
    %54 = arith.addf %50, %53 : vector<8x512xbf16>
    %55 = arith.mulf %54, %54 : vector<8x512xbf16>
    %56 = arith.mulf %55, %54 : vector<8x512xbf16>
    %cst_24 = arith.constant 4.467770e-02 : bf16
    %57 = vector.broadcast %cst_24 : bf16 to vector<8x512xbf16>
    %58 = arith.mulf %57, %56 : vector<8x512xbf16>
    %59 = arith.addf %54, %58 : vector<8x512xbf16>
    %cst_25 = arith.constant 7.968750e-01 : bf16
    %60 = vector.broadcast %cst_25 : bf16 to vector<8x512xbf16>
    %61 = arith.mulf %60, %59 : vector<8x512xbf16>
    %cst_26 = arith.constant 5.000000e-01 : bf16
    %62 = vector.broadcast %cst_26 : bf16 to vector<8x512xbf16>
    %63 = arith.mulf %62, %54 : vector<8x512xbf16>
    %64 = math.tanh %61 : vector<8x512xbf16>
    %cst_27 = arith.constant 1.000000e+00 : bf16
    %65 = vector.broadcast %cst_27 : bf16 to vector<8x512xbf16>
    %66 = arith.addf %65, %64 : vector<8x512xbf16>
    %67 = arith.mulf %63, %66 : vector<8x512xbf16>
    %c0_28 = arith.constant 0 : index
    %c0_29 = arith.constant 0 : index
    %68 = vector.load %arg8[%c0_28, %c0_29] : memref<512x128xbf16, #tpu.memory_space<vmem>>, vector<512x128xbf16>
    %cst_30 = arith.constant dense<0.000000e+00> : vector<8x128xf32>
    %69 = tpu.matmul %67, %68, %cst_30 {dimension_numbers = #tpu.dot_dimension_numbers<[1], [0], [0], [1], [0, 0, 1, 1], [], []>} : vector<8x512xbf16>, vector<512x128xbf16>, vector<8x128xf32> -> vector<8x128xf32>
    %c0_31 = arith.constant 0 : index
    %c0_32 = arith.constant 0 : index
    %70 = vector.load %arg9[%c0_31, %c0_32] : memref<1x128xf32, #tpu.memory_space<vmem>>, vector<1x128xf32>
    %71 = vector.broadcast %70 : vector<1x128xf32> to vector<8x128xf32>
    %72 = arith.addf %69, %71 : vector<8x128xf32>
    %73 = arith.mulf %72, %72 : vector<8x128xf32>
    %cst_33 = arith.constant dense<0.000000e+00> : vector<8xf32>
    %74 = vector.multi_reduction <add>, %73, %cst_33 [1] : vector<8x128xf32> to vector<8xf32>
    %75 = vector.shape_cast %74 : vector<8xf32> to vector<8x1xf32>
    %cst_34 = arith.constant 1.000000e-24 : f32
    %76 = vector.broadcast %cst_34 : f32 to vector<8x1xf32>
    %77 = arith.maximumf %75, %76 : vector<8x1xf32>
    %78 = math.rsqrt %77 : vector<8x1xf32>
    %79 = vector.broadcast %78 : vector<8x1xf32> to vector<8x128xf32>
    %80 = arith.mulf %72, %79 : vector<8x128xf32>
    %c0_35 = arith.constant 0 : index
    %c0_36 = arith.constant 0 : index
    %81 = vector.load %arg10[%c0_35, %c0_36] : memref<8x128xf32, #tpu.memory_space<vmem>>, vector<8x128xf32>
    tpu.vector_store %arg10[%c0_35, %c0_36], %80 {strides = array<i32>} : memref<8x128xf32, #tpu.memory_space<vmem>>, vector<8x128xf32>,
    return
  }
  func.func @transform_0(%arg0: i32) -> (i32, i32) {
    %c0_i32 = arith.constant 0 : i32
    %c0_i32_0 = arith.constant 0 : i32
    return %arg0, %c0_i32 : i32, i32
  }
  func.func @transform_1(%arg0: i32) -> (i32, i32) {
    %c0_i32 = arith.constant 0 : i32
    %c0_i32_0 = arith.constant 0 : i32
    %c0_i32_1 = arith.constant 0 : i32
    return %c0_i32, %c0_i32_0 : i32, i32
  }
  func.func @transform_2(%arg0: i32) -> (i32, i32) {
    %c0_i32 = arith.constant 0 : i32
    %c0_i32_0 = arith.constant 0 : i32
    %c0_i32_1 = arith.constant 0 : i32
    return %c0_i32, %c0_i32_0 : i32, i32
  }
  func.func @transform_3(%arg0: i32) -> (i32, i32) {
    %c0_i32 = arith.constant 0 : i32
    %c0_i32_0 = arith.constant 0 : i32
    %c0_i32_1 = arith.constant 0 : i32
    return %c0_i32, %c0_i32_0 : i32, i32
  }
  func.func @transform_4(%arg0: i32) -> (i32, i32) {
    %c0_i32 = arith.constant 0 : i32
    %c0_i32_0 = arith.constant 0 : i32
    %c0_i32_1 = arith.constant 0 : i32
    return %c0_i32, %c0_i32_0 : i32, i32
  }
  func.func @transform_5(%arg0: i32) -> (i32, i32) {
    %c0_i32 = arith.constant 0 : i32
    %c0_i32_0 = arith.constant 0 : i32
    %c0_i32_1 = arith.constant 0 : i32
    return %c0_i32, %c0_i32_0 : i32, i32
  }
  func.func @transform_6(%arg0: i32) -> (i32, i32) {
    %c0_i32 = arith.constant 0 : i32
    %c0_i32_0 = arith.constant 0 : i32
    %c0_i32_1 = arith.constant 0 : i32
    return %c0_i32, %c0_i32_0 : i32, i32
  }
  func.func @transform_7(%arg0: i32) -> (i32, i32) {
    %c0_i32 = arith.constant 0 : i32
    %c0_i32_0 = arith.constant 0 : i32
    %c0_i32_1 = arith.constant 0 : i32
    return %c0_i32, %c0_i32_0 : i32, i32
  }
  func.func @transform_8(%arg0: i32) -> (i32, i32) {
    %c0_i32 = arith.constant 0 : i32
    %c0_i32_0 = arith.constant 0 : i32
    %c0_i32_1 = arith.constant 0 : i32
    return %c0_i32, %c0_i32_0 : i32, i32
  }
  func.func @transform_9(%arg0: i32) -> (i32, i32) {
    %c0_i32 = arith.constant 0 : i32
    %c0_i32_0 = arith.constant 0 : i32
    return %arg0, %c0_i32 : i32, i32
  }
}

module attributes {stable_mosaic.version = 11 : i64} {
  func.func @_refinement_kernel(%arg0: i32, %arg1: memref<8x256xf32, #tpu.memory_space<vmem>>, %arg2: memref<1x256xf32, #tpu.memory_space<vmem>>, %arg3: memref<1x256xf32, #tpu.memory_space<vmem>>, %arg4: memref<256x512xbf16, #tpu.memory_space<vmem>>, %arg5: memref<1x512xf32, #tpu.memory_space<vmem>>, %arg6: memref<512x512xbf16, #tpu.memory_space<vmem>>, %arg7: memref<1x512xf32, #tpu.memory_space<vmem>>, %arg8: memref<512x128xbf16, #tpu.memory_space<vmem>>, %arg9: memref<1x128xf32, #tpu.memory_space<vmem>>, %arg10: memref<8x128xf32, #tpu.memory_space<vmem>>) attributes {dimension_semantics = [#tpu.dimension_semantics<parallel>], iteration_bounds = array<i64: 2>, scalar_prefetch = 0 : i64, scratch_operands = 0 : i64, tpu.core_type = #tpu.core_type<tc>, window_params = [{transform_indices = @transform_0, window_bounds = array<i64: 8, 256>}, {pipeline_mode = #tpu.pipeline_mode<synchronous>, transform_indices = @transform_1, window_bounds = array<i64: 1, 256>}, {pipeline_mode = #tpu.pipeline_mode<synchronous>, transform_indices = @transform_2, window_bounds = array<i64: 1, 256>}, {pipeline_mode = #tpu.pipeline_mode<synchronous>, transform_indices = @transform_3, window_bounds = array<i64: 256, 512>}, {pipeline_mode = #tpu.pipeline_mode<synchronous>, transform_indices = @transform_4, window_bounds = array<i64: 1, 512>}, {pipeline_mode = #tpu.pipeline_mode<synchronous>, transform_indices = @transform_5, window_bounds = array<i64: 512, 512>}, {pipeline_mode = #tpu.pipeline_mode<synchronous>, transform_indices = @transform_6, window_bounds = array<i64: 1, 512>}, {pipeline_mode = #tpu.pipeline_mode<synchronous>, transform_indices = @transform_7, window_bounds = array<i64: 512, 128>}, {pipeline_mode = #tpu.pipeline_mode<synchronous>, transform_indices = @transform_8, window_bounds = array<i64: 1, 128>}, {transform_indices = @transform_9, window_bounds = array<i64: 8, 128>}]} {
    %c0 = arith.constant 0 : index
    %c0_0 = arith.constant 0 : index
    %0 = vector.load %arg1[%c0, %c0_0] : memref<8x256xf32, #tpu.memory_space<vmem>>, vector<8x256xf32>
    %cst = arith.constant dense<0.000000e+00> : vector<8xf32>
    %1 = vector.multi_reduction <add>, %0, %cst [1] : vector<8x256xf32> to vector<8xf32>
    %2 = vector.shape_cast %1 : vector<8xf32> to vector<8x1xf32>
    %3 = arith.mulf %0, %0 : vector<8x256xf32>
    %cst_1 = arith.constant dense<0.000000e+00> : vector<8xf32>
    %4 = vector.multi_reduction <add>, %3, %cst_1 [1] : vector<8x256xf32> to vector<8xf32>
    %5 = vector.shape_cast %4 : vector<8xf32> to vector<8x1xf32>
    %cst_2 = arith.constant 3.906250e-03 : f32
    %6 = vector.broadcast %cst_2 : f32 to vector<8x1xf32>
    %7 = arith.mulf %2, %6 : vector<8x1xf32>
    %cst_3 = arith.constant 3.906250e-03 : f32
    %8 = vector.broadcast %cst_3 : f32 to vector<8x1xf32>
    %9 = arith.mulf %5, %8 : vector<8x1xf32>
    %10 = arith.mulf %7, %7 : vector<8x1xf32>
    %11 = arith.subf %9, %10 : vector<8x1xf32>
    %cst_4 = arith.constant 0.000000e+00 : f32
    %12 = vector.broadcast %cst_4 : f32 to vector<8x1xf32>
    %13 = arith.maximumf %11, %12 : vector<8x1xf32>
    %14 = vector.broadcast %7 : vector<8x1xf32> to vector<8x256xf32>
    %15 = arith.subf %0, %14 : vector<8x256xf32>
    %cst_5 = arith.constant 9.99999974E-6 : f32
    %16 = vector.broadcast %cst_5 : f32 to vector<8x1xf32>
    %17 = arith.addf %13, %16 : vector<8x1xf32>
    %18 = math.rsqrt %17 : vector<8x1xf32>
    %19 = vector.broadcast %18 : vector<8x1xf32> to vector<8x256xf32>
    %20 = arith.mulf %15, %19 : vector<8x256xf32>
    %c0_6 = arith.constant 0 : index
    %c0_7 = arith.constant 0 : index
    %21 = vector.load %arg2[%c0_6, %c0_7] : memref<1x256xf32, #tpu.memory_space<vmem>>, vector<1x256xf32>
    %22 = vector.broadcast %21 : vector<1x256xf32> to vector<8x256xf32>
    %23 = arith.mulf %20, %22 : vector<8x256xf32>
    %c0_8 = arith.constant 0 : index
    %c0_9 = arith.constant 0 : index
    %24 = vector.load %arg3[%c0_8, %c0_9] : memref<1x256xf32, #tpu.memory_space<vmem>>, vector<1x256xf32>
    %25 = vector.broadcast %24 : vector<1x256xf32> to vector<8x256xf32>
    %26 = arith.addf %23, %25 : vector<8x256xf32>
    %27 = arith.truncf %26 : vector<8x256xf32> to vector<8x256xbf16>
    %c0_10 = arith.constant 0 : index
    %c0_11 = arith.constant 0 : index
    %28 = vector.load %arg4[%c0_10, %c0_11] : memref<256x512xbf16, #tpu.memory_space<vmem>>, vector<256x512xbf16>
    %cst_12 = arith.constant dense<0.000000e+00> : vector<8x512xf32>
    %29 = tpu.matmul %27, %28, %cst_12 {dimension_numbers = #tpu.dot_dimension_numbers<[1], [0], [0], [1], [0, 0, 1, 1], [], []>} : vector<8x256xbf16>, vector<256x512xbf16>, vector<8x512xf32> -> vector<8x512xf32>
    %30 = arith.truncf %29 : vector<8x512xf32> to vector<8x512xbf16>
    %c0_13 = arith.constant 0 : index
    %c0_14 = arith.constant 0 : index
    %31 = vector.load %arg5[%c0_13, %c0_14] : memref<1x512xf32, #tpu.memory_space<vmem>>, vector<1x512xf32>
    %32 = arith.truncf %31 : vector<1x512xf32> to vector<1x512xbf16>
    %33 = vector.broadcast %32 : vector<1x512xbf16> to vector<8x512xbf16>
    %34 = arith.addf %30, %33 : vector<8x512xbf16>
    %35 = arith.mulf %34, %34 : vector<8x512xbf16>
    %36 = arith.mulf %35, %34 : vector<8x512xbf16>
    %cst_15 = arith.constant 4.467770e-02 : bf16
    %37 = vector.broadcast %cst_15 : bf16 to vector<8x512xbf16>
    %38 = arith.mulf %37, %36 : vector<8x512xbf16>
    %39 = arith.addf %34, %38 : vector<8x512xbf16>
    %cst_16 = arith.constant 7.968750e-01 : bf16
    %40 = vector.broadcast %cst_16 : bf16 to vector<8x512xbf16>
    %41 = arith.mulf %40, %39 : vector<8x512xbf16>
    %cst_17 = arith.constant 5.000000e-01 : bf16
    %42 = vector.broadcast %cst_17 : bf16 to vector<8x512xbf16>
    %43 = arith.mulf %42, %34 : vector<8x512xbf16>
    %44 = math.tanh %41 : vector<8x512xbf16>
    %cst_18 = arith.constant 1.000000e+00 : bf16
    %45 = vector.broadcast %cst_18 : bf16 to vector<8x512xbf16>
    %46 = arith.addf %45, %44 : vector<8x512xbf16>
    %47 = arith.mulf %43, %46 : vector<8x512xbf16>
    %c0_19 = arith.constant 0 : index
    %c0_20 = arith.constant 0 : index
    %48 = vector.load %arg6[%c0_19, %c0_20] : memref<512x512xbf16, #tpu.memory_space<vmem>>, vector<512x512xbf16>
    %cst_21 = arith.constant dense<0.000000e+00> : vector<8x512xf32>
    %49 = tpu.matmul %47, %48, %cst_21 {dimension_numbers = #tpu.dot_dimension_numbers<[1], [0], [0], [1], [0, 0, 1, 1], [], []>} : vector<8x512xbf16>, vector<512x512xbf16>, vector<8x512xf32> -> vector<8x512xf32>
    %50 = arith.truncf %49 : vector<8x512xf32> to vector<8x512xbf16>
    %c0_22 = arith.constant 0 : index
    %c0_23 = arith.constant 0 : index
    %51 = vector.load %arg7[%c0_22, %c0_23] : memref<1x512xf32, #tpu.memory_space<vmem>>, vector<1x512xf32>
    %52 = arith.truncf %51 : vector<1x512xf32> to vector<1x512xbf16>
    %53 = vector.broadcast %52 : vector<1x512xbf16> to vector<8x512xbf16>
    %54 = arith.addf %50, %53 : vector<8x512xbf16>
    %55 = arith.mulf %54, %54 : vector<8x512xbf16>
    %56 = arith.mulf %55, %54 : vector<8x512xbf16>
    %cst_24 = arith.constant 4.467770e-02 : bf16
    %57 = vector.broadcast %cst_24 : bf16 to vector<8x512xbf16>
    %58 = arith.mulf %57, %56 : vector<8x512xbf16>
    %59 = arith.addf %54, %58 : vector<8x512xbf16>
    %cst_25 = arith.constant 7.968750e-01 : bf16
    %60 = vector.broadcast %cst_25 : bf16 to vector<8x512xbf16>
    %61 = arith.mulf %60, %59 : vector<8x512xbf16>
    %cst_26 = arith.constant 5.000000e-01 : bf16
    %62 = vector.broadcast %cst_26 : bf16 to vector<8x512xbf16>
    %63 = arith.mulf %62, %54 : vector<8x512xbf16>
    %64 = math.tanh %61 : vector<8x512xbf16>
    %cst_27 = arith.constant 1.000000e+00 : bf16
    %65 = vector.broadcast %cst_27 : bf16 to vector<8x512xbf16>
    %66 = arith.addf %65, %64 : vector<8x512xbf16>
    %67 = arith.mulf %63, %66 : vector<8x512xbf16>
    %c0_28 = arith.constant 0 : index
    %c0_29 = arith.constant 0 : index
    %68 = vector.load %arg8[%c0_28, %c0_29] : memref<512x128xbf16, #tpu.memory_space<vmem>>, vector<512x128xbf16>
    %cst_30 = arith.constant dense<0.000000e+00> : vector<8x128xf32>
    %69 = tpu.matmul %67, %68, %cst_30 {dimension_numbers = #tpu.dot_dimension_numbers<[1], [0], [0], [1], [0, 0, 1, 1], [], []>} : vector<8x512xbf16>, vector<512x128xbf16>, vector<8x128xf32> -> vector<8x128xf32>
    %c0_31 = arith.constant 0 : index
    %c0_32 = arith.constant 0 : index
    %70 = vector.load %arg9[%c0_31, %c0_32] : memref<1x128xf32, #tpu.memory_space<vmem>>, vector<1x128xf32>
    %71 = vector.broadcast %70 : vector<1x128xf32> to vector<8x128xf32>
    %72 = arith.addf %69, %71 : vector<8x128xf32>
    %73 = arith.mulf %72, %72 : vector<8x128xf32>
    %cst_33 = arith.constant dense<0.000000e+00> : vector<8xf32>
    %74 = vector.multi_reduction <add>, %73, %cst_33 [1] : vector<8x128xf32> to vector<8xf32>
    %75 = vector.shape_cast %74 : vector<8xf32> to vector<8x1xf32>
    %cst_34 = arith.constant 1.000000e-24 : f32
    %76 = vector.broadcast %cst_34 : f32 to vector<8x1xf32>
    %77 = arith.maximumf %75, %76 : vector<8x1xf32>
    %78 = math.rsqrt %77 : vector<8x1xf32>
    %79 = vector.broadcast %78 : vector<8x1xf32> to vector<8x128xf32>
    %80 = arith.mulf %72, %79 : vector<8x128xf32>
    %c0_35 = arith.constant 0 : index
    %c0_36 = arith.constant 0 : index
    %81 = vector.load %arg10[%c0_35, %c0_36] : memref<8x128xf32, #tpu.memory_space<vmem>>, vector<8x128xf32>
    tpu.vector_store %arg10[%c0_35, %c0_36], %80 {strides = array<i32>} : memref<8x128xf32, #tpu.memory_space<vmem>>, vector<8x128xf32>,
    return
  }
  func.func @transform_0(%arg0: i32) -> (i32, i32) {
    %c0_i32 = arith.constant 0 : i32
    %c0_i32_0 = arith.constant 0 : i32
    return %arg0, %c0_i32 : i32, i32
  }
  func.func @transform_1(%arg0: i32) -> (i32, i32) {
    %c0_i32 = arith.constant 0 : i32
    %c0_i32_0 = arith.constant 0 : i32
    %c0_i32_1 = arith.constant 0 : i32
    return %c0_i32, %c0_i32_0 : i32, i32
  }
  func.func @transform_2(%arg0: i32) -> (i32, i32) {
    %c0_i32 = arith.constant 0 : i32
    %c0_i32_0 = arith.constant 0 : i32
    %c0_i32_1 = arith.constant 0 : i32
    return %c0_i32, %c0_i32_0 : i32, i32
  }
  func.func @transform_3(%arg0: i32) -> (i32, i32) {
    %c0_i32 = arith.constant 0 : i32
    %c0_i32_0 = arith.constant 0 : i32
    %c0_i32_1 = arith.constant 0 : i32
    return %c0_i32, %c0_i32_0 : i32, i32
  }
  func.func @transform_4(%arg0: i32) -> (i32, i32) {
    %c0_i32 = arith.constant 0 : i32
    %c0_i32_0 = arith.constant 0 : i32
    %c0_i32_1 = arith.constant 0 : i32
    return %c0_i32, %c0_i32_0 : i32, i32
  }
  func.func @transform_5(%arg0: i32) -> (i32, i32) {
    %c0_i32 = arith.constant 0 : i32
    %c0_i32_0 = arith.constant 0 : i32
    %c0_i32_1 = arith.constant 0 : i32
    return %c0_i32, %c0_i32_0 : i32, i32
  }
  func.func @transform_6(%arg0: i32) -> (i32, i32) {
    %c0_i32 = arith.constant 0 : i32
    %c0_i32_0 = arith.constant 0 : i32
    %c0_i32_1 = arith.constant 0 : i32
    return %c0_i32, %c0_i32_0 : i32, i32
  }
  func.func @transform_7(%arg0: i32) -> (i32, i32) {
    %c0_i32 = arith.constant 0 : i32
    %c0_i32_0 = arith.constant 0 : i32
    %c0_i32_1 = arith.constant 0 : i32
    return %c0_i32, %c0_i32_0 : i32, i32
  }
  func.func @transform_8(%arg0: i32) -> (i32, i32) {
    %c0_i32 = arith.constant 0 : i32
    %c0_i32_0 = arith.constant 0 : i32
    %c0_i32_1 = arith.constant 0 : i32
    return %c0_i32, %c0_i32_0 : i32, i32
  }
  func.func @transform_9(%arg0: i32) -> (i32, i32) {
    %c0_i32 = arith.constant 0 : i32
    %c0_i32_0 = arith.constant 0 : i32
    return %arg0, %c0_i32 : i32, i32
  }
}

</mosaic_0001>

<llo_original>
// kernel: tpu_custom_call.1
$region0: #{tpu_custom_call.1}
  #allocation0 [shape = 'u32[]', space=smem, size = 0x4, offset = 0x4, fixed_abs, tag = 'smem constant byte address 0x4 - core index']
  #allocation1 [shape = 'u32[144,128]{1,0:T(1,128)}', space=vmem, size = 0x12000, scoped, tag = 'internal scratch']
  %s0 = inlined_call_operand.hbm [shape: f32[16,256], index: 0, kind: input, shape index: {}]
  %s1 = inlined_call_operand.hbm [shape: f32[1,256], index: 1, kind: input, shape index: {}]
  %s2 = inlined_call_operand.hbm [shape: f32[1,256], index: 2, kind: input, shape index: {}]
  %s3 = inlined_call_operand.hbm [shape: bf16[256,512], index: 3, kind: input, shape index: {}]
  %s4 = inlined_call_operand.vmem [shape: f32[1,512], index: 4, kind: input, shape index: {}]
  %s5 = inlined_call_operand.hbm [shape: bf16[512,512], index: 5, kind: input, shape index: {}]
  %s6 = inlined_call_operand.vmem [shape: f32[1,512], index: 6, kind: input, shape index: {}]
  %s7 = inlined_call_operand.hbm [shape: bf16[512,128], index: 7, kind: input, shape index: {}]
  %s8 = inlined_call_operand.vmem [shape: f32[1,128], index: 8, kind: input, shape index: {}]
  %s9 = inlined_call_operand.hbm [shape: f32[16,128], index: 9, kind: output, shape index: {}]
  %s10 = sld [smem:[#allocation0]]
  $region93: #{tpu_custom_call.1} parent=0
    _
  %s12 = ssub.s32 1, %s10
  %s13 = scalar_select 0, %s12, %s10
  $region1: #{tpu_custom_call.1} parent=0
    #allocation2 [shape = 'u8[16384]{0}', space=vmem, size = 0x4000, scoped, tag = 'input window, operand 0']
    #allocation3 [shape = 's32[2]{0}', space=sflag, size = 0x8, scoped, tag = 'scoped memory for tpu_custom_call.1']
    #allocation4 [shape = 's32[2]{0}', space=sflag, size = 0x8, scoped, tag = 'scoped memory for tpu_custom_call.1']
    #allocation5 [shape = 'u8[1024]{0}', space=vmem, size = 0x400, scoped, tag = 'input window, operand 1, single buffered']
    #allocation6 [shape = 's32[1]{0}', space=sflag, size = 0x4, scoped, tag = 'scoped memory for tpu_custom_call.1']
    #allocation7 [shape = 'u8[1024]{0}', space=vmem, size = 0x400, scoped, tag = 'input window, operand 2, single buffered']
    #allocation8 [shape = 'u8[262144]{0}', space=vmem, size = 0x40000, scoped, tag = 'input window, operand 3, single buffered']
    #allocation9 [shape = 's32[1]{0}', space=sflag, size = 0x4, scoped, tag = 'scoped memory for tpu_custom_call.1']
    #allocation10 [shape = 'u8[524288]{0}', space=vmem, size = 0x80000, scoped, tag = 'input window, operand 5, single buffered']
    #allocation11 [shape = 'u8[131072]{0}', space=vmem, size = 0x20000, scoped, tag = 'input window, operand 7, single buffered']
    #allocation12 [shape = 's32[1]{0}', space=sflag, size = 0x4, scoped, tag = 'scoped memory for tpu_custom_call.1']
    #allocation13 [shape = 'u8[8192]{0}', space=vmem, size = 0x2000, scoped, tag = 'output window, operand 0']
    %14 = vsyncpa [#allocation3], 0
    %s15 = scalar_lea.sflag [#allocation3], 1
    %16 = vsyncpa %s15, 0
    %17 = vsyncpa [#allocation6], 0
    %18 = vsyncpa [#allocation9], 0
    %19 = vsyncpa [#allocation12], 0
    %20 = vsyncpa [#allocation4], 0
    %s21 = scalar_lea.sflag [#allocation4], 1
    %22 = vsyncpa %s21, 0
    loop: start=0, step=1, limit=4
    $region2: #{tpu_custom_call.1} parent=1 // loop_pre_header
      _
    $region3: #{tpu_custom_call.1} parent=1 // loop_header
      %s24 = sphi 0, %s28
      %p25 = scmp.ge.s32.totalorder %s24, 4
      %s34 = sphi 0, %s36
      %s37 = sphi 0, %s34
      %s38 = sphi 0, %s37
      %s54 = sphi 0, %s38
      %s58 = sphi 0, %s58
      %s60 = sphi 0, %s58
      %s61 = sphi 0, %s60
      %s75 = sphi 0, %s61
      %s79 = sphi 0, %s79
      %s81 = sphi 0, %s79
      %s82 = sphi 0, %s81
      %s96 = sphi 0, %s82
      %s100 = sphi 0, %s100
      %s102 = sphi 0, %s100
      %s103 = sphi 0, %s102
      %s117 = sphi 0, %s103
      %s121 = sphi 0, %s121
      %s123 = sphi 0, %s121
      %s124 = sphi 0, %s123
      %s138 = sphi 0, %s124
      %s142 = sphi 0, %s142
      %s144 = sphi 0, %s142
      %s145 = sphi 0, %s144
      %s159 = sphi 0, %s145
      %s163 = sphi 0, %s163
      %s165 = sphi 0, %s163
      %s166 = sphi 0, %s165
      %s180 = sphi 0, %s166
      %s184 = sphi 0, %s184
      %s186 = sphi 0, %s184
      %s187 = sphi 0, %s186
      %s201 = sphi 0, %s187
      %s205 = sphi 0, %s205
      %s207 = sphi 0, %s205
      %s208 = sphi 0, %s207
      %s222 = sphi 0, %s208
      %s228 = sphi 0, %s230
      %s231 = sphi 0, %s228
      %s232 = sphi 0, %s231
      %s248 = sphi 0, %s232
    $region4: #{tpu_custom_call.1} parent=1 // loop_header_branch
      %27 = sbr.rel (%p25) target = $region8
    $region5: #{tpu_custom_call.1} parent=1 // loop_body
      %s29 = ssub.s32 %s24, 1
      %s30 = ssub.s32 %s24, 2
      %s31 = sadd.s32 %s24, 1
      %s32 = ssub.s32 %s24, %s31
      %p33 = scmp.eq.s32.totalorder %s32, 0
      %s35 = sadd.s32 %s34, 1
      %s36 = scalar_select %p33, %s34, %s35
      %p39 = pneg %p33
      %p40 = scmp.eq.s32.totalorder %s24, 1
      %p41 = por %p39, %p40
      %p42 = scmp.ne.s32.totalorder %s34, %s37
      %p43 = scmp.eq.s32.totalorder %s24, 0
      %p44 = por %p42, %p43
      %p45 = scmp.ne.s32.totalorder %s34, %s37
      %p46 = scmp.eq.s32.totalorder %s29, 1
      %p47 = por %p45, %p46
      %p48 = scmp.ne.s32.totalorder %s37, %s38
      %p49 = scmp.eq.s32.totalorder %s29, 0
      %p50 = por %p48, %p49
      %p51 = scmp.ne.s32.totalorder %s37, %s38
      %p52 = scmp.eq.s32.totalorder %s30, 1
      %p53 = por %p51, %p52
      %p55 = scmp.ne.s32.totalorder %s38, %s54
      %p56 = scmp.eq.s32.totalorder %s30, 0
      %p57 = por %p55, %p56
      %s59 = sadd.s32 %s58, 1
      %p62 = scmp.eq.s32.totalorder %s24, 1
      %p63 = scmp.ne.s32.totalorder %s58, %s60
      %p64 = scmp.eq.s32.totalorder %s24, 0
      %p65 = por %p63, %p64
      %p66 = scmp.ne.s32.totalorder %s58, %s60
      %p67 = scmp.eq.s32.totalorder %s29, 1
      %p68 = por %p66, %p67
      %p69 = scmp.ne.s32.totalorder %s60, %s61
      %p70 = scmp.eq.s32.totalorder %s29, 0
      %p71 = por %p69, %p70
      %p72 = scmp.ne.s32.totalorder %s60, %s61
      %p73 = scmp.eq.s32.totalorder %s30, 1
      %p74 = por %p72, %p73
      %p76 = scmp.ne.s32.totalorder %s61, %s75
      %p77 = scmp.eq.s32.totalorder %s30, 0
      %p78 = por %p76, %p77
      %s80 = sadd.s32 %s79, 1
      %p83 = scmp.eq.s32.totalorder %s24, 1
      %p84 = scmp.ne.s32.totalorder %s79, %s81
      %p85 = scmp.eq.s32.totalorder %s24, 0
      %p86 = por %p84, %p85
      %p87 = scmp.ne.s32.totalorder %s79, %s81
      %p88 = scmp.eq.s32.totalorder %s29, 1
      %p89 = por %p87, %p88
      %p90 = scmp.ne.s32.totalorder %s81, %s82
      %p91 = scmp.eq.s32.totalorder %s29, 0
      %p92 = por %p90, %p91
      %p93 = scmp.ne.s32.totalorder %s81, %s82
      %p94 = scmp.eq.s32.totalorder %s30, 1
      %p95 = por %p93, %p94
      %p97 = scmp.ne.s32.totalorder %s82, %s96
      %p98 = scmp.eq.s32.totalorder %s30, 0
      %p99 = por %p97, %p98
      %s101 = sadd.s32 %s100, 1
      %p104 = scmp.eq.s32.totalorder %s24, 1
      %p105 = scmp.ne.s32.totalorder %s100, %s102
      %p106 = scmp.eq.s32.totalorder %s24, 0
      %p107 = por %p105, %p106
      %p108 = scmp.ne.s32.totalorder %s100, %s102
      %p109 = scmp.eq.s32.totalorder %s29, 1
      %p110 = por %p108, %p109
      %p111 = scmp.ne.s32.totalorder %s102, %s103
      %p112 = scmp.eq.s32.totalorder %s29, 0
      %p113 = por %p111, %p112
      %p114 = scmp.ne.s32.totalorder %s102, %s103
      %p115 = scmp.eq.s32.totalorder %s30, 1
      %p116 = por %p114, %p115
      %p118 = scmp.ne.s32.totalorder %s103, %s117
      %p119 = scmp.eq.s32.totalorder %s30, 0
      %p120 = por %p118, %p119
      %s122 = sadd.s32 %s121, 1
      %p125 = scmp.eq.s32.totalorder %s24, 1
      %p126 = scmp.ne.s32.totalorder %s121, %s123
      %p127 = scmp.eq.s32.totalorder %s24, 0
      %p128 = por %p126, %p127
      %p129 = scmp.ne.s32.totalorder %s121, %s123
      %p130 = scmp.eq.s32.totalorder %s29, 1
      %p131 = por %p129, %p130
      %p132 = scmp.ne.s32.totalorder %s123, %s124
      %p133 = scmp.eq.s32.totalorder %s29, 0
      %p134 = por %p132, %p133
      %p135 = scmp.ne.s32.totalorder %s123, %s124
      %p136 = scmp.eq.s32.totalorder %s30, 1
      %p137 = por %p135, %p136
      %p139 = scmp.ne.s32.totalorder %s124, %s138
      %p140 = scmp.eq.s32.totalorder %s30, 0
      %p141 = por %p139, %p140
      %s143 = sadd.s32 %s142, 1
      %p146 = scmp.eq.s32.totalorder %s24, 1
      %p147 = scmp.ne.s32.totalorder %s142, %s144
      %p148 = scmp.eq.s32.totalorder %s24, 0
      %p149 = por %p147, %p148
      %p150 = scmp.ne.s32.totalorder %s142, %s144
      %p151 = scmp.eq.s32.totalorder %s29, 1
      %p152 = por %p150, %p151
      %p153 = scmp.ne.s32.totalorder %s144, %s145
      %p154 = scmp.eq.s32.totalorder %s29, 0
      %p155 = por %p153, %p154
      %p156 = scmp.ne.s32.totalorder %s144, %s145
      %p157 = scmp.eq.s32.totalorder %s30, 1
      %p158 = por %p156, %p157
      %p160 = scmp.ne.s32.totalorder %s145, %s159
      %p161 = scmp.eq.s32.totalorder %s30, 0
      %p162 = por %p160, %p161
      %s164 = sadd.s32 %s163, 1
      %p167 = scmp.eq.s32.totalorder %s24, 1
      %p168 = scmp.ne.s32.totalorder %s163, %s165
      %p169 = scmp.eq.s32.totalorder %s24, 0
      %p170 = por %p168, %p169
      %p171 = scmp.ne.s32.totalorder %s163, %s165
      %p172 = scmp.eq.s32.totalorder %s29, 1
      %p173 = por %p171, %p172
      %p174 = scmp.ne.s32.totalorder %s165, %s166
      %p175 = scmp.eq.s32.totalorder %s29, 0
      %p176 = por %p174, %p175
      %p177 = scmp.ne.s32.totalorder %s165, %s166
      %p178 = scmp.eq.s32.totalorder %s30, 1
      %p179 = por %p177, %p178
      %p181 = scmp.ne.s32.totalorder %s166, %s180
      %p182 = scmp.eq.s32.totalorder %s30, 0
      %p183 = por %p181, %p182
      %s185 = sadd.s32 %s184, 1
      %p188 = scmp.eq.s32.totalorder %s24, 1
      %p189 = scmp.ne.s32.totalorder %s184, %s186
      %p190 = scmp.eq.s32.totalorder %s24, 0
      %p191 = por %p189, %p190
      %p192 = scmp.ne.s32.totalorder %s184, %s186
      %p193 = scmp.eq.s32.totalorder %s29, 1
      %p194 = por %p192, %p193
      %p195 = scmp.ne.s32.totalorder %s186, %s187
      %p196 = scmp.eq.s32.totalorder %s29, 0
      %p197 = por %p195, %p196
      %p198 = scmp.ne.s32.totalorder %s186, %s187
      %p199 = scmp.eq.s32.totalorder %s30, 1
      %p200 = por %p198, %p199
      %p202 = scmp.ne.s32.totalorder %s187, %s201
      %p203 = scmp.eq.s32.totalorder %s30, 0
      %p204 = por %p202, %p203
      %s206 = sadd.s32 %s205, 1
      %p209 = scmp.eq.s32.totalorder %s24, 1
      %p210 = scmp.ne.s32.totalorder %s205, %s207
      %p211 = scmp.eq.s32.totalorder %s24, 0
      %p212 = por %p210, %p211
      %p213 = scmp.ne.s32.totalorder %s205, %s207
      %p214 = scmp.eq.s32.totalorder %s29, 1
      %p215 = por %p213, %p214
      %p216 = scmp.ne.s32.totalorder %s207, %s208
      %p217 = scmp.eq.s32.totalorder %s29, 0
      %p218 = por %p216, %p217
      %p219 = scmp.ne.s32.totalorder %s207, %s208
      %p220 = scmp.eq.s32.totalorder %s30, 1
      %p221 = por %p219, %p220
      %p223 = scmp.ne.s32.totalorder %s208, %s222
      %p224 = scmp.eq.s32.totalorder %s30, 0
      %p225 = por %p223, %p224
      %s226 = ssub.s32 %s24, %s31
      %p227 = scmp.eq.s32.totalorder %s226, 0
      %s229 = sadd.s32 %s228, 1
      %s230 = scalar_select %p227, %s228, %s229
      %p233 = pneg %p227
      %p234 = scmp.eq.s32.totalorder %s24, 1
      %p235 = por %p233, %p234
      %p236 = scmp.ne.s32.totalorder %s228, %s231
      %p237 = scmp.eq.s32.totalorder %s24, 0
      %p238 = por %p236, %p237
      %p239 = scmp.ne.s32.totalorder %s228, %s231
      %p240 = scmp.eq.s32.totalorder %s29, 1
      %p241 = por %p239, %p240
      %p242 = scmp.ne.s32.totalorder %s231, %s232
      %p243 = scmp.eq.s32.totalorder %s29, 0
      %p244 = por %p242, %p243
      %p245 = scmp.ne.s32.totalorder %s231, %s232
      %p246 = scmp.eq.s32.totalorder %s30, 1
      %p247 = por %p245, %p246
      %p249 = scmp.ne.s32.totalorder %s232, %s248
      %p250 = scmp.eq.s32.totalorder %s30, 0
      %p251 = por %p249, %p250
      %p252 = scmp.le.s32.totalorder 1, %s24
      %p253 = scmp.lt.s32.totalorder %s24, 3
      %p254 = pnand %p252, %p253
      %p255 = pneg %p254
      // Predicated region
      $region9: #{tpu_custom_call.1} parent=5 // pred_check
        _
      $region10: #{tpu_custom_call.1} parent=5 // pred_check_branch
        %257 = sbr.rel (%p254) target = $region12
      $region11: #{tpu_custom_call.1} parent=5 // pred_region
        %s258 = ssub.s32 %s24, 1
        // Predicated region
        $region13: #{tpu_custom_call.1} parent=11 // pred_check
          %p259 = pneg %p71
        $region14: #{tpu_custom_call.1} parent=11 // pred_check_branch
          %261 = sbr.rel (%p259) target = $region16
        $region15: #{tpu_custom_call.1} parent=11 // pred_region
          %s263 = ssub.s32 32, 32
          %264 = vsyncadd [#allocation6], %s263
          %s266 = sshll.u32 [#allocation5], 4
          %s267 = int_to_ptr.vmem [resolvable:$true] %s266
          %269 = dma.hbm_to_vmem [thread:$0]  %s1, 32, %s267, [#allocation6]
        $region16: #{tpu_custom_call.1} parent=11 // pred_fallthru
          _
        // Predicated region
        $region17: #{tpu_custom_call.1} parent=11 // pred_check
          %p270 = pneg %p92
        $region18: #{tpu_custom_call.1} parent=11 // pred_check_branch
          %272 = sbr.rel (%p270) target = $region20
        $region19: #{tpu_custom_call.1} parent=11 // pred_region
          %s274 = ssub.s32 32, 32
          %275 = vsyncadd [#allocation6], %s274
          %s277 = sshll.u32 [#allocation7], 4
          %s278 = int_to_ptr.vmem [resolvable:$true] %s277
          %280 = dma.hbm_to_vmem [thread:$0]  %s2, 32, %s278, [#allocation6]
        $region20: #{tpu_custom_call.1} parent=11 // pred_fallthru
          _
        // Predicated region
        $region21: #{tpu_custom_call.1} parent=11 // pred_check
          %p281 = pneg %p113
        $region22: #{tpu_custom_call.1} parent=11 // pred_check_branch
          %283 = sbr.rel (%p281) target = $region24
        $region23: #{tpu_custom_call.1} parent=11 // pred_region
          %s285 = ssub.s32 8192, 8192
          %286 = vsyncadd [#allocation9], %s285
          %s287 = sshll.u32 [#allocation8], 4
          %s288 = int_to_ptr.vmem [resolvable:$true] %s287
          %293 = dma.hbm_to_vmem [thread:$0]  %s3, 8192, %s288, [#allocation9], 256, 256, 16
        $region24: #{tpu_custom_call.1} parent=11 // pred_fallthru
          _
        // Predicated region
        $region25: #{tpu_custom_call.1} parent=11 // pred_check
          %p294 = pneg %p134
        $region26: #{tpu_custom_call.1} parent=11 // pred_check_branch
          %296 = sbr.rel (%p294) target = $region28
        $region27: #{tpu_custom_call.1} parent=11 // pred_region
          _
        $region28: #{tpu_custom_call.1} parent=11 // pred_fallthru
          _
        // Predicated region
        $region29: #{tpu_custom_call.1} parent=11 // pred_check
          %p297 = pneg %p155
        $region30: #{tpu_custom_call.1} parent=11 // pred_check_branch
          %299 = sbr.rel (%p297) target = $region32
        $region31: #{tpu_custom_call.1} parent=11 // pred_region
          %s301 = ssub.s32 16384, 16384
          %302 = vsyncadd [#allocation9], %s301
          %s303 = sshll.u32 [#allocation10], 4
          %s304 = int_to_ptr.vmem [resolvable:$true] %s303
          %309 = dma.hbm_to_vmem [thread:$0]  %s5, 16384, %s304, [#allocation9], 256, 256, 16
        $region32: #{tpu_custom_call.1} parent=11 // pred_fallthru
          _
        // Predicated region
        $region33: #{tpu_custom_call.1} parent=11 // pred_check
          %p310 = pneg %p176
        $region34: #{tpu_custom_call.1} parent=11 // pred_check_branch
          %312 = sbr.rel (%p310) target = $region36
        $region35: #{tpu_custom_call.1} parent=11 // pred_region
          _
        $region36: #{tpu_custom_call.1} parent=11 // pred_fallthru
          _
        // Predicated region
        $region37: #{tpu_custom_call.1} parent=11 // pred_check
          %p313 = pneg %p197
        $region38: #{tpu_custom_call.1} parent=11 // pred_check_branch
          %315 = sbr.rel (%p313) target = $region40
        $region39: #{tpu_custom_call.1} parent=11 // pred_region
          %s317 = ssub.s32 4096, 4096
          %318 = vsyncadd [#allocation12], %s317
          %s319 = sshll.u32 [#allocation11], 4
          %s320 = int_to_ptr.vmem [resolvable:$true] %s319
          %325 = dma.hbm_to_vmem [thread:$0]  %s7, 4096, %s320, [#allocation12], 64, 64, 4
        $region40: #{tpu_custom_call.1} parent=11 // pred_fallthru
          _
        // Predicated region
        $region41: #{tpu_custom_call.1} parent=11 // pred_check
          %p326 = pneg %p218
        $region42: #{tpu_custom_call.1} parent=11 // pred_check_branch
          %328 = sbr.rel (%p326) target = $region44
        $region43: #{tpu_custom_call.1} parent=11 // pred_region
          _
        $region44: #{tpu_custom_call.1} parent=11 // pred_fallthru
          _
      $region12: #{tpu_custom_call.1} parent=5 // pred_fallthru
        _
      %p329 = scmp.lt.s32.totalorder %s24, 2
      // Predicated region
      $region45: #{tpu_custom_call.1} parent=5 // pred_check
        %p330 = pneg %p329
      $region46: #{tpu_custom_call.1} parent=5 // pred_check_branch
        %332 = sbr.rel (%p330) target = $region48
      $region47: #{tpu_custom_call.1} parent=5 // pred_region
        // Predicated region
        $region49: #{tpu_custom_call.1} parent=47 // pred_check
          %p333 = pneg %p44
        $region50: #{tpu_custom_call.1} parent=47 // pred_check_branch
          %335 = sbr.rel (%p333) target = $region52
        $region51: #{tpu_custom_call.1} parent=47 // pred_region
          %s336 = sand.u32 %s34, 1
          %s337 = scalar_lea.sflag [#allocation3], %s336
          %s338 = sand.u32 %s34, 1
          %s339 = smul.addr %s338, 16
          %s340 = scalar_lea.vmem [#allocation2], %s339
          %s342 = ssub.s32 256, 256
          %343 = vsyncadd %s337, %s342
          %s344 = smul.addr %s24, 2
          %s345 = smul.addr %s344, 128
          %s346 = scalar_lea.hbm %s0, %s345
          %s348 = sshll.u32 %s340, 4
          %s349 = int_to_ptr.vmem [resolvable:$true] %s348
          %351 = dma.hbm_to_vmem [thread:$0]  %s346, 256, %s349, %s337
        $region52: #{tpu_custom_call.1} parent=47 // pred_fallthru
          _
      $region48: #{tpu_custom_call.1} parent=5 // pred_fallthru
        _
      %p352 = scmp.le.s32.totalorder 1, %s24
      %p353 = scmp.lt.s32.totalorder %s24, 3
      %p354 = pnand %p352, %p353
      %p355 = pneg %p354
      // Predicated region
      $region53: #{tpu_custom_call.1} parent=5 // pred_check
        _
      $region54: #{tpu_custom_call.1} parent=5 // pred_check_branch
        %357 = sbr.rel (%p354) target = $region56
      $region55: #{tpu_custom_call.1} parent=5 // pred_region
        %s358 = ssub.s32 %s24, 1
        %s359 = sand.u32 %s37, 1
        %s360 = scalar_lea.sflag [#allocation3], %s359
        %s361 = sand.u32 %s37, 1
        %s362 = smul.addr %s361, 16
        %s363 = scalar_lea.vmem [#allocation2], %s362
        // Predicated region
        $region57: #{tpu_custom_call.1} parent=55 // pred_check
          %p364 = pneg %p50
        $region58: #{tpu_custom_call.1} parent=55 // pred_check_branch
          %366 = sbr.rel (%p364) target = $region60
        $region59: #{tpu_custom_call.1} parent=55 // pred_region
          %367 = dma.done %s360, 256
        $region60: #{tpu_custom_call.1} parent=55 // pred_fallthru
          _
        // Predicated region
        $region61: #{tpu_custom_call.1} parent=55 // pred_check
          %p368 = pneg %p71
        $region62: #{tpu_custom_call.1} parent=55 // pred_check_branch
          %370 = sbr.rel (%p368) target = $region64
        $region63: #{tpu_custom_call.1} parent=55 // pred_region
          %371 = dma.done [#allocation6], 32
        $region64: #{tpu_custom_call.1} parent=55 // pred_fallthru
          _
        // Predicated region
        $region65: #{tpu_custom_call.1} parent=55 // pred_check
          %p372 = pneg %p92
        $region66: #{tpu_custom_call.1} parent=55 // pred_check_branch
          %374 = sbr.rel (%p372) target = $region68
        $region67: #{tpu_custom_call.1} parent=55 // pred_region
          %375 = dma.done [#allocation6], 32
        $region68: #{tpu_custom_call.1} parent=55 // pred_fallthru
          _
        // Predicated region
        $region69: #{tpu_custom_call.1} parent=55 // pred_check
          %p376 = pneg %p113
        $region70: #{tpu_custom_call.1} parent=55 // pred_check_branch
          %378 = sbr.rel (%p376) target = $region72
        $region71: #{tpu_custom_call.1} parent=55 // pred_region
          %379 = dma.done [#allocation9], 8192
        $region72: #{tpu_custom_call.1} parent=55 // pred_fallthru
          _
        // Predicated region
        $region73: #{tpu_custom_call.1} parent=55 // pred_check
          %p380 = pneg %p155
        $region74: #{tpu_custom_call.1} parent=55 // pred_check_branch
          %382 = sbr.rel (%p380) target = $region76
        $region75: #{tpu_custom_call.1} parent=55 // pred_region
          %383 = dma.done [#allocation9], 16384
        $region76: #{tpu_custom_call.1} parent=55 // pred_fallthru
          _
        // Predicated region
        $region77: #{tpu_custom_call.1} parent=55 // pred_check
          %p384 = pneg %p197
        $region78: #{tpu_custom_call.1} parent=55 // pred_check_branch
          %386 = sbr.rel (%p384) target = $region80
        $region79: #{tpu_custom_call.1} parent=55 // pred_region
          %387 = dma.done [#allocation12], 4096
        $region80: #{tpu_custom_call.1} parent=55 // pred_fallthru
          _
        %s388 = sand.u32 %s37, 1
        %s389 = scalar_lea.sflag [#allocation3], %s388
        %s390 = sand.u32 %s37, 1
        %s391 = smul.addr %s390, 16
        %s392 = scalar_lea.vmem [#allocation2], %s391
        %p393 = pneg %p50
        %p394 = pneg %p47
        %p395 = pneg %p71
        %p396 = pneg %p68
        %p397 = pneg %p92
        %p398 = pneg %p89
        %p399 = pneg %p113
        %p400 = pneg %p110
        %p401 = pneg %p134
        %p402 = pneg %p131
        %p403 = pneg %p155
        %p404 = pneg %p152
        %p405 = pneg %p176
        %p406 = pneg %p173
        %p407 = pneg %p197
        %p408 = pneg %p194
        %p409 = pneg %p218
        %p410 = pneg %p215
        %p411 = pneg %p244
        %p412 = pneg %p241
        %s413 = sand.u32 %s231, 1
        %s414 = scalar_lea.sflag [#allocation4], %s413
        %s415 = sand.u32 %s231, 1
        %s416 = smul.addr %s415, 8
        %s417 = scalar_lea.vmem [#allocation13], %s416
        %v423 = vld [vmem:[%s363] sm:$0xff]
        %v424 = vld [vmem:[%s363 + $0x8] sm:$0xff]
        %v425 = vadd.f32 %v423, %v424
        %426 = vadd.xlane.f32.xlu0 %v425
        %v427 = vpop.xlane.xlu0 %426
        %v428 = vmul.f32 %v423, %v423
        %v429 = vmul.f32 %v424, %v424
        %v430 = vadd.f32 %v428, %v429
        %431 = vadd.xlane.f32.xlu0 %v430
        %v432 = vpop.xlane.xlu0 %431
        %v433 = vmul.f32 %v427, 0.00390625
        %v434 = vmul.f32 %v432, 0.00390625
        %v435 = vmul.f32 %v433, %v433
        %v436 = vsub.f32 %v434, %v435
        %v437 = vmax.f32 %v436, 0.0
        %v438 = vsub.f32 %v423, %v433
        %v439 = vsub.f32 %v424, %v433
        %v440 = vadd.f32 %v437, 1e-05
        %v441 = vrsqrt.pop %v440
        %v442 = vmul.f32 %v438, %v441
        %v443 = vmul.f32 %v439, %v441
        %v444 = vld [vmem:[#allocation5] sm:$0x3]
        %v446 = vlaneseq
        %v447 = vshrl.u32 %v446, 7
        %v448 = vsub.s32 0, %v447
        %v449 = vrot.slane %v444, %v448
        %v450 = vlaneseq
        %v451 = vshrl.u32 %v450, 7
        %v452 = vsub.s32 1, %v451
        %v453 = vrot.slane %v444, %v452
        %v456 = vmul.f32 %v442, %v449
        %v457 = vmul.f32 %v443, %v453
        %v458 = vld [vmem:[#allocation7] sm:$0x3]
        %v460 = vlaneseq
        %v461 = vshrl.u32 %v460, 7
        %v462 = vsub.s32 0, %v461
        %v463 = vrot.slane %v458, %v462
        %v464 = vlaneseq
        %v465 = vshrl.u32 %v464, 7
        %v466 = vsub.s32 1, %v465
        %v467 = vrot.slane %v458, %v466
        %v470 = vadd.f32 %v456, %v463
        %v471 = vadd.f32 %v457, %v467
        %v472 = vpack.c.bf16 %v470, %v470
        %v473 = vpack.c.bf16 %v471, %v471
        %v474 = vld [vmem:[#allocation8] sm:$0xff]
        %v475 = vld [vmem:[#allocation8 + $0x8] sm:$0xff]
        %v476 = vld [vmem:[#allocation8 + $0x10] sm:$0xff]
        %v477 = vld [vmem:[#allocation8 + $0x18] sm:$0xff]
        %v478 = vld [vmem:[#allocation8 + $0x20] sm:$0xff]
        %v479 = vld [vmem:[#allocation8 + $0x28] sm:$0xff]
        %v480 = vld [vmem:[#allocation8 + $0x30] sm:$0xff]
        %v481 = vld [vmem:[#allocation8 + $0x38] sm:$0xff]
        %v482 = vld [vmem:[#allocation8 + $0x40] sm:$0xff]
        %v483 = vld [vmem:[#allocation8 + $0x48] sm:$0xff]
        %v484 = vld [vmem:[#allocation8 + $0x50] sm:$0xff]
        %v485 = vld [vmem:[#allocation8 + $0x58] sm:$0xff]
        %v486 = vld [vmem:[#allocation8 + $0x60] sm:$0xff]
        %v487 = vld [vmem:[#allocation8 + $0x68] sm:$0xff]
        %v488 = vld [vmem:[#allocation8 + $0x70] sm:$0xff]
        %v489 = vld [vmem:[#allocation8 + $0x78] sm:$0xff]
        %v490 = vld [vmem:[#allocation8 + $0x80] sm:$0xff]
        %v491 = vld [vmem:[#allocation8 + $0x88] sm:$0xff]
        %v492 = vld [vmem:[#allocation8 + $0x90] sm:$0xff]
        %v493 = vld [vmem:[#allocation8 + $0x98] sm:$0xff]
        %v494 = vld [vmem:[#allocation8 + $0xa0] sm:$0xff]
        %v495 = vld [vmem:[#allocation8 + $0xa8] sm:$0xff]
        %v496 = vld [vmem:[#allocation8 + $0xb0] sm:$0xff]
        %v497 = vld [vmem:[#allocation8 + $0xb8] sm:$0xff]
        %v498 = vld [vmem:[#allocation8 + $0xc0] sm:$0xff]
        %v499 = vld [vmem:[#allocation8 + $0xc8] sm:$0xff]
        %v500 = vld [vmem:[#allocation8 + $0xd0] sm:$0xff]
        %v501 = vld [vmem:[#allocation8 + $0xd8] sm:$0xff]
        %v502 = vld [vmem:[#allocation8 + $0xe0] sm:$0xff]
        %v503 = vld [vmem:[#allocation8 + $0xe8] sm:$0xff]
        %v504 = vld [vmem:[#allocation8 + $0xf0] sm:$0xff]
        %v505 = vld [vmem:[#allocation8 + $0xf8] sm:$0xff]
        %v506 = vld [vmem:[#allocation8 + $0x100] sm:$0xff]
        %v507 = vld [vmem:[#allocation8 + $0x108] sm:$0xff]
        %v508 = vld [vmem:[#allocation8 + $0x110] sm:$0xff]
        %v509 = vld [vmem:[#allocation8 + $0x118] sm:$0xff]
        %v510 = vld [vmem:[#allocation8 + $0x120] sm:$0xff]
        %v511 = vld [vmem:[#allocation8 + $0x128] sm:$0xff]
        %v512 = vld [vmem:[#allocation8 + $0x130] sm:$0xff]
        %v513 = vld [vmem:[#allocation8 + $0x138] sm:$0xff]
        %v514 = vld [vmem:[#allocation8 + $0x140] sm:$0xff]
        %v515 = vld [vmem:[#allocation8 + $0x148] sm:$0xff]
        %v516 = vld [vmem:[#allocation8 + $0x150] sm:$0xff]
        %v517 = vld [vmem:[#allocation8 + $0x158] sm:$0xff]
        %v518 = vld [vmem:[#allocation8 + $0x160] sm:$0xff]
        %v519 = vld [vmem:[#allocation8 + $0x168] sm:$0xff]
        %v520 = vld [vmem:[#allocation8 + $0x170] sm:$0xff]
        %v521 = vld [vmem:[#allocation8 + $0x178] sm:$0xff]
        %v522 = vld [vmem:[#allocation8 + $0x180] sm:$0xff]
        %v523 = vld [vmem:[#allocation8 + $0x188] sm:$0xff]
        %v524 = vld [vmem:[#allocation8 + $0x190] sm:$0xff]
        %v525 = vld [vmem:[#allocation8 + $0x198] sm:$0xff]
        %v526 = vld [vmem:[#allocation8 + $0x1a0] sm:$0xff]
        %v527 = vld [vmem:[#allocation8 + $0x1a8] sm:$0xff]
        %v528 = vld [vmem:[#allocation8 + $0x1b0] sm:$0xff]
        %v529 = vld [vmem:[#allocation8 + $0x1b8] sm:$0xff]
        %v530 = vld [vmem:[#allocation8 + $0x1c0] sm:$0xff]
        %v531 = vld [vmem:[#allocation8 + $0x1c8] sm:$0xff]
        %v532 = vld [vmem:[#allocation8 + $0x1d0] sm:$0xff]
        %v533 = vld [vmem:[#allocation8 + $0x1d8] sm:$0xff]
        %v534 = vld [vmem:[#allocation8 + $0x1e0] sm:$0xff]
        %v535 = vld [vmem:[#allocation8 + $0x1e8] sm:$0xff]
        %v536 = vld [vmem:[#allocation8 + $0x1f0] sm:$0xff]
        %v537 = vld [vmem:[#allocation8 + $0x1f8] sm:$0xff]
        %v602 = vunpack.c.l.b16 %v474
        %v603 = vunpack.c.h.b16 %v474
        %v604 = vunpack.c.l.b16 %v475
        %v605 = vunpack.c.h.b16 %v475
        %v606 = vunpack.c.l.b16 %v476
        %v607 = vunpack.c.h.b16 %v476
        %v608 = vunpack.c.l.b16 %v477
        %v609 = vunpack.c.h.b16 %v477
        %v610 = vunpack.c.l.b16 %v478
        %v611 = vunpack.c.h.b16 %v478
        %v612 = vunpack.c.l.b16 %v479
        %v613 = vunpack.c.h.b16 %v479
        %v614 = vunpack.c.l.b16 %v480
        %v615 = vunpack.c.h.b16 %v480
        %v616 = vunpack.c.l.b16 %v481
        %v617 = vunpack.c.h.b16 %v481
        %v618 = vunpack.c.l.b16 %v482
        %v619 = vunpack.c.h.b16 %v482
        %v620 = vunpack.c.l.b16 %v483
        %v621 = vunpack.c.h.b16 %v483
        %v622 = vunpack.c.l.b16 %v484
        %v623 = vunpack.c.h.b16 %v484
        %v624 = vunpack.c.l.b16 %v485
        %v625 = vunpack.c.h.b16 %v485
        %v626 = vunpack.c.l.b16 %v486
        %v627 = vunpack.c.h.b16 %v486
        %v628 = vunpack.c.l.b16 %v487
        %v629 = vunpack.c.h.b16 %v487
        %v630 = vunpack.c.l.b16 %v488
        %v631 = vunpack.c.h.b16 %v488
        %v632 = vunpack.c.l.b16 %v489
        %v633 = vunpack.c.h.b16 %v489
        %v634 = vunpack.c.l.b16 %v490
        %v635 = vunpack.c.h.b16 %v490
        %v636 = vunpack.c.l.b16 %v491
        %v637 = vunpack.c.h.b16 %v491
        %v638 = vunpack.c.l.b16 %v492
        %v639 = vunpack.c.h.b16 %v492
        %v640 = vunpack.c.l.b16 %v493
        %v641 = vunpack.c.h.b16 %v493
        %v642 = vunpack.c.l.b16 %v494
        %v643 = vunpack.c.h.b16 %v494
        %v644 = vunpack.c.l.b16 %v495
        %v645 = vunpack.c.h.b16 %v495
        %v646 = vunpack.c.l.b16 %v496
        %v647 = vunpack.c.h.b16 %v496
        %v648 = vunpack.c.l.b16 %v497
        %v649 = vunpack.c.h.b16 %v497
        %v650 = vunpack.c.l.b16 %v498
        %v651 = vunpack.c.h.b16 %v498
        %v652 = vunpack.c.l.b16 %v499
        %v653 = vunpack.c.h.b16 %v499
        %v654 = vunpack.c.l.b16 %v500
        %v655 = vunpack.c.h.b16 %v500
        %v656 = vunpack.c.l.b16 %v501
        %v657 = vunpack.c.h.b16 %v501
        %v658 = vunpack.c.l.b16 %v502
        %v659 = vunpack.c.h.b16 %v502
        %v660 = vunpack.c.l.b16 %v503
        %v661 = vunpack.c.h.b16 %v503
        %v662 = vunpack.c.l.b16 %v504
        %v663 = vunpack.c.h.b16 %v504
        %v664 = vunpack.c.l.b16 %v505
        %v665 = vunpack.c.h.b16 %v505
        %v666 = vunpack.c.l.b16 %v506
        %v667 = vunpack.c.h.b16 %v506
        %v668 = vunpack.c.l.b16 %v507
        %v669 = vunpack.c.h.b16 %v507
        %v670 = vunpack.c.l.b16 %v508
        %v671 = vunpack.c.h.b16 %v508
        %v672 = vunpack.c.l.b16 %v509
        %v673 = vunpack.c.h.b16 %v509
        %v674 = vunpack.c.l.b16 %v510
        %v675 = vunpack.c.h.b16 %v510
        %v676 = vunpack.c.l.b16 %v511
        %v677 = vunpack.c.h.b16 %v511
        %v678 = vunpack.c.l.b16 %v512
        %v679 = vunpack.c.h.b16 %v512
        %v680 = vunpack.c.l.b16 %v513
        %v681 = vunpack.c.h.b16 %v513
        %v682 = vunpack.c.l.b16 %v514
        %v683 = vunpack.c.h.b16 %v514
        %v684 = vunpack.c.l.b16 %v515
        %v685 = vunpack.c.h.b16 %v515
        %v686 = vunpack.c.l.b16 %v516
        %v687 = vunpack.c.h.b16 %v516
        %v688 = vunpack.c.l.b16 %v517
        %v689 = vunpack.c.h.b16 %v517
        %v690 = vunpack.c.l.b16 %v518
        %v691 = vunpack.c.h.b16 %v518
        %v692 = vunpack.c.l.b16 %v519
        %v693 = vunpack.c.h.b16 %v519
        %v694 = vunpack.c.l.b16 %v520
        %v695 = vunpack.c.h.b16 %v520
        %v696 = vunpack.c.l.b16 %v521
        %v697 = vunpack.c.h.b16 %v521
        %v698 = vunpack.c.l.b16 %v522
        %v699 = vunpack.c.h.b16 %v522
        %v700 = vunpack.c.l.b16 %v523
        %v701 = vunpack.c.h.b16 %v523
        %v702 = vunpack.c.l.b16 %v524
        %v703 = vunpack.c.h.b16 %v524
        %v704 = vunpack.c.l.b16 %v525
        %v705 = vunpack.c.h.b16 %v525
        %v706 = vunpack.c.l.b16 %v526
        %v707 = vunpack.c.h.b16 %v526
        %v708 = vunpack.c.l.b16 %v527
        %v709 = vunpack.c.h.b16 %v527
        %v710 = vunpack.c.l.b16 %v528
        %v711 = vunpack.c.h.b16 %v528
        %v712 = vunpack.c.l.b16 %v529
        %v713 = vunpack.c.h.b16 %v529
        %v714 = vunpack.c.l.b16 %v530
        %v715 = vunpack.c.h.b16 %v530
        %v716 = vunpack.c.l.b16 %v531
        %v717 = vunpack.c.h.b16 %v531
        %v718 = vunpack.c.l.b16 %v532
        %v719 = vunpack.c.h.b16 %v532
        %v720 = vunpack.c.l.b16 %v533
        %v721 = vunpack.c.h.b16 %v533
        %v722 = vunpack.c.l.b16 %v534
        %v723 = vunpack.c.h.b16 %v534
        %v724 = vunpack.c.l.b16 %v535
        %v725 = vunpack.c.h.b16 %v535
        %v726 = vunpack.c.l.b16 %v536
        %v727 = vunpack.c.h.b16 %v536
        %v728 = vunpack.c.l.b16 %v537
        %v729 = vunpack.c.h.b16 %v537
        %v730 = vpack.c.b16 %v606, %v602
        %v731 = vpack.c.b16 %v607, %v603
        %v732 = vpack.c.b16 %v608, %v604
        %v733 = vpack.c.b16 %v609, %v605
        %v734 = vpack.c.b16 %v614, %v610
        %v735 = vpack.c.b16 %v615, %v611
        %v736 = vpack.c.b16 %v616, %v612
        %v737 = vpack.c.b16 %v617, %v613
        %v738 = vpack.c.b16 %v622, %v618
        %v739 = vpack.c.b16 %v623, %v619
        %v740 = vpack.c.b16 %v624, %v620
        %v741 = vpack.c.b16 %v625, %v621
        %v742 = vpack.c.b16 %v630, %v626
        %v743 = vpack.c.b16 %v631, %v627
        %v744 = vpack.c.b16 %v632, %v628
        %v745 = vpack.c.b16 %v633, %v629
        %v746 = vpack.c.b16 %v638, %v634
        %v747 = vpack.c.b16 %v639, %v635
        %v748 = vpack.c.b16 %v640, %v636
        %v749 = vpack.c.b16 %v641, %v637
        %v750 = vpack.c.b16 %v646, %v642
        %v751 = vpack.c.b16 %v647, %v643
        %v752 = vpack.c.b16 %v648, %v644
        %v753 = vpack.c.b16 %v649, %v645
        %v754 = vpack.c.b16 %v654, %v650
        %v755 = vpack.c.b16 %v655, %v651
        %v756 = vpack.c.b16 %v656, %v652
        %v757 = vpack.c.b16 %v657, %v653
        %v758 = vpack.c.b16 %v662, %v658
        %v759 = vpack.c.b16 %v663, %v659
        %v760 = vpack.c.b16 %v664, %v660
        %v761 = vpack.c.b16 %v665, %v661
        %v762 = vpack.c.b16 %v670, %v666
        %v763 = vpack.c.b16 %v671, %v667
        %v764 = vpack.c.b16 %v672, %v668
        %v765 = vpack.c.b16 %v673, %v669
        %v766 = vpack.c.b16 %v678, %v674
        %v767 = vpack.c.b16 %v679, %v675
        %v768 = vpack.c.b16 %v680, %v676
        %v769 = vpack.c.b16 %v681, %v677
        %v770 = vpack.c.b16 %v686, %v682
        %v771 = vpack.c.b16 %v687, %v683
        %v772 = vpack.c.b16 %v688, %v684
        %v773 = vpack.c.b16 %v689, %v685
        %v774 = vpack.c.b16 %v694, %v690
        %v775 = vpack.c.b16 %v695, %v691
        %v776 = vpack.c.b16 %v696, %v692
        %v777 = vpack.c.b16 %v697, %v693
        %v778 = vpack.c.b16 %v702, %v698
        %v779 = vpack.c.b16 %v703, %v699
        %v780 = vpack.c.b16 %v704, %v700
        %v781 = vpack.c.b16 %v705, %v701
        %v782 = vpack.c.b16 %v710, %v706
        %v783 = vpack.c.b16 %v711, %v707
        %v784 = vpack.c.b16 %v712, %v708
        %v785 = vpack.c.b16 %v713, %v709
        %v786 = vpack.c.b16 %v718, %v714
        %v787 = vpack.c.b16 %v719, %v715
        %v788 = vpack.c.b16 %v720, %v716
        %v789 = vpack.c.b16 %v721, %v717
        %v790 = vpack.c.b16 %v726, %v722
        %v791 = vpack.c.b16 %v727, %v723
        %v792 = vpack.c.b16 %v728, %v724
        %v793 = vpack.c.b16 %v729, %v725
        %858 = vmatprep.subr.bf16.mxu0 %v759
        %859 = vmatpush1.bf16.msra.mxu0 %v758
        %860 = vmatprep.subr.bf16.mxu0 %v755
        %861 = vmatpush1.bf16.msra.mxu0 %v754
        %862 = vmatprep.subr.bf16.mxu0 %v751
        %863 = vmatpush1.bf16.msra.mxu0 %v750
        %864 = vmatprep.subr.bf16.mxu0 %v747
        %865 = vmatpush1.bf16.msra.mxu0 %v746
        %866 = vmatprep.subr.bf16.mxu0 %v743
        %867 = vmatpush1.bf16.msra.mxu0 %v742
        %868 = vmatprep.subr.bf16.mxu0 %v739
        %869 = vmatpush1.bf16.msra.mxu0 %v738
        %870 = vmatprep.subr.bf16.mxu0 %v735
        %871 = vmatpush1.bf16.msra.mxu0 %v734
        %872 = vmatprep.subr.bf16.mxu0 %v731
        %873 = vmatpush1.bf16.msra.mxu0 %v730
        %874 = vmatprep.subr.bf16.mxu0 %v791
        %875 = vmatpush2.bf16.msra.mxu0 %v790
        %876 = vmatprep.subr.bf16.mxu0 %v787
        %877 = vmatpush2.bf16.msra.mxu0 %v786
        %878 = vmatprep.subr.bf16.mxu0 %v783
        %879 = vmatpush2.bf16.msra.mxu0 %v782
        %880 = vmatprep.subr.bf16.mxu0 %v779
        %881 = vmatpush2.bf16.msra.mxu0 %v778
        %882 = vmatprep.subr.bf16.mxu0 %v775
        %883 = vmatpush2.bf16.msra.mxu0 %v774
        %884 = vmatprep.subr.bf16.mxu0 %v771
        %885 = vmatpush2.bf16.msra.mxu0 %v770
        %886 = vmatprep.subr.bf16.mxu0 %v767
        %887 = vmatpush2.bf16.msra.mxu0 %v766
        %888 = vmatprep.subr.bf16.mxu0 %v763
        %889 = vmatpush2.bf16.msra.mxu0 %v762
        %890 = vmatprep.mubr.bf16.mxu0 %v473
        %891 = vmatmul.mubr.bf16.gmra.mxu0 %v472
        %v892 = vpop.f32.mrf.mxu0
        %v893 = vadd.f32 0.0, %v892
        %v894 = vpop.f32.mrf.mxu0
        %v895 = vadd.f32 0.0, %v894
        %v896 = vpop.f32.mrf.mxu0
        %v897 = vpop.f32.mrf.mxu0
        %898 = vdwg.mxu0
        %899 = vmatprep.subr.bf16.mxu0 %v761
        %900 = vmatpush1.bf16.msra.mxu0 %v760
        %901 = vmatprep.subr.bf16.mxu0 %v757
        %902 = vmatpush1.bf16.msra.mxu0 %v756
        %903 = vmatprep.subr.bf16.mxu0 %v753
        %904 = vmatpush1.bf16.msra.mxu0 %v752
        %905 = vmatprep.subr.bf16.mxu0 %v749
        %906 = vmatpush1.bf16.msra.mxu0 %v748
        %907 = vmatprep.subr.bf16.mxu0 %v745
        %908 = vmatpush1.bf16.msra.mxu0 %v744
        %909 = vmatprep.subr.bf16.mxu0 %v741
        %910 = vmatpush1.bf16.msra.mxu0 %v740
        %911 = vmatprep.subr.bf16.mxu0 %v737
        %912 = vmatpush1.bf16.msra.mxu0 %v736
        %913 = vmatprep.subr.bf16.mxu0 %v733
        %914 = vmatpush1.bf16.msra.mxu0 %v732
        %915 = vmatprep.subr.bf16.mxu0 %v793
        %916 = vmatpush2.bf16.msra.mxu0 %v792
        %917 = vmatprep.subr.bf16.mxu0 %v789
        %918 = vmatpush2.bf16.msra.mxu0 %v788
        %919 = vmatprep.subr.bf16.mxu0 %v785
        %920 = vmatpush2.bf16.msra.mxu0 %v784
        %921 = vmatprep.subr.bf16.mxu0 %v781
        %922 = vmatpush2.bf16.msra.mxu0 %v780
        %923 = vmatprep.subr.bf16.mxu0 %v777
        %924 = vmatpush2.bf16.msra.mxu0 %v776
        %925 = vmatprep.subr.bf16.mxu0 %v773
        %926 = vmatpush2.bf16.msra.mxu0 %v772
        %927 = vmatprep.subr.bf16.mxu0 %v769
        %928 = vmatpush2.bf16.msra.mxu0 %v768
        %929 = vmatprep.subr.bf16.mxu0 %v765
        %930 = vmatpush2.bf16.msra.mxu0 %v764
        %931 = vmatprep.mubr.bf16.mxu0 %v473
        %932 = vmatmul.mubr.bf16.gmra.mxu0 %v472
        %v933 = vpop.f32.mrf.mxu0
        %v934 = vadd.f32 0.0, %v933
        %v935 = vpop.f32.mrf.mxu0
        %v936 = vadd.f32 0.0, %v935
        %v937 = vpop.f32.mrf.mxu0
        %v938 = vpop.f32.mrf.mxu0
        %939 = vdwg.mxu0
        %v940 = vpack.c.bf16 %v893, %v893
        %v941 = vpack.c.bf16 %v895, %v895
        %v942 = vpack.c.bf16 %v934, %v934
        %v943 = vpack.c.bf16 %v936, %v936
        %v944 = vld [vmem:[%s4] sm:$0xf]
        %v946 = vlaneseq
        %v947 = vshrl.u32 %v946, 7
        %v948 = vsub.s32 0, %v947
        %v949 = vrot.slane %v944, %v948
        %v950 = vlaneseq
        %v951 = vshrl.u32 %v950, 7
        %v952 = vsub.s32 1, %v951
        %v953 = vrot.slane %v944, %v952
        %v954 = vlaneseq
        %v955 = vshrl.u32 %v954, 7
        %v956 = vsub.s32 2, %v955
        %v957 = vrot.slane %v944, %v956
        %v958 = vlaneseq
        %v959 = vshrl.u32 %v958, 7
        %v960 = vsub.s32 3, %v959
        %v961 = vrot.slane %v944, %v960
        %v966 = vpack.c.bf16 %v949, %v949
        %v967 = vpack.c.bf16 %v953, %v953
        %v968 = vpack.c.bf16 %v957, %v957
        %v969 = vpack.c.bf16 %v961, %v961
        %v971 = vpack.i.b16 %v966, %v966
        %v973 = vlaneseq
        %v974 = vshrl.u32 %v973, 7
        %v975 = vsub.s32 0, %v974
        %v976 = vrot.slane %v971, %v975
        %v978 = vpack.i.b16 %v967, %v967
        %v980 = vlaneseq
        %v981 = vshrl.u32 %v980, 7
        %v982 = vsub.s32 0, %v981
        %v983 = vrot.slane %v978, %v982
        %v985 = vpack.i.b16 %v968, %v968
        %v987 = vlaneseq
        %v988 = vshrl.u32 %v987, 7
        %v989 = vsub.s32 0, %v988
        %v990 = vrot.slane %v985, %v989
        %v992 = vpack.i.b16 %v969, %v969
        %v994 = vlaneseq
        %v995 = vshrl.u32 %v994, 7
        %v996 = vsub.s32 0, %v995
        %v997 = vrot.slane %v992, %v996
        %v998 = vadd.bf16 %v940, %v976
        %v999 = vadd.bf16 %v941, %v983
        %v1000 = vadd.bf16 %v942, %v990
        %v1001 = vadd.bf16 %v943, %v997
        %v1002 = vmul.bf16 %v998, %v998
        %v1003 = vmul.bf16 %v999, %v999
        %v1004 = vmul.bf16 %v1000, %v1000
        %v1005 = vmul.bf16 %v1001, %v1001
        %v1006 = vmul.bf16 %v1002, %v998
        %v1007 = vmul.bf16 %v1003, %v999
        %v1008 = vmul.bf16 %v1004, %v1000
        %v1009 = vmul.bf16 %v1005, %v1001
        %v1010 = vmul.bf16 %v1006, 1027030327
        %v1011 = vmul.bf16 %v1007, 1027030327
        %v1012 = vmul.bf16 %v1008, 1027030327
        %v1013 = vmul.bf16 %v1009, 1027030327
        %v1014 = vadd.bf16 %v998, %v1010
        %v1015 = vadd.bf16 %v999, %v1011
        %v1016 = vadd.bf16 %v1000, %v1012
        %v1017 = vadd.bf16 %v1001, %v1013
        %v1018 = vmul.bf16 %v1014, 1061961548
        %v1019 = vmul.bf16 %v1015, 1061961548
        %v1020 = vmul.bf16 %v1016, 1061961548
        %v1021 = vmul.bf16 %v1017, 1061961548
        %v1022 = vmul.bf16 %v998, 1056980736
        %v1023 = vmul.bf16 %v999, 1056980736
        %v1024 = vmul.bf16 %v1000, 1056980736
        %v1025 = vmul.bf16 %v1001, 1056980736
        %v1026 = vtanh.bf16.pop %v1018
        %v1027 = vtanh.bf16.pop %v1019
        %v1028 = vtanh.bf16.pop %v1020
        %v1029 = vtanh.bf16.pop %v1021
        %v1030 = vadd.bf16 %v1026, 1065369472
        %v1031 = vadd.bf16 %v1027, 1065369472
        %v1032 = vadd.bf16 %v1028, 1065369472
        %v1033 = vadd.bf16 %v1029, 1065369472
        %v1034 = vmul.bf16 %v1022, %v1030
        %v1035 = vmul.bf16 %v1023, %v1031
        %v1036 = vmul.bf16 %v1024, %v1032
        %v1037 = vmul.bf16 %v1025, %v1033
        %v1038 = vld [vmem:[#allocation10] sm:$0xff]
        %v1039 = vld [vmem:[#allocation10 + $0x8] sm:$0xff]
        %v1040 = vld [vmem:[#allocation10 + $0x10] sm:$0xff]
        %v1041 = vld [vmem:[#allocation10 + $0x18] sm:$0xff]
        %v1042 = vld [vmem:[#allocation10 + $0x20] sm:$0xff]
        %v1043 = vld [vmem:[#allocation10 + $0x28] sm:$0xff]
        %v1044 = vld [vmem:[#allocation10 + $0x30] sm:$0xff]
        %v1045 = vld [vmem:[#allocation10 + $0x38] sm:$0xff]
        %v1046 = vld [vmem:[#allocation10 + $0x40] sm:$0xff]
        %v1047 = vld [vmem:[#allocation10 + $0x48] sm:$0xff]
        %v1048 = vld [vmem:[#allocation10 + $0x50] sm:$0xff]
        %v1049 = vld [vmem:[#allocation10 + $0x58] sm:$0xff]
        %v1050 = vld [vmem:[#allocation10 + $0x60] sm:$0xff]
        %v1051 = vld [vmem:[#allocation10 + $0x68] sm:$0xff]
        %v1052 = vld [vmem:[#allocation10 + $0x70] sm:$0xff]
        %v1053 = vld [vmem:[#allocation10 + $0x78] sm:$0xff]
        %v1054 = vld [vmem:[#allocation10 + $0x80] sm:$0xff]
        %v1055 = vld [vmem:[#allocation10 + $0x88] sm:$0xff]
        %v1056 = vld [vmem:[#allocation10 + $0x90] sm:$0xff]
        %v1057 = vld [vmem:[#allocation10 + $0x98] sm:$0xff]
        %v1058 = vld [vmem:[#allocation10 + $0xa0] sm:$0xff]
        %v1059 = vld [vmem:[#allocation10 + $0xa8] sm:$0xff]
        %v1060 = vld [vmem:[#allocation10 + $0xb0] sm:$0xff]
        %v1061 = vld [vmem:[#allocation10 + $0xb8] sm:$0xff]
        %v1062 = vld [vmem:[#allocation10 + $0xc0] sm:$0xff]
        %v1063 = vld [vmem:[#allocation10 + $0xc8] sm:$0xff]
        %v1064 = vld [vmem:[#allocation10 + $0xd0] sm:$0xff]
        %v1065 = vld [vmem:[#allocation10 + $0xd8] sm:$0xff]
        %v1066 = vld [vmem:[#allocation10 + $0xe0] sm:$0xff]
        %v1067 = vld [vmem:[#allocation10 + $0xe8] sm:$0xff]
        %v1068 = vld [vmem:[#allocation10 + $0xf0] sm:$0xff]
        %v1069 = vld [vmem:[#allocation10 + $0xf8] sm:$0xff]
        %v1070 = vld [vmem:[#allocation10 + $0x100] sm:$0xff]
        %v1071 = vld [vmem:[#allocation10 + $0x108] sm:$0xff]
        %v1072 = vld [vmem:[#allocation10 + $0x110] sm:$0xff]
        %v1073 = vld [vmem:[#allocation10 + $0x118] sm:$0xff]
        %v1074 = vld [vmem:[#allocation10 + $0x120] sm:$0xff]
        %v1075 = vld [vmem:[#allocation10 + $0x128] sm:$0xff]
        %v1076 = vld [vmem:[#allocation10 + $0x130] sm:$0xff]
        %v1077 = vld [vmem:[#allocation10 + $0x138] sm:$0xff]
        %v1078 = vld [vmem:[#allocation10 + $0x140] sm:$0xff]
        %v1079 = vld [vmem:[#allocation10 + $0x148] sm:$0xff]
        %v1080 = vld [vmem:[#allocation10 + $0x150] sm:$0xff]
        %v1081 = vld [vmem:[#allocation10 + $0x158] sm:$0xff]
        %v1082 = vld [vmem:[#allocation10 + $0x160] sm:$0xff]
        %v1083 = vld [vmem:[#allocation10 + $0x168] sm:$0xff]
        %v1084 = vld [vmem:[#allocation10 + $0x170] sm:$0xff]
        %v1085 = vld [vmem:[#allocation10 + $0x178] sm:$0xff]
        %v1086 = vld [vmem:[#allocation10 + $0x180] sm:$0xff]
        %v1087 = vld [vmem:[#allocation10 + $0x188] sm:$0xff]
        %v1088 = vld [vmem:[#allocation10 + $0x190] sm:$0xff]
        %v1089 = vld [vmem:[#allocation10 + $0x198] sm:$0xff]
        %v1090 = vld [vmem:[#allocation10 + $0x1a0] sm:$0xff]
        %v1091 = vld [vmem:[#allocation10 + $0x1a8] sm:$0xff]
        %v1092 = vld [vmem:[#allocation10 + $0x1b0] sm:$0xff]
        %v1093 = vld [vmem:[#allocation10 + $0x1b8] sm:$0xff]
        %v1094 = vld [vmem:[#allocation10 + $0x1c0] sm:$0xff]
        %v1095 = vld [vmem:[#allocation10 + $0x1c8] sm:$0xff]
        %v1096 = vld [vmem:[#allocation10 + $0x1d0] sm:$0xff]
        %v1097 = vld [vmem:[#allocation10 + $0x1d8] sm:$0xff]
        %v1098 = vld [vmem:[#allocation10 + $0x1e0] sm:$0xff]
        %v1099 = vld [vmem:[#allocation10 + $0x1e8] sm:$0xff]
        %v1100 = vld [vmem:[#allocation10 + $0x1f0] sm:$0xff]
        %v1101 = vld [vmem:[#allocation10 + $0x1f8] sm:$0xff]
        %v1102 = vld [vmem:[#allocation10 + $0x200] sm:$0xff]
        %v1103 = vld [vmem:[#allocation10 + $0x208] sm:$0xff]
        %v1104 = vld [vmem:[#allocation10 + $0x210] sm:$0xff]
        %v1105 = vld [vmem:[#allocation10 + $0x218] sm:$0xff]
        %v1106 = vld [vmem:[#allocation10 + $0x220] sm:$0xff]
        %v1107 = vld [vmem:[#allocation10 + $0x228] sm:$0xff]
        %v1108 = vld [vmem:[#allocation10 + $0x230] sm:$0xff]
        %v1109 = vld [vmem:[#allocation10 + $0x238] sm:$0xff]
        %v1110 = vld [vmem:[#allocation10 + $0x240] sm:$0xff]
        %v1111 = vld [vmem:[#allocation10 + $0x248] sm:$0xff]
        %v1112 = vld [vmem:[#allocation10 + $0x250] sm:$0xff]
        %v1113 = vld [vmem:[#allocation10 + $0x258] sm:$0xff]
        %v1114 = vld [vmem:[#allocation10 + $0x260] sm:$0xff]
        %v1115 = vld [vmem:[#allocation10 + $0x268] sm:$0xff]
        %v1116 = vld [vmem:[#allocation10 + $0x270] sm:$0xff]
        %v1117 = vld [vmem:[#allocation10 + $0x278] sm:$0xff]
        %v1118 = vld [vmem:[#allocation10 + $0x280] sm:$0xff]
        %v1119 = vld [vmem:[#allocation10 + $0x288] sm:$0xff]
        %v1120 = vld [vmem:[#allocation10 + $0x290] sm:$0xff]
        %v1121 = vld [vmem:[#allocation10 + $0x298] sm:$0xff]
        %v1122 = vld [vmem:[#allocation10 + $0x2a0] sm:$0xff]
        %v1123 = vld [vmem:[#allocation10 + $0x2a8] sm:$0xff]
        %v1124 = vld [vmem:[#allocation10 + $0x2b0] sm:$0xff]
        %v1125 = vld [vmem:[#allocation10 + $0x2b8] sm:$0xff]
        %v1126 = vld [vmem:[#allocation10 + $0x2c0] sm:$0xff]
        %v1127 = vld [vmem:[#allocation10 + $0x2c8] sm:$0xff]
        %v1128 = vld [vmem:[#allocation10 + $0x2d0] sm:$0xff]
        %v1129 = vld [vmem:[#allocation10 + $0x2d8] sm:$0xff]
        %v1130 = vld [vmem:[#allocation10 + $0x2e0] sm:$0xff]
        %v1131 = vld [vmem:[#allocation10 + $0x2e8] sm:$0xff]
        %v1132 = vld [vmem:[#allocation10 + $0x2f0] sm:$0xff]
        %v1133 = vld [vmem:[#allocation10 + $0x2f8] sm:$0xff]
        %v1134 = vld [vmem:[#allocation10 + $0x300] sm:$0xff]
        %v1135 = vld [vmem:[#allocation10 + $0x308] sm:$0xff]
        %v1136 = vld [vmem:[#allocation10 + $0x310] sm:$0xff]
        %v1137 = vld [vmem:[#allocation10 + $0x318] sm:$0xff]
        %v1138 = vld [vmem:[#allocation10 + $0x320] sm:$0xff]
        %v1139 = vld [vmem:[#allocation10 + $0x328] sm:$0xff]
        %v1140 = vld [vmem:[#allocation10 + $0x330] sm:$0xff]
        %v1141 = vld [vmem:[#allocation10 + $0x338] sm:$0xff]
        %v1142 = vld [vmem:[#allocation10 + $0x340] sm:$0xff]
        %v1143 = vld [vmem:[#allocation10 + $0x348] sm:$0xff]
        %v1144 = vld [vmem:[#allocation10 + $0x350] sm:$0xff]
        %v1145 = vld [vmem:[#allocation10 + $0x358] sm:$0xff]
        %v1146 = vld [vmem:[#allocation10 + $0x360] sm:$0xff]
        %v1147 = vld [vmem:[#allocation10 + $0x368] sm:$0xff]
        %v1148 = vld [vmem:[#allocation10 + $0x370] sm:$0xff]
        %v1149 = vld [vmem:[#allocation10 + $0x378] sm:$0xff]
        %v1150 = vld [vmem:[#allocation10 + $0x380] sm:$0xff]
        %v1151 = vld [vmem:[#allocation10 + $0x388] sm:$0xff]
        %v1152 = vld [vmem:[#allocation10 + $0x390] sm:$0xff]
        %v1153 = vld [vmem:[#allocation10 + $0x398] sm:$0xff]
        %v1154 = vld [vmem:[#allocation10 + $0x3a0] sm:$0xff]
        %v1155 = vld [vmem:[#allocation10 + $0x3a8] sm:$0xff]
        %v1156 = vld [vmem:[#allocation10 + $0x3b0] sm:$0xff]
        %v1157 = vld [vmem:[#allocation10 + $0x3b8] sm:$0xff]
        %v1158 = vld [vmem:[#allocation10 + $0x3c0] sm:$0xff]
        %v1159 = vld [vmem:[#allocation10 + $0x3c8] sm:$0xff]
        %v1160 = vld [vmem:[#allocation10 + $0x3d0] sm:$0xff]
        %v1161 = vld [vmem:[#allocation10 + $0x3d8] sm:$0xff]
        %v1162 = vld [vmem:[#allocation10 + $0x3e0] sm:$0xff]
        %v1163 = vld [vmem:[#allocation10 + $0x3e8] sm:$0xff]
        %v1164 = vld [vmem:[#allocation10 + $0x3f0] sm:$0xff]
        %v1165 = vld [vmem:[#allocation10 + $0x3f8] sm:$0xff]
        %v1294 = vunpack.c.l.b16 %v1038
        %v1295 = vunpack.c.h.b16 %v1038
        %v1296 = vunpack.c.l.b16 %v1039
        %v1297 = vunpack.c.h.b16 %v1039
        %v1298 = vunpack.c.l.b16 %v1040
        %v1299 = vunpack.c.h.b16 %v1040
        %v1300 = vunpack.c.l.b16 %v1041
        %v1301 = vunpack.c.h.b16 %v1041
        %v1302 = vunpack.c.l.b16 %v1042
        %v1303 = vunpack.c.h.b16 %v1042
        %v1304 = vunpack.c.l.b16 %v1043
        %v1305 = vunpack.c.h.b16 %v1043
        %v1306 = vunpack.c.l.b16 %v1044
        %v1307 = vunpack.c.h.b16 %v1044
        %v1308 = vunpack.c.l.b16 %v1045
        %v1309 = vunpack.c.h.b16 %v1045
        %v1310 = vunpack.c.l.b16 %v1046
        %v1311 = vunpack.c.h.b16 %v1046
        %v1312 = vunpack.c.l.b16 %v1047
        %v1313 = vunpack.c.h.b16 %v1047
        %v1314 = vunpack.c.l.b16 %v1048
        %v1315 = vunpack.c.h.b16 %v1048
        %v1316 = vunpack.c.l.b16 %v1049
        %v1317 = vunpack.c.h.b16 %v1049
        %v1318 = vunpack.c.l.b16 %v1050
        %v1319 = vunpack.c.h.b16 %v1050
        %v1320 = vunpack.c.l.b16 %v1051
        %v1321 = vunpack.c.h.b16 %v1051
        %v1322 = vunpack.c.l.b16 %v1052
        %v1323 = vunpack.c.h.b16 %v1052
        %v1324 = vunpack.c.l.b16 %v1053
        %v1325 = vunpack.c.h.b16 %v1053
        %v1326 = vunpack.c.l.b16 %v1054
        %v1327 = vunpack.c.h.b16 %v1054
        %v1328 = vunpack.c.l.b16 %v1055
        %v1329 = vunpack.c.h.b16 %v1055
        %v1330 = vunpack.c.l.b16 %v1056
        %v1331 = vunpack.c.h.b16 %v1056
        %v1332 = vunpack.c.l.b16 %v1057
        %v1333 = vunpack.c.h.b16 %v1057
        %v1334 = vunpack.c.l.b16 %v1058
        %v1335 = vunpack.c.h.b16 %v1058
        %v1336 = vunpack.c.l.b16 %v1059
        %v1337 = vunpack.c.h.b16 %v1059
        %v1338 = vunpack.c.l.b16 %v1060
        %v1339 = vunpack.c.h.b16 %v1060
        %v1340 = vunpack.c.l.b16 %v1061
        %v1341 = vunpack.c.h.b16 %v1061
        %v1342 = vunpack.c.l.b16 %v1062
        %v1343 = vunpack.c.h.b16 %v1062
        %v1344 = vunpack.c.l.b16 %v1063
        %v1345 = vunpack.c.h.b16 %v1063
        %v1346 = vunpack.c.l.b16 %v1064
        %v1347 = vunpack.c.h.b16 %v1064
        %v1348 = vunpack.c.l.b16 %v1065
        %v1349 = vunpack.c.h.b16 %v1065
        %v1350 = vunpack.c.l.b16 %v1066
        %v1351 = vunpack.c.h.b16 %v1066
        %v1352 = vunpack.c.l.b16 %v1067
        %v1353 = vunpack.c.h.b16 %v1067
        %v1354 = vunpack.c.l.b16 %v1068
        %v1355 = vunpack.c.h.b16 %v1068
        %v1356 = vunpack.c.l.b16 %v1069
        %v1357 = vunpack.c.h.b16 %v1069
        %v1358 = vunpack.c.l.b16 %v1070
        %v1359 = vunpack.c.h.b16 %v1070
        %v1360 = vunpack.c.l.b16 %v1071
        %v1361 = vunpack.c.h.b16 %v1071
        %v1362 = vunpack.c.l.b16 %v1072
        %v1363 = vunpack.c.h.b16 %v1072
        %v1364 = vunpack.c.l.b16 %v1073
        %v1365 = vunpack.c.h.b16 %v1073
        %v1366 = vunpack.c.l.b16 %v1074
        %v1367 = vunpack.c.h.b16 %v1074
        %v1368 = vunpack.c.l.b16 %v1075
        %v1369 = vunpack.c.h.b16 %v1075
        %v1370 = vunpack.c.l.b16 %v1076
        %v1371 = vunpack.c.h.b16 %v1076
        %v1372 = vunpack.c.l.b16 %v1077
        %v1373 = vunpack.c.h.b16 %v1077
        %v1374 = vunpack.c.l.b16 %v1078
        %v1375 = vunpack.c.h.b16 %v1078
        %v1376 = vunpack.c.l.b16 %v1079
        %v1377 = vunpack.c.h.b16 %v1079
        %v1378 = vunpack.c.l.b16 %v1080
        %v1379 = vunpack.c.h.b16 %v1080
        %v1380 = vunpack.c.l.b16 %v1081
        %v1381 = vunpack.c.h.b16 %v1081
        %v1382 = vunpack.c.l.b16 %v1082
        %v1383 = vunpack.c.h.b16 %v1082
        %v1384 = vunpack.c.l.b16 %v1083
        %v1385 = vunpack.c.h.b16 %v1083
        %v1386 = vunpack.c.l.b16 %v1084
        %v1387 = vunpack.c.h.b16 %v1084
        %v1388 = vunpack.c.l.b16 %v1085
        %v1389 = vunpack.c.h.b16 %v1085
        %v1390 = vunpack.c.l.b16 %v1086
        %v1391 = vunpack.c.h.b16 %v1086
        %v1392 = vunpack.c.l.b16 %v1087
        %v1393 = vunpack.c.h.b16 %v1087
        %v1394 = vunpack.c.l.b16 %v1088
        %v1395 = vunpack.c.h.b16 %v1088
        %v1396 = vunpack.c.l.b16 %v1089
        %v1397 = vunpack.c.h.b16 %v1089
        %v1398 = vunpack.c.l.b16 %v1090
        %v1399 = vunpack.c.h.b16 %v1090
        %v1400 = vunpack.c.l.b16 %v1091
        %v1401 = vunpack.c.h.b16 %v1091
        %v1402 = vunpack.c.l.b16 %v1092
        %v1403 = vunpack.c.h.b16 %v1092
        %v1404 = vunpack.c.l.b16 %v1093
        %v1405 = vunpack.c.h.b16 %v1093
        %v1406 = vunpack.c.l.b16 %v1094
        %v1407 = vunpack.c.h.b16 %v1094
        %v1408 = vunpack.c.l.b16 %v1095
        %v1409 = vunpack.c.h.b16 %v1095
        %v1410 = vunpack.c.l.b16 %v1096
        %v1411 = vunpack.c.h.b16 %v1096
        %v1412 = vunpack.c.l.b16 %v1097
        %v1413 = vunpack.c.h.b16 %v1097
        %v1414 = vunpack.c.l.b16 %v1098
        %v1415 = vunpack.c.h.b16 %v1098
        %v1416 = vunpack.c.l.b16 %v1099
        %v1417 = vunpack.c.h.b16 %v1099
        %v1418 = vunpack.c.l.b16 %v1100
        %v1419 = vunpack.c.h.b16 %v1100
        %v1420 = vunpack.c.l.b16 %v1101
        %v1421 = vunpack.c.h.b16 %v1101
        %v1422 = vunpack.c.l.b16 %v1102
        %v1423 = vunpack.c.h.b16 %v1102
        %v1424 = vunpack.c.l.b16 %v1103
        %v1425 = vunpack.c.h.b16 %v1103
        %v1426 = vunpack.c.l.b16 %v1104
        %v1427 = vunpack.c.h.b16 %v1104
        %v1428 = vunpack.c.l.b16 %v1105
        %v1429 = vunpack.c.h.b16 %v1105
        %v1430 = vunpack.c.l.b16 %v1106
        %v1431 = vunpack.c.h.b16 %v1106
        %v1432 = vunpack.c.l.b16 %v1107
        %v1433 = vunpack.c.h.b16 %v1107
        %v1434 = vunpack.c.l.b16 %v1108
        %v1435 = vunpack.c.h.b16 %v1108
        %v1436 = vunpack.c.l.b16 %v1109
        %v1437 = vunpack.c.h.b16 %v1109
        %v1438 = vunpack.c.l.b16 %v1110
        %v1439 = vunpack.c.h.b16 %v1110
        %v1440 = vunpack.c.l.b16 %v1111
        %v1441 = vunpack.c.h.b16 %v1111
        %v1442 = vunpack.c.l.b16 %v1112
        %v1443 = vunpack.c.h.b16 %v1112
        %v1444 = vunpack.c.l.b16 %v1113
        %v1445 = vunpack.c.h.b16 %v1113
        %v1446 = vunpack.c.l.b16 %v1114
        %v1447 = vunpack.c.h.b16 %v1114
        %v1448 = vunpack.c.l.b16 %v1115
        %v1449 = vunpack.c.h.b16 %v1115
        %v1450 = vunpack.c.l.b16 %v1116
        %v1451 = vunpack.c.h.b16 %v1116
        %v1452 = vunpack.c.l.b16 %v1117
        %v1453 = vunpack.c.h.b16 %v1117
        %v1454 = vunpack.c.l.b16 %v1118
        %v1455 = vunpack.c.h.b16 %v1118
        %v1456 = vunpack.c.l.b16 %v1119
        %v1457 = vunpack.c.h.b16 %v1119
        %v1458 = vunpack.c.l.b16 %v1120
        %v1459 = vunpack.c.h.b16 %v1120
        %v1460 = vunpack.c.l.b16 %v1121
        %v1461 = vunpack.c.h.b16 %v1121
        %v1462 = vunpack.c.l.b16 %v1122
        %v1463 = vunpack.c.h.b16 %v1122
        %v1464 = vunpack.c.l.b16 %v1123
        %v1465 = vunpack.c.h.b16 %v1123
        %v1466 = vunpack.c.l.b16 %v1124
        %v1467 = vunpack.c.h.b16 %v1124
        %v1468 = vunpack.c.l.b16 %v1125
        %v1469 = vunpack.c.h.b16 %v1125
        %v1470 = vunpack.c.l.b16 %v1126
        %v1471 = vunpack.c.h.b16 %v1126
        %v1472 = vunpack.c.l.b16 %v1127
        %v1473 = vunpack.c.h.b16 %v1127
        %v1474 = vunpack.c.l.b16 %v1128
        %v1475 = vunpack.c.h.b16 %v1128
        %v1476 = vunpack.c.l.b16 %v1129
        %v1477 = vunpack.c.h.b16 %v1129
        %v1478 = vunpack.c.l.b16 %v1130
        %v1479 = vunpack.c.h.b16 %v1130
        %v1480 = vunpack.c.l.b16 %v1131
        %v1481 = vunpack.c.h.b16 %v1131
        %v1482 = vunpack.c.l.b16 %v1132
        %v1483 = vunpack.c.h.b16 %v1132
        %v1484 = vunpack.c.l.b16 %v1133
        %v1485 = vunpack.c.h.b16 %v1133
        %v1486 = vunpack.c.l.b16 %v1134
        %v1487 = vunpack.c.h.b16 %v1134
        %v1488 = vunpack.c.l.b16 %v1135
        %v1489 = vunpack.c.h.b16 %v1135
        %v1490 = vunpack.c.l.b16 %v1136
        %v1491 = vunpack.c.h.b16 %v1136
        %v1492 = vunpack.c.l.b16 %v1137
        %v1493 = vunpack.c.h.b16 %v1137
        %v1494 = vunpack.c.l.b16 %v1138
        %v1495 = vunpack.c.h.b16 %v1138
        %v1496 = vunpack.c.l.b16 %v1139
        %v1497 = vunpack.c.h.b16 %v1139
        %v1498 = vunpack.c.l.b16 %v1140
        %v1499 = vunpack.c.h.b16 %v1140
        %v1500 = vunpack.c.l.b16 %v1141
        %v1501 = vunpack.c.h.b16 %v1141
        %v1502 = vunpack.c.l.b16 %v1142
        %v1503 = vunpack.c.h.b16 %v1142
        %v1504 = vunpack.c.l.b16 %v1143
        %v1505 = vunpack.c.h.b16 %v1143
        %v1506 = vunpack.c.l.b16 %v1144
        %v1507 = vunpack.c.h.b16 %v1144
        %v1508 = vunpack.c.l.b16 %v1145
        %v1509 = vunpack.c.h.b16 %v1145
        %v1510 = vunpack.c.l.b16 %v1146
        %v1511 = vunpack.c.h.b16 %v1146
        %v1512 = vunpack.c.l.b16 %v1147
        %v1513 = vunpack.c.h.b16 %v1147
        %v1514 = vunpack.c.l.b16 %v1148
        %v1515 = vunpack.c.h.b16 %v1148
        %v1516 = vunpack.c.l.b16 %v1149
        %v1517 = vunpack.c.h.b16 %v1149
        %v1518 = vunpack.c.l.b16 %v1150
        %v1519 = vunpack.c.h.b16 %v1150
        %v1520 = vunpack.c.l.b16 %v1151
        %v1521 = vunpack.c.h.b16 %v1151
        %v1522 = vunpack.c.l.b16 %v1152
        %v1523 = vunpack.c.h.b16 %v1152
        %v1524 = vunpack.c.l.b16 %v1153
        %v1525 = vunpack.c.h.b16 %v1153
        %v1526 = vunpack.c.l.b16 %v1154
        %v1527 = vunpack.c.h.b16 %v1154
        %v1528 = vunpack.c.l.b16 %v1155
        %v1529 = vunpack.c.h.b16 %v1155
        %v1530 = vunpack.c.l.b16 %v1156
        %v1531 = vunpack.c.h.b16 %v1156
        %v1532 = vunpack.c.l.b16 %v1157
        %v1533 = vunpack.c.h.b16 %v1157
        %v1534 = vunpack.c.l.b16 %v1158
        %v1535 = vunpack.c.h.b16 %v1158
        %v1536 = vunpack.c.l.b16 %v1159
        %v1537 = vunpack.c.h.b16 %v1159
        %v1538 = vunpack.c.l.b16 %v1160
        %v1539 = vunpack.c.h.b16 %v1160
        %v1540 = vunpack.c.l.b16 %v1161
        %v1541 = vunpack.c.h.b16 %v1161
        %v1542 = vunpack.c.l.b16 %v1162
        %v1543 = vunpack.c.h.b16 %v1162
        %v1544 = vunpack.c.l.b16 %v1163
        %v1545 = vunpack.c.h.b16 %v1163
        %v1546 = vunpack.c.l.b16 %v1164
        %v1547 = vunpack.c.h.b16 %v1164
        %v1548 = vunpack.c.l.b16 %v1165
        %v1549 = vunpack.c.h.b16 %v1165
        %v1550 = vpack.c.b16 %v1298, %v1294
        %v1551 = vpack.c.b16 %v1299, %v1295
        %v1552 = vpack.c.b16 %v1300, %v1296
        %v1553 = vpack.c.b16 %v1301, %v1297
        %v1554 = vpack.c.b16 %v1306, %v1302
        %v1555 = vpack.c.b16 %v1307, %v1303
        %v1556 = vpack.c.b16 %v1308, %v1304
        %v1557 = vpack.c.b16 %v1309, %v1305
        %v1558 = vpack.c.b16 %v1314, %v1310
        %v1559 = vpack.c.b16 %v1315, %v1311
        %v1560 = vpack.c.b16 %v1316, %v1312
        %v1561 = vpack.c.b16 %v1317, %v1313
        %v1562 = vpack.c.b16 %v1322, %v1318
        %v1563 = vpack.c.b16 %v1323, %v1319
        %v1564 = vpack.c.b16 %v1324, %v1320
        %v1565 = vpack.c.b16 %v1325, %v1321
        %v1566 = vpack.c.b16 %v1330, %v1326
        %v1567 = vpack.c.b16 %v1331, %v1327
        %v1568 = vpack.c.b16 %v1332, %v1328
        %v1569 = vpack.c.b16 %v1333, %v1329
        %v1570 = vpack.c.b16 %v1338, %v1334
        %v1571 = vpack.c.b16 %v1339, %v1335
        %v1572 = vpack.c.b16 %v1340, %v1336
        %v1573 = vpack.c.b16 %v1341, %v1337
        %v1574 = vpack.c.b16 %v1346, %v1342
        %v1575 = vpack.c.b16 %v1347, %v1343
        %v1576 = vpack.c.b16 %v1348, %v1344
        %v1577 = vpack.c.b16 %v1349, %v1345
        %v1578 = vpack.c.b16 %v1354, %v1350
        %v1579 = vpack.c.b16 %v1355, %v1351
        %v1580 = vpack.c.b16 %v1356, %v1352
        %v1581 = vpack.c.b16 %v1357, %v1353
        %v1582 = vpack.c.b16 %v1362, %v1358
        %v1583 = vpack.c.b16 %v1363, %v1359
        %v1584 = vpack.c.b16 %v1364, %v1360
        %v1585 = vpack.c.b16 %v1365, %v1361
        %v1586 = vpack.c.b16 %v1370, %v1366
        %v1587 = vpack.c.b16 %v1371, %v1367
        %v1588 = vpack.c.b16 %v1372, %v1368
        %v1589 = vpack.c.b16 %v1373, %v1369
        %v1590 = vpack.c.b16 %v1378, %v1374
        %v1591 = vpack.c.b16 %v1379, %v1375
        %v1592 = vpack.c.b16 %v1380, %v1376
        %v1593 = vpack.c.b16 %v1381, %v1377
        %v1594 = vpack.c.b16 %v1386, %v1382
        %v1595 = vpack.c.b16 %v1387, %v1383
        %v1596 = vpack.c.b16 %v1388, %v1384
        %v1597 = vpack.c.b16 %v1389, %v1385
        %v1598 = vpack.c.b16 %v1394, %v1390
        %v1599 = vpack.c.b16 %v1395, %v1391
        %v1600 = vpack.c.b16 %v1396, %v1392
        %v1601 = vpack.c.b16 %v1397, %v1393
        %v1602 = vpack.c.b16 %v1402, %v1398
        %v1603 = vpack.c.b16 %v1403, %v1399
        %v1604 = vpack.c.b16 %v1404, %v1400
        %v1605 = vpack.c.b16 %v1405, %v1401
        %v1606 = vpack.c.b16 %v1410, %v1406
        %v1607 = vpack.c.b16 %v1411, %v1407
        %v1608 = vpack.c.b16 %v1412, %v1408
        %v1609 = vpack.c.b16 %v1413, %v1409
        %v1610 = vpack.c.b16 %v1418, %v1414
        %v1611 = vpack.c.b16 %v1419, %v1415
        %v1612 = vpack.c.b16 %v1420, %v1416
        %v1613 = vpack.c.b16 %v1421, %v1417
        %v1614 = vpack.c.b16 %v1426, %v1422
        %v1615 = vpack.c.b16 %v1427, %v1423
        %v1616 = vpack.c.b16 %v1428, %v1424
        %v1617 = vpack.c.b16 %v1429, %v1425
        %v1618 = vpack.c.b16 %v1434, %v1430
        %v1619 = vpack.c.b16 %v1435, %v1431
        %v1620 = vpack.c.b16 %v1436, %v1432
        %v1621 = vpack.c.b16 %v1437, %v1433
        %v1622 = vpack.c.b16 %v1442, %v1438
        %v1623 = vpack.c.b16 %v1443, %v1439
        %v1624 = vpack.c.b16 %v1444, %v1440
        %v1625 = vpack.c.b16 %v1445, %v1441
        %v1626 = vpack.c.b16 %v1450, %v1446
        %v1627 = vpack.c.b16 %v1451, %v1447
        %v1628 = vpack.c.b16 %v1452, %v1448
        %v1629 = vpack.c.b16 %v1453, %v1449
        %v1630 = vpack.c.b16 %v1458, %v1454
        %v1631 = vpack.c.b16 %v1459, %v1455
        %v1632 = vpack.c.b16 %v1460, %v1456
        %v1633 = vpack.c.b16 %v1461, %v1457
        %v1634 = vpack.c.b16 %v1466, %v1462
        %v1635 = vpack.c.b16 %v1467, %v1463
        %v1636 = vpack.c.b16 %v1468, %v1464
        %v1637 = vpack.c.b16 %v1469, %v1465
        %v1638 = vpack.c.b16 %v1474, %v1470
        %v1639 = vpack.c.b16 %v1475, %v1471
        %v1640 = vpack.c.b16 %v1476, %v1472
        %v1641 = vpack.c.b16 %v1477, %v1473
        %v1642 = vpack.c.b16 %v1482, %v1478
        %v1643 = vpack.c.b16 %v1483, %v1479
        %v1644 = vpack.c.b16 %v1484, %v1480
        %v1645 = vpack.c.b16 %v1485, %v1481
        %v1646 = vpack.c.b16 %v1490, %v1486
        %v1647 = vpack.c.b16 %v1491, %v1487
        %v1648 = vpack.c.b16 %v1492, %v1488
        %v1649 = vpack.c.b16 %v1493, %v1489
        %v1650 = vpack.c.b16 %v1498, %v1494
        %v1651 = vpack.c.b16 %v1499, %v1495
        %v1652 = vpack.c.b16 %v1500, %v1496
        %v1653 = vpack.c.b16 %v1501, %v1497
        %v1654 = vpack.c.b16 %v1506, %v1502
        %v1655 = vpack.c.b16 %v1507, %v1503
        %v1656 = vpack.c.b16 %v1508, %v1504
        %v1657 = vpack.c.b16 %v1509, %v1505
        %v1658 = vpack.c.b16 %v1514, %v1510
        %v1659 = vpack.c.b16 %v1515, %v1511
        %v1660 = vpack.c.b16 %v1516, %v1512
        %v1661 = vpack.c.b16 %v1517, %v1513
        %v1662 = vpack.c.b16 %v1522, %v1518
        %v1663 = vpack.c.b16 %v1523, %v1519
        %v1664 = vpack.c.b16 %v1524, %v1520
        %v1665 = vpack.c.b16 %v1525, %v1521
        %v1666 = vpack.c.b16 %v1530, %v1526
        %v1667 = vpack.c.b16 %v1531, %v1527
        %v1668 = vpack.c.b16 %v1532, %v1528
        %v1669 = vpack.c.b16 %v1533, %v1529
        %v1670 = vpack.c.b16 %v1538, %v1534
        %v1671 = vpack.c.b16 %v1539, %v1535
        %v1672 = vpack.c.b16 %v1540, %v1536
        %v1673 = vpack.c.b16 %v1541, %v1537
        %v1674 = vpack.c.b16 %v1546, %v1542
        %v1675 = vpack.c.b16 %v1547, %v1543
        %v1676 = vpack.c.b16 %v1548, %v1544
        %v1677 = vpack.c.b16 %v1549, %v1545
        %1806 = vmatprep.subr.bf16.mxu0 %v1579
        %1807 = vmatpush1.bf16.msra.mxu0 %v1578
        %1808 = vmatprep.subr.bf16.mxu0 %v1575
        %1809 = vmatpush1.bf16.msra.mxu0 %v1574
        %1810 = vmatprep.subr.bf16.mxu0 %v1571
        %1811 = vmatpush1.bf16.msra.mxu0 %v1570
        %1812 = vmatprep.subr.bf16.mxu0 %v1567
        %1813 = vmatpush1.bf16.msra.mxu0 %v1566
        %1814 = vmatprep.subr.bf16.mxu0 %v1563
        %1815 = vmatpush1.bf16.msra.mxu0 %v1562
        %1816 = vmatprep.subr.bf16.mxu0 %v1559
        %1817 = vmatpush1.bf16.msra.mxu0 %v1558
        %1818 = vmatprep.subr.bf16.mxu0 %v1555
        %1819 = vmatpush1.bf16.msra.mxu0 %v1554
        %1820 = vmatprep.subr.bf16.mxu0 %v1551
        %1821 = vmatpush1.bf16.msra.mxu0 %v1550
        %1822 = vmatprep.subr.bf16.mxu0 %v1611
        %1823 = vmatpush2.bf16.msra.mxu0 %v1610
        %1824 = vmatprep.subr.bf16.mxu0 %v1607
        %1825 = vmatpush2.bf16.msra.mxu0 %v1606
        %1826 = vmatprep.subr.bf16.mxu0 %v1603
        %1827 = vmatpush2.bf16.msra.mxu0 %v1602
        %1828 = vmatprep.subr.bf16.mxu0 %v1599
        %1829 = vmatpush2.bf16.msra.mxu0 %v1598
        %1830 = vmatprep.subr.bf16.mxu0 %v1595
        %1831 = vmatpush2.bf16.msra.mxu0 %v1594
        %1832 = vmatprep.subr.bf16.mxu0 %v1591
        %1833 = vmatpush2.bf16.msra.mxu0 %v1590
        %1834 = vmatprep.subr.bf16.mxu0 %v1587
        %1835 = vmatpush2.bf16.msra.mxu0 %v1586
        %1836 = vmatprep.subr.bf16.mxu0 %v1583
        %1837 = vmatpush2.bf16.msra.mxu0 %v1582
        %1838 = vmatprep.mubr.bf16.mxu0 %v1035
        %1839 = vmatmul.mubr.bf16.gmra.mxu0 %v1034
        %v1840 = vpop.f32.mrf.mxu0
        %v1841 = vadd.f32 0.0, %v1840
        %v1842 = vpop.f32.mrf.mxu0
        %v1843 = vadd.f32 0.0, %v1842
        %v1844 = vpop.f32.mrf.mxu0
        %v1845 = vpop.f32.mrf.mxu0
        %1846 = vdwg.mxu0
        %1847 = vmatprep.subr.bf16.mxu0 %v1643
        %1848 = vmatpush1.bf16.msra.mxu0 %v1642
        %1849 = vmatprep.subr.bf16.mxu0 %v1639
        %1850 = vmatpush1.bf16.msra.mxu0 %v1638
        %1851 = vmatprep.subr.bf16.mxu0 %v1635
        %1852 = vmatpush1.bf16.msra.mxu0 %v1634
        %1853 = vmatprep.subr.bf16.mxu0 %v1631
        %1854 = vmatpush1.bf16.msra.mxu0 %v1630
        %1855 = vmatprep.subr.bf16.mxu0 %v1627
        %1856 = vmatpush1.bf16.msra.mxu0 %v1626
        %1857 = vmatprep.subr.bf16.mxu0 %v1623
        %1858 = vmatpush1.bf16.msra.mxu0 %v1622
        %1859 = vmatprep.subr.bf16.mxu0 %v1619
        %1860 = vmatpush1.bf16.msra.mxu0 %v1618
        %1861 = vmatprep.subr.bf16.mxu0 %v1615
        %1862 = vmatpush1.bf16.msra.mxu0 %v1614
        %1863 = vmatprep.subr.bf16.mxu0 %v1675
        %1864 = vmatpush2.bf16.msra.mxu0 %v1674
        %1865 = vmatprep.subr.bf16.mxu0 %v1671
        %1866 = vmatpush2.bf16.msra.mxu0 %v1670
        %1867 = vmatprep.subr.bf16.mxu0 %v1667
        %1868 = vmatpush2.bf16.msra.mxu0 %v1666
        %1869 = vmatprep.subr.bf16.mxu0 %v1663
        %1870 = vmatpush2.bf16.msra.mxu0 %v1662
        %1871 = vmatprep.subr.bf16.mxu0 %v1659
        %1872 = vmatpush2.bf16.msra.mxu0 %v1658
        %1873 = vmatprep.subr.bf16.mxu0 %v1655
        %1874 = vmatpush2.bf16.msra.mxu0 %v1654
        %1875 = vmatprep.subr.bf16.mxu0 %v1651
        %1876 = vmatpush2.bf16.msra.mxu0 %v1650
        %1877 = vmatprep.subr.bf16.mxu0 %v1647
        %1878 = vmatpush2.bf16.msra.mxu0 %v1646
        %1879 = vmatprep.mubr.bf16.mxu0 %v1037
        %1880 = vmatmul.mubr.bf16.gmra.mxu0 %v1036
        %v1881 = vpop.f32.mrf.mxu0
        %v1882 = vadd.f32 %v1841, %v1881
        %v1883 = vpop.f32.mrf.mxu0
        %v1884 = vadd.f32 %v1843, %v1883
        %v1885 = vpop.f32.mrf.mxu0
        %v1886 = vpop.f32.mrf.mxu0
        %1887 = vdwg.mxu0
        %1888 = vmatprep.subr.bf16.mxu0 %v1581
        %1889 = vmatpush1.bf16.msra.mxu0 %v1580
        %1890 = vmatprep.subr.bf16.mxu0 %v1577
        %1891 = vmatpush1.bf16.msra.mxu0 %v1576
        %1892 = vmatprep.subr.bf16.mxu0 %v1573
        %1893 = vmatpush1.bf16.msra.mxu0 %v1572
        %1894 = vmatprep.subr.bf16.mxu0 %v1569
        %1895 = vmatpush1.bf16.msra.mxu0 %v1568
        %1896 = vmatprep.subr.bf16.mxu0 %v1565
        %1897 = vmatpush1.bf16.msra.mxu0 %v1564
        %1898 = vmatprep.subr.bf16.mxu0 %v1561
        %1899 = vmatpush1.bf16.msra.mxu0 %v1560
        %1900 = vmatprep.subr.bf16.mxu0 %v1557
        %1901 = vmatpush1.bf16.msra.mxu0 %v1556
        %1902 = vmatprep.subr.bf16.mxu0 %v1553
        %1903 = vmatpush1.bf16.msra.mxu0 %v1552
        %1904 = vmatprep.subr.bf16.mxu0 %v1613
        %1905 = vmatpush2.bf16.msra.mxu0 %v1612
        %1906 = vmatprep.subr.bf16.mxu0 %v1609
        %1907 = vmatpush2.bf16.msra.mxu0 %v1608
        %1908 = vmatprep.subr.bf16.mxu0 %v1605
        %1909 = vmatpush2.bf16.msra.mxu0 %v1604
        %1910 = vmatprep.subr.bf16.mxu0 %v1601
        %1911 = vmatpush2.bf16.msra.mxu0 %v1600
        %1912 = vmatprep.subr.bf16.mxu0 %v1597
        %1913 = vmatpush2.bf16.msra.mxu0 %v1596
        %1914 = vmatprep.subr.bf16.mxu0 %v1593
        %1915 = vmatpush2.bf16.msra.mxu0 %v1592
        %1916 = vmatprep.subr.bf16.mxu0 %v1589
        %1917 = vmatpush2.bf16.msra.mxu0 %v1588
        %1918 = vmatprep.subr.bf16.mxu0 %v1585
        %1919 = vmatpush2.bf16.msra.mxu0 %v1584
        %1920 = vmatprep.mubr.bf16.mxu0 %v1035
        %1921 = vmatmul.mubr.bf16.gmra.mxu0 %v1034
        %v1922 = vpop.f32.mrf.mxu0
        %v1923 = vadd.f32 0.0, %v1922
        %v1924 = vpop.f32.mrf.mxu0
        %v1925 = vadd.f32 0.0, %v1924
        %v1926 = vpop.f32.mrf.mxu0
        %v1927 = vpop.f32.mrf.mxu0
        %1928 = vdwg.mxu0
        %1929 = vmatprep.subr.bf16.mxu0 %v1645
        %1930 = vmatpush1.bf16.msra.mxu0 %v1644
        %1931 = vmatprep.subr.bf16.mxu0 %v1641
        %1932 = vmatpush1.bf16.msra.mxu0 %v1640
        %1933 = vmatprep.subr.bf16.mxu0 %v1637
        %1934 = vmatpush1.bf16.msra.mxu0 %v1636
        %1935 = vmatprep.subr.bf16.mxu0 %v1633
        %1936 = vmatpush1.bf16.msra.mxu0 %v1632
        %1937 = vmatprep.subr.bf16.mxu0 %v1629
        %1938 = vmatpush1.bf16.msra.mxu0 %v1628
        %1939 = vmatprep.subr.bf16.mxu0 %v1625
        %1940 = vmatpush1.bf16.msra.mxu0 %v1624
        %1941 = vmatprep.subr.bf16.mxu0 %v1621
        %1942 = vmatpush1.bf16.msra.mxu0 %v1620
        %1943 = vmatprep.subr.bf16.mxu0 %v1617
        %1944 = vmatpush1.bf16.msra.mxu0 %v1616
        %1945 = vmatprep.subr.bf16.mxu0 %v1677
        %1946 = vmatpush2.bf16.msra.mxu0 %v1676
        %1947 = vmatprep.subr.bf16.mxu0 %v1673
        %1948 = vmatpush2.bf16.msra.mxu0 %v1672
        %1949 = vmatprep.subr.bf16.mxu0 %v1669
        %1950 = vmatpush2.bf16.msra.mxu0 %v1668
        %1951 = vmatprep.subr.bf16.mxu0 %v1665
        %1952 = vmatpush2.bf16.msra.mxu0 %v1664
        %1953 = vmatprep.subr.bf16.mxu0 %v1661
        %1954 = vmatpush2.bf16.msra.mxu0 %v1660
        %1955 = vmatprep.subr.bf16.mxu0 %v1657
        %1956 = vmatpush2.bf16.msra.mxu0 %v1656
        %1957 = vmatprep.subr.bf16.mxu0 %v1653
        %1958 = vmatpush2.bf16.msra.mxu0 %v1652
        %1959 = vmatprep.subr.bf16.mxu0 %v1649
        %1960 = vmatpush2.bf16.msra.mxu0 %v1648
        %1961 = vmatprep.mubr.bf16.mxu0 %v1037
        %1962 = vmatmul.mubr.bf16.gmra.mxu0 %v1036
        %v1963 = vpop.f32.mrf.mxu0
        %v1964 = vadd.f32 %v1923, %v1963
        %v1965 = vpop.f32.mrf.mxu0
        %v1966 = vadd.f32 %v1925, %v1965
        %v1967 = vpop.f32.mrf.mxu0
        %v1968 = vpop.f32.mrf.mxu0
        %1969 = vdwg.mxu0
        %v1970 = vpack.c.bf16 %v1882, %v1882
        %v1971 = vpack.c.bf16 %v1884, %v1884
        %v1972 = vpack.c.bf16 %v1964, %v1964
        %v1973 = vpack.c.bf16 %v1966, %v1966
        %v1974 = vld [vmem:[%s6] sm:$0xf]
        %v1976 = vlaneseq
        %v1977 = vshrl.u32 %v1976, 7
        %v1978 = vsub.s32 0, %v1977
        %v1979 = vrot.slane %v1974, %v1978
        %v1980 = vlaneseq
        %v1981 = vshrl.u32 %v1980, 7
        %v1982 = vsub.s32 1, %v1981
        %v1983 = vrot.slane %v1974, %v1982
        %v1984 = vlaneseq
        %v1985 = vshrl.u32 %v1984, 7
        %v1986 = vsub.s32 2, %v1985
        %v1987 = vrot.slane %v1974, %v1986
        %v1988 = vlaneseq
        %v1989 = vshrl.u32 %v1988, 7
        %v1990 = vsub.s32 3, %v1989
        %v1991 = vrot.slane %v1974, %v1990
        %v1996 = vpack.c.bf16 %v1979, %v1979
        %v1997 = vpack.c.bf16 %v1983, %v1983
        %v1998 = vpack.c.bf16 %v1987, %v1987
        %v1999 = vpack.c.bf16 %v1991, %v1991
        %v2001 = vpack.i.b16 %v1996, %v1996
        %v2003 = vlaneseq
        %v2004 = vshrl.u32 %v2003, 7
        %v2005 = vsub.s32 0, %v2004
        %v2006 = vrot.slane %v2001, %v2005
        %v2008 = vpack.i.b16 %v1997, %v1997
        %v2010 = vlaneseq
        %v2011 = vshrl.u32 %v2010, 7
        %v2012 = vsub.s32 0, %v2011
        %v2013 = vrot.slane %v2008, %v2012
        %v2015 = vpack.i.b16 %v1998, %v1998
        %v2017 = vlaneseq
        %v2018 = vshrl.u32 %v2017, 7
        %v2019 = vsub.s32 0, %v2018
        %v2020 = vrot.slane %v2015, %v2019
        %v2022 = vpack.i.b16 %v1999, %v1999
        %v2024 = vlaneseq
        %v2025 = vshrl.u32 %v2024, 7
        %v2026 = vsub.s32 0, %v2025
        %v2027 = vrot.slane %v2022, %v2026
        %v2028 = vadd.bf16 %v1970, %v2006
        %v2029 = vadd.bf16 %v1971, %v2013
        %v2030 = vadd.bf16 %v1972, %v2020
        %v2031 = vadd.bf16 %v1973, %v2027
        %v2032 = vmul.bf16 %v2028, %v2028
        %v2033 = vmul.bf16 %v2029, %v2029
        %v2034 = vmul.bf16 %v2030, %v2030
        %v2035 = vmul.bf16 %v2031, %v2031
        %v2036 = vmul.bf16 %v2032, %v2028
        %v2037 = vmul.bf16 %v2033, %v2029
        %v2038 = vmul.bf16 %v2034, %v2030
        %v2039 = vmul.bf16 %v2035, %v2031
        %v2040 = vmul.bf16 %v2036, 1027030327
        %v2041 = vmul.bf16 %v2037, 1027030327
        %v2042 = vmul.bf16 %v2038, 1027030327
        %v2043 = vmul.bf16 %v2039, 1027030327
        %v2044 = vadd.bf16 %v2028, %v2040
        %v2045 = vadd.bf16 %v2029, %v2041
        %v2046 = vadd.bf16 %v2030, %v2042
        %v2047 = vadd.bf16 %v2031, %v2043
        %v2048 = vmul.bf16 %v2044, 1061961548
        %v2049 = vmul.bf16 %v2045, 1061961548
        %v2050 = vmul.bf16 %v2046, 1061961548
        %v2051 = vmul.bf16 %v2047, 1061961548
        %v2052 = vmul.bf16 %v2028, 1056980736
        %v2053 = vmul.bf16 %v2029, 1056980736
        %v2054 = vmul.bf16 %v2030, 1056980736
        %v2055 = vmul.bf16 %v2031, 1056980736
        %v2056 = vtanh.bf16.pop %v2048
        %v2057 = vtanh.bf16.pop %v2049
        %v2058 = vtanh.bf16.pop %v2050
        %v2059 = vtanh.bf16.pop %v2051
        %v2060 = vadd.bf16 %v2056, 1065369472
        %v2061 = vadd.bf16 %v2057, 1065369472
        %v2062 = vadd.bf16 %v2058, 1065369472
        %v2063 = vadd.bf16 %v2059, 1065369472
        %v2064 = vmul.bf16 %v2052, %v2060
        %v2065 = vmul.bf16 %v2053, %v2061
        %v2066 = vmul.bf16 %v2054, %v2062
        %v2067 = vmul.bf16 %v2055, %v2063
        %v2068 = vld [vmem:[#allocation11] sm:$0xf]
        %v2069 = vld [vmem:[#allocation11 + $0x4] sm:$0xf]
        %v2070 = vld [vmem:[#allocation11 + $0x8] sm:$0xf]
        %v2071 = vld [vmem:[#allocation11 + $0xc] sm:$0xf]
        %v2072 = vld [vmem:[#allocation11 + $0x10] sm:$0xf]
        %v2073 = vld [vmem:[#allocation11 + $0x14] sm:$0xf]
        %v2074 = vld [vmem:[#allocation11 + $0x18] sm:$0xf]
        %v2075 = vld [vmem:[#allocation11 + $0x1c] sm:$0xf]
        %v2076 = vld [vmem:[#allocation11 + $0x20] sm:$0xf]
        %v2077 = vld [vmem:[#allocation11 + $0x24] sm:$0xf]
        %v2078 = vld [vmem:[#allocation11 + $0x28] sm:$0xf]
        %v2079 = vld [vmem:[#allocation11 + $0x2c] sm:$0xf]
        %v2080 = vld [vmem:[#allocation11 + $0x30] sm:$0xf]
        %v2081 = vld [vmem:[#allocation11 + $0x34] sm:$0xf]
        %v2082 = vld [vmem:[#allocation11 + $0x38] sm:$0xf]
        %v2083 = vld [vmem:[#allocation11 + $0x3c] sm:$0xf]
        %v2084 = vld [vmem:[#allocation11 + $0x40] sm:$0xf]
        %v2085 = vld [vmem:[#allocation11 + $0x44] sm:$0xf]
        %v2086 = vld [vmem:[#allocation11 + $0x48] sm:$0xf]
        %v2087 = vld [vmem:[#allocation11 + $0x4c] sm:$0xf]
        %v2088 = vld [vmem:[#allocation11 + $0x50] sm:$0xf]
        %v2089 = vld [vmem:[#allocation11 + $0x54] sm:$0xf]
        %v2090 = vld [vmem:[#allocation11 + $0x58] sm:$0xf]
        %v2091 = vld [vmem:[#allocation11 + $0x5c] sm:$0xf]
        %v2092 = vld [vmem:[#allocation11 + $0x60] sm:$0xf]
        %v2093 = vld [vmem:[#allocation11 + $0x64] sm:$0xf]
        %v2094 = vld [vmem:[#allocation11 + $0x68] sm:$0xf]
        %v2095 = vld [vmem:[#allocation11 + $0x6c] sm:$0xf]
        %v2096 = vld [vmem:[#allocation11 + $0x70] sm:$0xf]
        %v2097 = vld [vmem:[#allocation11 + $0x74] sm:$0xf]
        %v2098 = vld [vmem:[#allocation11 + $0x78] sm:$0xf]
        %v2099 = vld [vmem:[#allocation11 + $0x7c] sm:$0xf]
        %v2100 = vld [vmem:[#allocation11 + $0x80] sm:$0xf]
        %v2101 = vld [vmem:[#allocation11 + $0x84] sm:$0xf]
        %v2102 = vld [vmem:[#allocation11 + $0x88] sm:$0xf]
        %v2103 = vld [vmem:[#allocation11 + $0x8c] sm:$0xf]
        %v2104 = vld [vmem:[#allocation11 + $0x90] sm:$0xf]
        %v2105 = vld [vmem:[#allocation11 + $0x94] sm:$0xf]
        %v2106 = vld [vmem:[#allocation11 + $0x98] sm:$0xf]
        %v2107 = vld [vmem:[#allocation11 + $0x9c] sm:$0xf]
        %v2108 = vld [vmem:[#allocation11 + $0xa0] sm:$0xf]
        %v2109 = vld [vmem:[#allocation11 + $0xa4] sm:$0xf]
        %v2110 = vld [vmem:[#allocation11 + $0xa8] sm:$0xf]
        %v2111 = vld [vmem:[#allocation11 + $0xac] sm:$0xf]
        %v2112 = vld [vmem:[#allocation11 + $0xb0] sm:$0xf]
        %v2113 = vld [vmem:[#allocation11 + $0xb4] sm:$0xf]
        %v2114 = vld [vmem:[#allocation11 + $0xb8] sm:$0xf]
        %v2115 = vld [vmem:[#allocation11 + $0xbc] sm:$0xf]
        %v2116 = vld [vmem:[#allocation11 + $0xc0] sm:$0xf]
        %v2117 = vld [vmem:[#allocation11 + $0xc4] sm:$0xf]
        %v2118 = vld [vmem:[#allocation11 + $0xc8] sm:$0xf]
        %v2119 = vld [vmem:[#allocation11 + $0xcc] sm:$0xf]
        %v2120 = vld [vmem:[#allocation11 + $0xd0] sm:$0xf]
        %v2121 = vld [vmem:[#allocation11 + $0xd4] sm:$0xf]
        %v2122 = vld [vmem:[#allocation11 + $0xd8] sm:$0xf]
        %v2123 = vld [vmem:[#allocation11 + $0xdc] sm:$0xf]
        %v2124 = vld [vmem:[#allocation11 + $0xe0] sm:$0xf]
        %v2125 = vld [vmem:[#allocation11 + $0xe4] sm:$0xf]
        %v2126 = vld [vmem:[#allocation11 + $0xe8] sm:$0xf]
        %v2127 = vld [vmem:[#allocation11 + $0xec] sm:$0xf]
        %v2128 = vld [vmem:[#allocation11 + $0xf0] sm:$0xf]
        %v2129 = vld [vmem:[#allocation11 + $0xf4] sm:$0xf]
        %v2130 = vld [vmem:[#allocation11 + $0xf8] sm:$0xf]
        %v2131 = vld [vmem:[#allocation11 + $0xfc] sm:$0xf]
        %v2132 = vld [vmem:[%s8] sm:$0x1]
        %v2134 = vlaneseq
        %v2135 = vshrl.u32 %v2134, 7
        %v2136 = vsub.s32 0, %v2135
        %v2137 = vrot.slane %v2132, %v2136
        %v2203 = vunpack.c.l.b16 %v2068
        %v2204 = vunpack.c.l.b16 %v2069
        %v2205 = vunpack.c.l.b16 %v2070
        %v2206 = vunpack.c.l.b16 %v2071
        %v2207 = vunpack.c.l.b16 %v2072
        %v2208 = vunpack.c.l.b16 %v2073
        %v2209 = vunpack.c.l.b16 %v2074
        %v2210 = vunpack.c.l.b16 %v2075
        %v2211 = vunpack.c.l.b16 %v2076
        %v2212 = vunpack.c.l.b16 %v2077
        %v2213 = vunpack.c.l.b16 %v2078
        %v2214 = vunpack.c.l.b16 %v2079
        %v2215 = vunpack.c.l.b16 %v2080
        %v2216 = vunpack.c.l.b16 %v2081
        %v2217 = vunpack.c.l.b16 %v2082
        %v2218 = vunpack.c.l.b16 %v2083
        %v2219 = vunpack.c.l.b16 %v2084
        %v2220 = vunpack.c.l.b16 %v2085
        %v2221 = vunpack.c.l.b16 %v2086
        %v2222 = vunpack.c.l.b16 %v2087
        %v2223 = vunpack.c.l.b16 %v2088
        %v2224 = vunpack.c.l.b16 %v2089
        %v2225 = vunpack.c.l.b16 %v2090
        %v2226 = vunpack.c.l.b16 %v2091
        %v2227 = vunpack.c.l.b16 %v2092
        %v2228 = vunpack.c.l.b16 %v2093
        %v2229 = vunpack.c.l.b16 %v2094
        %v2230 = vunpack.c.l.b16 %v2095
        %v2231 = vunpack.c.l.b16 %v2096
        %v2232 = vunpack.c.l.b16 %v2097
        %v2233 = vunpack.c.l.b16 %v2098
        %v2234 = vunpack.c.l.b16 %v2099
        %v2235 = vunpack.c.l.b16 %v2100
        %v2236 = vunpack.c.l.b16 %v2101
        %v2237 = vunpack.c.l.b16 %v2102
        %v2238 = vunpack.c.l.b16 %v2103
        %v2239 = vunpack.c.l.b16 %v2104
        %v2240 = vunpack.c.l.b16 %v2105
        %v2241 = vunpack.c.l.b16 %v2106
        %v2242 = vunpack.c.l.b16 %v2107
        %v2243 = vunpack.c.l.b16 %v2108
        %v2244 = vunpack.c.l.b16 %v2109
        %v2245 = vunpack.c.l.b16 %v2110
        %v2246 = vunpack.c.l.b16 %v2111
        %v2247 = vunpack.c.l.b16 %v2112
        %v2248 = vunpack.c.l.b16 %v2113
        %v2249 = vunpack.c.l.b16 %v2114
        %v2250 = vunpack.c.l.b16 %v2115
        %v2251 = vunpack.c.l.b16 %v2116
        %v2252 = vunpack.c.l.b16 %v2117
        %v2253 = vunpack.c.l.b16 %v2118
        %v2254 = vunpack.c.l.b16 %v2119
        %v2255 = vunpack.c.l.b16 %v2120
        %v2256 = vunpack.c.l.b16 %v2121
        %v2257 = vunpack.c.l.b16 %v2122
        %v2258 = vunpack.c.l.b16 %v2123
        %v2259 = vunpack.c.l.b16 %v2124
        %v2260 = vunpack.c.l.b16 %v2125
        %v2261 = vunpack.c.l.b16 %v2126
        %v2262 = vunpack.c.l.b16 %v2127
        %v2263 = vunpack.c.l.b16 %v2128
        %v2264 = vunpack.c.l.b16 %v2129
        %v2265 = vunpack.c.l.b16 %v2130
        %v2266 = vunpack.c.l.b16 %v2131
        %v2267 = vpack.c.b16 %v2204, %v2203
        %v2268 = vpack.c.b16 %v2206, %v2205
        %v2269 = vpack.c.b16 %v2208, %v2207
        %v2270 = vpack.c.b16 %v2210, %v2209
        %v2271 = vpack.c.b16 %v2212, %v2211
        %v2272 = vpack.c.b16 %v2214, %v2213
        %v2273 = vpack.c.b16 %v2216, %v2215
        %v2274 = vpack.c.b16 %v2218, %v2217
        %v2275 = vpack.c.b16 %v2220, %v2219
        %v2276 = vpack.c.b16 %v2222, %v2221
        %v2277 = vpack.c.b16 %v2224, %v2223
        %v2278 = vpack.c.b16 %v2226, %v2225
        %v2279 = vpack.c.b16 %v2228, %v2227
        %v2280 = vpack.c.b16 %v2230, %v2229
        %v2281 = vpack.c.b16 %v2232, %v2231
        %v2282 = vpack.c.b16 %v2234, %v2233
        %v2283 = vpack.c.b16 %v2236, %v2235
        %v2284 = vpack.c.b16 %v2238, %v2237
        %v2285 = vpack.c.b16 %v2240, %v2239
        %v2286 = vpack.c.b16 %v2242, %v2241
        %v2287 = vpack.c.b16 %v2244, %v2243
        %v2288 = vpack.c.b16 %v2246, %v2245
        %v2289 = vpack.c.b16 %v2248, %v2247
        %v2290 = vpack.c.b16 %v2250, %v2249
        %v2291 = vpack.c.b16 %v2252, %v2251
        %v2292 = vpack.c.b16 %v2254, %v2253
        %v2293 = vpack.c.b16 %v2256, %v2255
        %v2294 = vpack.c.b16 %v2258, %v2257
        %v2295 = vpack.c.b16 %v2260, %v2259
        %v2296 = vpack.c.b16 %v2262, %v2261
        %v2297 = vpack.c.b16 %v2264, %v2263
        %v2298 = vpack.c.b16 %v2266, %v2265
        %2331 = vmatprep.subr.bf16.mxu0 0
        %2332 = vmatpush1.bf16.msra.mxu0 %v2274
        %2333 = vmatprep.subr.bf16.mxu0 0
        %2334 = vmatpush1.bf16.msra.mxu0 %v2273
        %2335 = vmatprep.subr.bf16.mxu0 0
        %2336 = vmatpush1.bf16.msra.mxu0 %v2272
        %2337 = vmatprep.subr.bf16.mxu0 0
        %2338 = vmatpush1.bf16.msra.mxu0 %v2271
        %2339 = vmatprep.subr.bf16.mxu0 0
        %2340 = vmatpush1.bf16.msra.mxu0 %v2270
        %2341 = vmatprep.subr.bf16.mxu0 0
        %2342 = vmatpush1.bf16.msra.mxu0 %v2269
        %2343 = vmatprep.subr.bf16.mxu0 0
        %2344 = vmatpush1.bf16.msra.mxu0 %v2268
        %2345 = vmatprep.subr.bf16.mxu0 0
        %2346 = vmatpush1.bf16.msra.mxu0 %v2267
        %2347 = vmatprep.subr.bf16.mxu0 0
        %2348 = vmatpush2.bf16.msra.mxu0 %v2282
        %2349 = vmatprep.subr.bf16.mxu0 0
        %2350 = vmatpush2.bf16.msra.mxu0 %v2281
        %2351 = vmatprep.subr.bf16.mxu0 0
        %2352 = vmatpush2.bf16.msra.mxu0 %v2280
        %2353 = vmatprep.subr.bf16.mxu0 0
        %2354 = vmatpush2.bf16.msra.mxu0 %v2279
        %2355 = vmatprep.subr.bf16.mxu0 0
        %2356 = vmatpush2.bf16.msra.mxu0 %v2278
        %2357 = vmatprep.subr.bf16.mxu0 0
        %2358 = vmatpush2.bf16.msra.mxu0 %v2277
        %2359 = vmatprep.subr.bf16.mxu0 0
        %2360 = vmatpush2.bf16.msra.mxu0 %v2276
        %2361 = vmatprep.subr.bf16.mxu0 0
        %2362 = vmatpush2.bf16.msra.mxu0 %v2275
        %2363 = vmatprep.mubr.bf16.mxu0 %v2065
        %2364 = vmatmul.mubr.bf16.gmra.mxu0 %v2064
        %v2365 = vpop.f32.mrf.mxu0
        %v2366 = vadd.f32 %v2137, %v2365
        %v2367 = vpop.f32.mrf.mxu0
        %v2368 = vpop.f32.mrf.mxu0
        %v2369 = vpop.f32.mrf.mxu0
        %2370 = vdwg.mxu0
        %2371 = vmatprep.subr.bf16.mxu0 0
        %2372 = vmatpush1.bf16.msra.mxu0 %v2290
        %2373 = vmatprep.subr.bf16.mxu0 0
        %2374 = vmatpush1.bf16.msra.mxu0 %v2289
        %2375 = vmatprep.subr.bf16.mxu0 0
        %2376 = vmatpush1.bf16.msra.mxu0 %v2288
        %2377 = vmatprep.subr.bf16.mxu0 0
        %2378 = vmatpush1.bf16.msra.mxu0 %v2287
        %2379 = vmatprep.subr.bf16.mxu0 0
        %2380 = vmatpush1.bf16.msra.mxu0 %v2286
        %2381 = vmatprep.subr.bf16.mxu0 0
        %2382 = vmatpush1.bf16.msra.mxu0 %v2285
        %2383 = vmatprep.subr.bf16.mxu0 0
        %2384 = vmatpush1.bf16.msra.mxu0 %v2284
        %2385 = vmatprep.subr.bf16.mxu0 0
        %2386 = vmatpush1.bf16.msra.mxu0 %v2283
        %2387 = vmatprep.subr.bf16.mxu0 0
        %2388 = vmatpush2.bf16.msra.mxu0 %v2298
        %2389 = vmatprep.subr.bf16.mxu0 0
        %2390 = vmatpush2.bf16.msra.mxu0 %v2297
        %2391 = vmatprep.subr.bf16.mxu0 0
        %2392 = vmatpush2.bf16.msra.mxu0 %v2296
        %2393 = vmatprep.subr.bf16.mxu0 0
        %2394 = vmatpush2.bf16.msra.mxu0 %v2295
        %2395 = vmatprep.subr.bf16.mxu0 0
        %2396 = vmatpush2.bf16.msra.mxu0 %v2294
        %2397 = vmatprep.subr.bf16.mxu0 0
        %2398 = vmatpush2.bf16.msra.mxu0 %v2293
        %2399 = vmatprep.subr.bf16.mxu0 0
        %2400 = vmatpush2.bf16.msra.mxu0 %v2292
        %2401 = vmatprep.subr.bf16.mxu0 0
        %2402 = vmatpush2.bf16.msra.mxu0 %v2291
        %2403 = vmatprep.mubr.bf16.mxu0 %v2067
        %2404 = vmatmul.mubr.bf16.gmra.mxu0 %v2066
        %v2405 = vpop.f32.mrf.mxu0
        %v2406 = vadd.f32 %v2366, %v2405
        %v2407 = vpop.f32.mrf.mxu0
        %v2408 = vpop.f32.mrf.mxu0
        %v2409 = vpop.f32.mrf.mxu0
        %2410 = vdwg.mxu0
        %v2411 = vmul.f32 %v2406, %v2406
        %2412 = vadd.xlane.f32.xlu0 %v2411
        %v2413 = vpop.xlane.xlu0 %2412
        %v2414 = vmax.f32 %v2413, 1e-24
        %v2415 = vrsqrt.pop %v2414
        %v2416 = vmul.f32 %v2406, %v2415
        %2417 = vst [vmem:[%s417] sm:$0xff] %v2416
        %s2418 = sand.u32 %s231, 1
        %s2419 = scalar_lea.sflag [#allocation4], %s2418
        %s2420 = sand.u32 %s231, 1
        %s2421 = smul.addr %s2420, 8
        %s2422 = scalar_lea.vmem [#allocation13], %s2421
        // Predicated region
        $region81: #{tpu_custom_call.1} parent=55 // pred_check
          %p2423 = pneg %p241
        $region82: #{tpu_custom_call.1} parent=55 // pred_check_branch
          %2425 = sbr.rel (%p2423) target = $region84
        $region83: #{tpu_custom_call.1} parent=55 // pred_region
          %s2427 = ssub.s32 128, 128
          %2428 = vsyncadd %s2419, %s2427
          %s2429 = smul.addr %s29, 128
          %s2430 = scalar_lea.hbm %s9, %s2429
          %s2432 = sshll.u32 %s2422, 4
          %s2433 = int_to_ptr.vmem [resolvable:$true] %s2432
          %2435 = dma.vmem_to_hbm [thread:$0]  %s2433, 128, %s2430, %s2419
        $region84: #{tpu_custom_call.1} parent=55 // pred_fallthru
          _
      $region56: #{tpu_custom_call.1} parent=5 // pred_fallthru
        _
      %p2436 = scmp.le.s32.totalorder 2, %s24
      // Predicated region
      $region85: #{tpu_custom_call.1} parent=5 // pred_check
        %p2437 = pneg %p2436
      $region86: #{tpu_custom_call.1} parent=5 // pred_check_branch
        %2439 = sbr.rel (%p2437) target = $region88
      $region87: #{tpu_custom_call.1} parent=5 // pred_region
        %s2440 = ssub.s32 %s24, 2
        // Predicated region
        $region89: #{tpu_custom_call.1} parent=87 // pred_check
          %p2441 = pneg %p247
        $region90: #{tpu_custom_call.1} parent=87 // pred_check_branch
          %2443 = sbr.rel (%p2441) target = $region92
        $region91: #{tpu_custom_call.1} parent=87 // pred_region
          %s2444 = sand.u32 %s232, 1
          %s2445 = scalar_lea.sflag [#allocation4], %s2444
          %s2446 = sand.u32 %s232, 1
          %s2447 = smul.addr %s2446, 8
          %s2448 = scalar_lea.vmem [#allocation13], %s2447
          %2449 = dma.done %s2445, 128
        $region92: #{tpu_custom_call.1} parent=87 // pred_fallthru
          _
      $region88: #{tpu_custom_call.1} parent=5 // pred_fallthru
        _
    $region6: #{tpu_custom_call.1} parent=1 // loop_footer
      %s28 = sadd.s32 1, %s24
    $region7: #{tpu_custom_call.1} parent=1 // loop_footer_branch
      %23 = sbr.rel target = $region3
    $region8: #{tpu_custom_call.1} parent=1 // loop_exit
      _
    %2450 = vsyncpa [#allocation3], 1
    %s2451 = scalar_lea.sflag [#allocation3], 1
    %2452 = vsyncpa %s2451, 1
    %2453 = vsyncpa [#allocation6], 1
    %2454 = vsyncpa [#allocation9], 1
    %2455 = vsyncpa [#allocation12], 1
    %2456 = vsyncpa [#allocation4], 1
    %s2457 = scalar_lea.sflag [#allocation4], 1
    %2458 = vsyncpa %s2457, 1

// kernel: tpu_custom_call.1
$region0: #{tpu_custom_call.1}
  #allocation0 [shape = 'u32[]', space=smem, size = 0x4, offset = 0x4, fixed_abs, tag = 'smem constant byte address 0x4 - core index']
  #allocation1 [shape = 'u32[144,128]{1,0:T(1,128)}', space=vmem, size = 0x12000, scoped, tag = 'internal scratch']
  %s0 = inlined_call_operand.hbm [shape: f32[16,256], index: 0, kind: input, shape index: {}]
  %s1 = inlined_call_operand.hbm [shape: f32[1,256], index: 1, kind: input, shape index: {}]
  %s2 = inlined_call_operand.hbm [shape: f32[1,256], index: 2, kind: input, shape index: {}]
  %s3 = inlined_call_operand.hbm [shape: bf16[256,512], index: 3, kind: input, shape index: {}]
  %s4 = inlined_call_operand.vmem [shape: f32[1,512], index: 4, kind: input, shape index: {}]
  %s5 = inlined_call_operand.hbm [shape: bf16[512,512], index: 5, kind: input, shape index: {}]
  %s6 = inlined_call_operand.vmem [shape: f32[1,512], index: 6, kind: input, shape index: {}]
  %s7 = inlined_call_operand.hbm [shape: bf16[512,128], index: 7, kind: input, shape index: {}]
  %s8 = inlined_call_operand.vmem [shape: f32[1,128], index: 8, kind: input, shape index: {}]
  %s9 = inlined_call_operand.hbm [shape: f32[16,128], index: 9, kind: output, shape index: {}]
  %s10 = sld [smem:[#allocation0]]
  $region93: #{tpu_custom_call.1} parent=0
    _
  %s12 = ssub.s32 1, %s10
  %s13 = scalar_select 0, %s12, %s10
  $region1: #{tpu_custom_call.1} parent=0
    #allocation2 [shape = 'u8[16384]{0}', space=vmem, size = 0x4000, scoped, tag = 'input window, operand 0']
    #allocation3 [shape = 's32[2]{0}', space=sflag, size = 0x8, scoped, tag = 'scoped memory for tpu_custom_call.1']
    #allocation4 [shape = 's32[2]{0}', space=sflag, size = 0x8, scoped, tag = 'scoped memory for tpu_custom_call.1']
    #allocation5 [shape = 'u8[1024]{0}', space=vmem, size = 0x400, scoped, tag = 'input window, operand 1, single buffered']
    #allocation6 [shape = 's32[1]{0}', space=sflag, size = 0x4, scoped, tag = 'scoped memory for tpu_custom_call.1']
    #allocation7 [shape = 'u8[1024]{0}', space=vmem, size = 0x400, scoped, tag = 'input window, operand 2, single buffered']
    #allocation8 [shape = 'u8[262144]{0}', space=vmem, size = 0x40000, scoped, tag = 'input window, operand 3, single buffered']
    #allocation9 [shape = 's32[1]{0}', space=sflag, size = 0x4, scoped, tag = 'scoped memory for tpu_custom_call.1']
    #allocation10 [shape = 'u8[524288]{0}', space=vmem, size = 0x80000, scoped, tag = 'input window, operand 5, single buffered']
    #allocation11 [shape = 'u8[131072]{0}', space=vmem, size = 0x20000, scoped, tag = 'input window, operand 7, single buffered']
    #allocation12 [shape = 's32[1]{0}', space=sflag, size = 0x4, scoped, tag = 'scoped memory for tpu_custom_call.1']
    #allocation13 [shape = 'u8[8192]{0}', space=vmem, size = 0x2000, scoped, tag = 'output window, operand 0']
    %14 = vsyncpa [#allocation3], 0
    %s15 = scalar_lea.sflag [#allocation3], 1
    %16 = vsyncpa %s15, 0
    %17 = vsyncpa [#allocation6], 0
    %18 = vsyncpa [#allocation9], 0
    %19 = vsyncpa [#allocation12], 0
    %20 = vsyncpa [#allocation4], 0
    %s21 = scalar_lea.sflag [#allocation4], 1
    %22 = vsyncpa %s21, 0
    loop: start=0, step=1, limit=4
    $region2: #{tpu_custom_call.1} parent=1 // loop_pre_header
      _
    $region3: #{tpu_custom_call.1} parent=1 // loop_header
      %s24 = sphi 0, %s28
      %p25 = scmp.ge.s32.totalorder %s24, 4
      %s34 = sphi 0, %s36
      %s37 = sphi 0, %s34
      %s38 = sphi 0, %s37
      %s54 = sphi 0, %s38
      %s58 = sphi 0, %s58
      %s60 = sphi 0, %s58
      %s61 = sphi 0, %s60
      %s75 = sphi 0, %s61
      %s79 = sphi 0, %s79
      %s81 = sphi 0, %s79
      %s82 = sphi 0, %s81
      %s96 = sphi 0, %s82
      %s100 = sphi 0, %s100
      %s102 = sphi 0, %s100
      %s103 = sphi 0, %s102
      %s117 = sphi 0, %s103
      %s121 = sphi 0, %s121
      %s123 = sphi 0, %s121
      %s124 = sphi 0, %s123
      %s138 = sphi 0, %s124
      %s142 = sphi 0, %s142
      %s144 = sphi 0, %s142
      %s145 = sphi 0, %s144
      %s159 = sphi 0, %s145
      %s163 = sphi 0, %s163
      %s165 = sphi 0, %s163
      %s166 = sphi 0, %s165
      %s180 = sphi 0, %s166
      %s184 = sphi 0, %s184
      %s186 = sphi 0, %s184
      %s187 = sphi 0, %s186
      %s201 = sphi 0, %s187
      %s205 = sphi 0, %s205
      %s207 = sphi 0, %s205
      %s208 = sphi 0, %s207
      %s222 = sphi 0, %s208
      %s228 = sphi 0, %s230
      %s231 = sphi 0, %s228
      %s232 = sphi 0, %s231
      %s248 = sphi 0, %s232
    $region4: #{tpu_custom_call.1} parent=1 // loop_header_branch
      %27 = sbr.rel (%p25) target = $region8
    $region5: #{tpu_custom_call.1} parent=1 // loop_body
      %s29 = ssub.s32 %s24, 1
      %s30 = ssub.s32 %s24, 2
      %s31 = sadd.s32 %s24, 1
      %s32 = ssub.s32 %s24, %s31
      %p33 = scmp.eq.s32.totalorder %s32, 0
      %s35 = sadd.s32 %s34, 1
      %s36 = scalar_select %p33, %s34, %s35
      %p39 = pneg %p33
      %p40 = scmp.eq.s32.totalorder %s24, 1
      %p41 = por %p39, %p40
      %p42 = scmp.ne.s32.totalorder %s34, %s37
      %p43 = scmp.eq.s32.totalorder %s24, 0
      %p44 = por %p42, %p43
      %p45 = scmp.ne.s32.totalorder %s34, %s37
      %p46 = scmp.eq.s32.totalorder %s29, 1
      %p47 = por %p45, %p46
      %p48 = scmp.ne.s32.totalorder %s37, %s38
      %p49 = scmp.eq.s32.totalorder %s29, 0
      %p50 = por %p48, %p49
      %p51 = scmp.ne.s32.totalorder %s37, %s38
      %p52 = scmp.eq.s32.totalorder %s30, 1
      %p53 = por %p51, %p52
      %p55 = scmp.ne.s32.totalorder %s38, %s54
      %p56 = scmp.eq.s32.totalorder %s30, 0
      %p57 = por %p55, %p56
      %s59 = sadd.s32 %s58, 1
      %p62 = scmp.eq.s32.totalorder %s24, 1
      %p63 = scmp.ne.s32.totalorder %s58, %s60
      %p64 = scmp.eq.s32.totalorder %s24, 0
      %p65 = por %p63, %p64
      %p66 = scmp.ne.s32.totalorder %s58, %s60
      %p67 = scmp.eq.s32.totalorder %s29, 1
      %p68 = por %p66, %p67
      %p69 = scmp.ne.s32.totalorder %s60, %s61
      %p70 = scmp.eq.s32.totalorder %s29, 0
      %p71 = por %p69, %p70
      %p72 = scmp.ne.s32.totalorder %s60, %s61
      %p73 = scmp.eq.s32.totalorder %s30, 1
      %p74 = por %p72, %p73
      %p76 = scmp.ne.s32.totalorder %s61, %s75
      %p77 = scmp.eq.s32.totalorder %s30, 0
      %p78 = por %p76, %p77
      %s80 = sadd.s32 %s79, 1
      %p83 = scmp.eq.s32.totalorder %s24, 1
      %p84 = scmp.ne.s32.totalorder %s79, %s81
      %p85 = scmp.eq.s32.totalorder %s24, 0
      %p86 = por %p84, %p85
      %p87 = scmp.ne.s32.totalorder %s79, %s81
      %p88 = scmp.eq.s32.totalorder %s29, 1
      %p89 = por %p87, %p88
      %p90 = scmp.ne.s32.totalorder %s81, %s82
      %p91 = scmp.eq.s32.totalorder %s29, 0
      %p92 = por %p90, %p91
      %p93 = scmp.ne.s32.totalorder %s81, %s82
      %p94 = scmp.eq.s32.totalorder %s30, 1
      %p95 = por %p93, %p94
      %p97 = scmp.ne.s32.totalorder %s82, %s96
      %p98 = scmp.eq.s32.totalorder %s30, 0
      %p99 = por %p97, %p98
      %s101 = sadd.s32 %s100, 1
      %p104 = scmp.eq.s32.totalorder %s24, 1
      %p105 = scmp.ne.s32.totalorder %s100, %s102
      %p106 = scmp.eq.s32.totalorder %s24, 0
      %p107 = por %p105, %p106
      %p108 = scmp.ne.s32.totalorder %s100, %s102
      %p109 = scmp.eq.s32.totalorder %s29, 1
      %p110 = por %p108, %p109
      %p111 = scmp.ne.s32.totalorder %s102, %s103
      %p112 = scmp.eq.s32.totalorder %s29, 0
      %p113 = por %p111, %p112
      %p114 = scmp.ne.s32.totalorder %s102, %s103
      %p115 = scmp.eq.s32.totalorder %s30, 1
      %p116 = por %p114, %p115
      %p118 = scmp.ne.s32.totalorder %s103, %s117
      %p119 = scmp.eq.s32.totalorder %s30, 0
      %p120 = por %p118, %p119
      %s122 = sadd.s32 %s121, 1
      %p125 = scmp.eq.s32.totalorder %s24, 1
      %p126 = scmp.ne.s32.totalorder %s121, %s123
      %p127 = scmp.eq.s32.totalorder %s24, 0
      %p128 = por %p126, %p127
      %p129 = scmp.ne.s32.totalorder %s121, %s123
      %p130 = scmp.eq.s32.totalorder %s29, 1
      %p131 = por %p129, %p130
      %p132 = scmp.ne.s32.totalorder %s123, %s124
      %p133 = scmp.eq.s32.totalorder %s29, 0
      %p134 = por %p132, %p133
      %p135 = scmp.ne.s32.totalorder %s123, %s124
      %p136 = scmp.eq.s32.totalorder %s30, 1
      %p137 = por %p135, %p136
      %p139 = scmp.ne.s32.totalorder %s124, %s138
      %p140 = scmp.eq.s32.totalorder %s30, 0
      %p141 = por %p139, %p140
      %s143 = sadd.s32 %s142, 1
      %p146 = scmp.eq.s32.totalorder %s24, 1
      %p147 = scmp.ne.s32.totalorder %s142, %s144
      %p148 = scmp.eq.s32.totalorder %s24, 0
      %p149 = por %p147, %p148
      %p150 = scmp.ne.s32.totalorder %s142, %s144
      %p151 = scmp.eq.s32.totalorder %s29, 1
      %p152 = por %p150, %p151
      %p153 = scmp.ne.s32.totalorder %s144, %s145
      %p154 = scmp.eq.s32.totalorder %s29, 0
      %p155 = por %p153, %p154
      %p156 = scmp.ne.s32.totalorder %s144, %s145
      %p157 = scmp.eq.s32.totalorder %s30, 1
      %p158 = por %p156, %p157
      %p160 = scmp.ne.s32.totalorder %s145, %s159
      %p161 = scmp.eq.s32.totalorder %s30, 0
      %p162 = por %p160, %p161
      %s164 = sadd.s32 %s163, 1
      %p167 = scmp.eq.s32.totalorder %s24, 1
      %p168 = scmp.ne.s32.totalorder %s163, %s165
      %p169 = scmp.eq.s32.totalorder %s24, 0
      %p170 = por %p168, %p169
      %p171 = scmp.ne.s32.totalorder %s163, %s165
      %p172 = scmp.eq.s32.totalorder %s29, 1
      %p173 = por %p171, %p172
      %p174 = scmp.ne.s32.totalorder %s165, %s166
      %p175 = scmp.eq.s32.totalorder %s29, 0
      %p176 = por %p174, %p175
      %p177 = scmp.ne.s32.totalorder %s165, %s166
      %p178 = scmp.eq.s32.totalorder %s30, 1
      %p179 = por %p177, %p178
      %p181 = scmp.ne.s32.totalorder %s166, %s180
      %p182 = scmp.eq.s32.totalorder %s30, 0
      %p183 = por %p181, %p182
      %s185 = sadd.s32 %s184, 1
      %p188 = scmp.eq.s32.totalorder %s24, 1
      %p189 = scmp.ne.s32.totalorder %s184, %s186
      %p190 = scmp.eq.s32.totalorder %s24, 0
      %p191 = por %p189, %p190
      %p192 = scmp.ne.s32.totalorder %s184, %s186
      %p193 = scmp.eq.s32.totalorder %s29, 1
      %p194 = por %p192, %p193
      %p195 = scmp.ne.s32.totalorder %s186, %s187
      %p196 = scmp.eq.s32.totalorder %s29, 0
      %p197 = por %p195, %p196
      %p198 = scmp.ne.s32.totalorder %s186, %s187
      %p199 = scmp.eq.s32.totalorder %s30, 1
      %p200 = por %p198, %p199
      %p202 = scmp.ne.s32.totalorder %s187, %s201
      %p203 = scmp.eq.s32.totalorder %s30, 0
      %p204 = por %p202, %p203
      %s206 = sadd.s32 %s205, 1
      %p209 = scmp.eq.s32.totalorder %s24, 1
      %p210 = scmp.ne.s32.totalorder %s205, %s207
      %p211 = scmp.eq.s32.totalorder %s24, 0
      %p212 = por %p210, %p211
      %p213 = scmp.ne.s32.totalorder %s205, %s207
      %p214 = scmp.eq.s32.totalorder %s29, 1
      %p215 = por %p213, %p214
      %p216 = scmp.ne.s32.totalorder %s207, %s208
      %p217 = scmp.eq.s32.totalorder %s29, 0
      %p218 = por %p216, %p217
      %p219 = scmp.ne.s32.totalorder %s207, %s208
      %p220 = scmp.eq.s32.totalorder %s30, 1
      %p221 = por %p219, %p220
      %p223 = scmp.ne.s32.totalorder %s208, %s222
      %p224 = scmp.eq.s32.totalorder %s30, 0
      %p225 = por %p223, %p224
      %s226 = ssub.s32 %s24, %s31
      %p227 = scmp.eq.s32.totalorder %s226, 0
      %s229 = sadd.s32 %s228, 1
      %s230 = scalar_select %p227, %s228, %s229
      %p233 = pneg %p227
      %p234 = scmp.eq.s32.totalorder %s24, 1
      %p235 = por %p233, %p234
      %p236 = scmp.ne.s32.totalorder %s228, %s231
      %p237 = scmp.eq.s32.totalorder %s24, 0
      %p238 = por %p236, %p237
      %p239 = scmp.ne.s32.totalorder %s228, %s231
      %p240 = scmp.eq.s32.totalorder %s29, 1
      %p241 = por %p239, %p240
      %p242 = scmp.ne.s32.totalorder %s231, %s232
      %p243 = scmp.eq.s32.totalorder %s29, 0
      %p244 = por %p242, %p243
      %p245 = scmp.ne.s32.totalorder %s231, %s232
      %p246 = scmp.eq.s32.totalorder %s30, 1
      %p247 = por %p245, %p246
      %p249 = scmp.ne.s32.totalorder %s232, %s248
      %p250 = scmp.eq.s32.totalorder %s30, 0
      %p251 = por %p249, %p250
      %p252 = scmp.le.s32.totalorder 1, %s24
      %p253 = scmp.lt.s32.totalorder %s24, 3
      %p254 = pnand %p252, %p253
      %p255 = pneg %p254
      // Predicated region
      $region9: #{tpu_custom_call.1} parent=5 // pred_check
        _
      $region10: #{tpu_custom_call.1} parent=5 // pred_check_branch
        %257 = sbr.rel (%p254) target = $region12
      $region11: #{tpu_custom_call.1} parent=5 // pred_region
        %s258 = ssub.s32 %s24, 1
        // Predicated region
        $region13: #{tpu_custom_call.1} parent=11 // pred_check
          %p259 = pneg %p71
        $region14: #{tpu_custom_call.1} parent=11 // pred_check_branch
          %261 = sbr.rel (%p259) target = $region16
        $region15: #{tpu_custom_call.1} parent=11 // pred_region
          %s263 = ssub.s32 32, 32
          %264 = vsyncadd [#allocation6], %s263
          %s266 = sshll.u32 [#allocation5], 4
          %s267 = int_to_ptr.vmem [resolvable:$true] %s266
          %269 = dma.hbm_to_vmem [thread:$0]  %s1, 32, %s267, [#allocation6]
        $region16: #{tpu_custom_call.1} parent=11 // pred_fallthru
          _
        // Predicated region
        $region17: #{tpu_custom_call.1} parent=11 // pred_check
          %p270 = pneg %p92
        $region18: #{tpu_custom_call.1} parent=11 // pred_check_branch
          %272 = sbr.rel (%p270) target = $region20
        $region19: #{tpu_custom_call.1} parent=11 // pred_region
          %s274 = ssub.s32 32, 32
          %275 = vsyncadd [#allocation6], %s274
          %s277 = sshll.u32 [#allocation7], 4
          %s278 = int_to_ptr.vmem [resolvable:$true] %s277
          %280 = dma.hbm_to_vmem [thread:$0]  %s2, 32, %s278, [#allocation6]
        $region20: #{tpu_custom_call.1} parent=11 // pred_fallthru
          _
        // Predicated region
        $region21: #{tpu_custom_call.1} parent=11 // pred_check
          %p281 = pneg %p113
        $region22: #{tpu_custom_call.1} parent=11 // pred_check_branch
          %283 = sbr.rel (%p281) target = $region24
        $region23: #{tpu_custom_call.1} parent=11 // pred_region
          %s285 = ssub.s32 8192, 8192
          %286 = vsyncadd [#allocation9], %s285
          %s287 = sshll.u32 [#allocation8], 4
          %s288 = int_to_ptr.vmem [resolvable:$true] %s287
          %293 = dma.hbm_to_vmem [thread:$0]  %s3, 8192, %s288, [#allocation9], 256, 256, 16
        $region24: #{tpu_custom_call.1} parent=11 // pred_fallthru
          _
        // Predicated region
        $region25: #{tpu_custom_call.1} parent=11 // pred_check
          %p294 = pneg %p134
        $region26: #{tpu_custom_call.1} parent=11 // pred_check_branch
          %296 = sbr.rel (%p294) target = $region28
        $region27: #{tpu_custom_call.1} parent=11 // pred_region
          _
        $region28: #{tpu_custom_call.1} parent=11 // pred_fallthru
          _
        // Predicated region
        $region29: #{tpu_custom_call.1} parent=11 // pred_check
          %p297 = pneg %p155
        $region30: #{tpu_custom_call.1} parent=11 // pred_check_branch
          %299 = sbr.rel (%p297) target = $region32
        $region31: #{tpu_custom_call.1} parent=11 // pred_region
          %s301 = ssub.s32 16384, 16384
          %302 = vsyncadd [#allocation9], %s301
          %s303 = sshll.u32 [#allocation10], 4
          %s304 = int_to_ptr.vmem [resolvable:$true] %s303
          %309 = dma.hbm_to_vmem [thread:$0]  %s5, 16384, %s304, [#allocation9], 256, 256, 16
        $region32: #{tpu_custom_call.1} parent=11 // pred_fallthru
          _
        // Predicated region
        $region33: #{tpu_custom_call.1} parent=11 // pred_check
          %p310 = pneg %p176
        $region34: #{tpu_custom_call.1} parent=11 // pred_check_branch
          %312 = sbr.rel (%p310) target = $region36
        $region35: #{tpu_custom_call.1} parent=11 // pred_region
          _
        $region36: #{tpu_custom_call.1} parent=11 // pred_fallthru
          _
        // Predicated region
        $region37: #{tpu_custom_call.1} parent=11 // pred_check
          %p313 = pneg %p197
        $region38: #{tpu_custom_call.1} parent=11 // pred_check_branch
          %315 = sbr.rel (%p313) target = $region40
        $region39: #{tpu_custom_call.1} parent=11 // pred_region
          %s317 = ssub.s32 4096, 4096
          %318 = vsyncadd [#allocation12], %s317
          %s319 = sshll.u32 [#allocation11], 4
          %s320 = int_to_ptr.vmem [resolvable:$true] %s319
          %325 = dma.hbm_to_vmem [thread:$0]  %s7, 4096, %s320, [#allocation12], 64, 64, 4
        $region40: #{tpu_custom_call.1} parent=11 // pred_fallthru
          _
        // Predicated region
        $region41: #{tpu_custom_call.1} parent=11 // pred_check
          %p326 = pneg %p218
        $region42: #{tpu_custom_call.1} parent=11 // pred_check_branch
          %328 = sbr.rel (%p326) target = $region44
        $region43: #{tpu_custom_call.1} parent=11 // pred_region
          _
        $region44: #{tpu_custom_call.1} parent=11 // pred_fallthru
          _
      $region12: #{tpu_custom_call.1} parent=5 // pred_fallthru
        _
      %p329 = scmp.lt.s32.totalorder %s24, 2
      // Predicated region
      $region45: #{tpu_custom_call.1} parent=5 // pred_check
        %p330 = pneg %p329
      $region46: #{tpu_custom_call.1} parent=5 // pred_check_branch
        %332 = sbr.rel (%p330) target = $region48
      $region47: #{tpu_custom_call.1} parent=5 // pred_region
        // Predicated region
        $region49: #{tpu_custom_call.1} parent=47 // pred_check
          %p333 = pneg %p44
        $region50: #{tpu_custom_call.1} parent=47 // pred_check_branch
          %335 = sbr.rel (%p333) target = $region52
        $region51: #{tpu_custom_call.1} parent=47 // pred_region
          %s336 = sand.u32 %s34, 1
          %s337 = scalar_lea.sflag [#allocation3], %s336
          %s338 = sand.u32 %s34, 1
          %s339 = smul.addr %s338, 16
          %s340 = scalar_lea.vmem [#allocation2], %s339
          %s342 = ssub.s32 256, 256
          %343 = vsyncadd %s337, %s342
          %s344 = smul.addr %s24, 2
          %s345 = smul.addr %s344, 128
          %s346 = scalar_lea.hbm %s0, %s345
          %s348 = sshll.u32 %s340, 4
          %s349 = int_to_ptr.vmem [resolvable:$true] %s348
          %351 = dma.hbm_to_vmem [thread:$0]  %s346, 256, %s349, %s337
        $region52: #{tpu_custom_call.1} parent=47 // pred_fallthru
          _
      $region48: #{tpu_custom_call.1} parent=5 // pred_fallthru
        _
      %p352 = scmp.le.s32.totalorder 1, %s24
      %p353 = scmp.lt.s32.totalorder %s24, 3
      %p354 = pnand %p352, %p353
      %p355 = pneg %p354
      // Predicated region
      $region53: #{tpu_custom_call.1} parent=5 // pred_check
        _
      $region54: #{tpu_custom_call.1} parent=5 // pred_check_branch
        %357 = sbr.rel (%p354) target = $region56
      $region55: #{tpu_custom_call.1} parent=5 // pred_region
        %s358 = ssub.s32 %s24, 1
        %s359 = sand.u32 %s37, 1
        %s360 = scalar_lea.sflag [#allocation3], %s359
        %s361 = sand.u32 %s37, 1
        %s362 = smul.addr %s361, 16
        %s363 = scalar_lea.vmem [#allocation2], %s362
        // Predicated region
        $region57: #{tpu_custom_call.1} parent=55 // pred_check
          %p364 = pneg %p50
        $region58: #{tpu_custom_call.1} parent=55 // pred_check_branch
          %366 = sbr.rel (%p364) target = $region60
        $region59: #{tpu_custom_call.1} parent=55 // pred_region
          %367 = dma.done %s360, 256
        $region60: #{tpu_custom_call.1} parent=55 // pred_fallthru
          _
        // Predicated region
        $region61: #{tpu_custom_call.1} parent=55 // pred_check
          %p368 = pneg %p71
        $region62: #{tpu_custom_call.1} parent=55 // pred_check_branch
          %370 = sbr.rel (%p368) target = $region64
        $region63: #{tpu_custom_call.1} parent=55 // pred_region
          %371 = dma.done [#allocation6], 32
        $region64: #{tpu_custom_call.1} parent=55 // pred_fallthru
          _
        // Predicated region
        $region65: #{tpu_custom_call.1} parent=55 // pred_check
          %p372 = pneg %p92
        $region66: #{tpu_custom_call.1} parent=55 // pred_check_branch
          %374 = sbr.rel (%p372) target = $region68
        $region67: #{tpu_custom_call.1} parent=55 // pred_region
          %375 = dma.done [#allocation6], 32
        $region68: #{tpu_custom_call.1} parent=55 // pred_fallthru
          _
        // Predicated region
        $region69: #{tpu_custom_call.1} parent=55 // pred_check
          %p376 = pneg %p113
        $region70: #{tpu_custom_call.1} parent=55 // pred_check_branch
          %378 = sbr.rel (%p376) target = $region72
        $region71: #{tpu_custom_call.1} parent=55 // pred_region
          %379 = dma.done [#allocation9], 8192
        $region72: #{tpu_custom_call.1} parent=55 // pred_fallthru
          _
        // Predicated region
        $region73: #{tpu_custom_call.1} parent=55 // pred_check
          %p380 = pneg %p155
        $region74: #{tpu_custom_call.1} parent=55 // pred_check_branch
          %382 = sbr.rel (%p380) target = $region76
        $region75: #{tpu_custom_call.1} parent=55 // pred_region
          %383 = dma.done [#allocation9], 16384
        $region76: #{tpu_custom_call.1} parent=55 // pred_fallthru
          _
        // Predicated region
        $region77: #{tpu_custom_call.1} parent=55 // pred_check
          %p384 = pneg %p197
        $region78: #{tpu_custom_call.1} parent=55 // pred_check_branch
          %386 = sbr.rel (%p384) target = $region80
        $region79: #{tpu_custom_call.1} parent=55 // pred_region
          %387 = dma.done [#allocation12], 4096
        $region80: #{tpu_custom_call.1} parent=55 // pred_fallthru
          _
        %s388 = sand.u32 %s37, 1
        %s389 = scalar_lea.sflag [#allocation3], %s388
        %s390 = sand.u32 %s37, 1
        %s391 = smul.addr %s390, 16
        %s392 = scalar_lea.vmem [#allocation2], %s391
        %p393 = pneg %p50
        %p394 = pneg %p47
        %p395 = pneg %p71
        %p396 = pneg %p68
        %p397 = pneg %p92
        %p398 = pneg %p89
        %p399 = pneg %p113
        %p400 = pneg %p110
        %p401 = pneg %p134
        %p402 = pneg %p131
        %p403 = pneg %p155
        %p404 = pneg %p152
        %p405 = pneg %p176
        %p406 = pneg %p173
        %p407 = pneg %p197
        %p408 = pneg %p194
        %p409 = pneg %p218
        %p410 = pneg %p215
        %p411 = pneg %p244
        %p412 = pneg %p241
        %s413 = sand.u32 %s231, 1
        %s414 = scalar_lea.sflag [#allocation4], %s413
        %s415 = sand.u32 %s231, 1
        %s416 = smul.addr %s415, 8
        %s417 = scalar_lea.vmem [#allocation13], %s416
        %v423 = vld [vmem:[%s363] sm:$0xff]
        %v424 = vld [vmem:[%s363 + $0x8] sm:$0xff]
        %v425 = vadd.f32 %v423, %v424
        %426 = vadd.xlane.f32.xlu0 %v425
        %v427 = vpop.xlane.xlu0 %426
        %v428 = vmul.f32 %v423, %v423
        %v429 = vmul.f32 %v424, %v424
        %v430 = vadd.f32 %v428, %v429
        %431 = vadd.xlane.f32.xlu0 %v430
        %v432 = vpop.xlane.xlu0 %431
        %v433 = vmul.f32 %v427, 0.00390625
        %v434 = vmul.f32 %v432, 0.00390625
        %v435 = vmul.f32 %v433, %v433
        %v436 = vsub.f32 %v434, %v435
        %v437 = vmax.f32 %v436, 0.0
        %v438 = vsub.f32 %v423, %v433
        %v439 = vsub.f32 %v424, %v433
        %v440 = vadd.f32 %v437, 1e-05
        %v441 = vrsqrt.pop %v440
        %v442 = vmul.f32 %v438, %v441
        %v443 = vmul.f32 %v439, %v441
        %v444 = vld [vmem:[#allocation5] sm:$0x3]
        %v446 = vlaneseq
        %v447 = vshrl.u32 %v446, 7
        %v448 = vsub.s32 0, %v447
        %v449 = vrot.slane %v444, %v448
        %v450 = vlaneseq
        %v451 = vshrl.u32 %v450, 7
        %v452 = vsub.s32 1, %v451
        %v453 = vrot.slane %v444, %v452
        %v456 = vmul.f32 %v442, %v449
        %v457 = vmul.f32 %v443, %v453
        %v458 = vld [vmem:[#allocation7] sm:$0x3]
        %v460 = vlaneseq
        %v461 = vshrl.u32 %v460, 7
        %v462 = vsub.s32 0, %v461
        %v463 = vrot.slane %v458, %v462
        %v464 = vlaneseq
        %v465 = vshrl.u32 %v464, 7
        %v466 = vsub.s32 1, %v465
        %v467 = vrot.slane %v458, %v466
        %v470 = vadd.f32 %v456, %v463
        %v471 = vadd.f32 %v457, %v467
        %v472 = vpack.c.bf16 %v470, %v470
        %v473 = vpack.c.bf16 %v471, %v471
        %v474 = vld [vmem:[#allocation8] sm:$0xff]
        %v475 = vld [vmem:[#allocation8 + $0x8] sm:$0xff]
        %v476 = vld [vmem:[#allocation8 + $0x10] sm:$0xff]
        %v477 = vld [vmem:[#allocation8 + $0x18] sm:$0xff]
        %v478 = vld [vmem:[#allocation8 + $0x20] sm:$0xff]
        %v479 = vld [vmem:[#allocation8 + $0x28] sm:$0xff]
        %v480 = vld [vmem:[#allocation8 + $0x30] sm:$0xff]
        %v481 = vld [vmem:[#allocation8 + $0x38] sm:$0xff]
        %v482 = vld [vmem:[#allocation8 + $0x40] sm:$0xff]
        %v483 = vld [vmem:[#allocation8 + $0x48] sm:$0xff]
        %v484 = vld [vmem:[#allocation8 + $0x50] sm:$0xff]
        %v485 = vld [vmem:[#allocation8 + $0x58] sm:$0xff]
        %v486 = vld [vmem:[#allocation8 + $0x60] sm:$0xff]
        %v487 = vld [vmem:[#allocation8 + $0x68] sm:$0xff]
        %v488 = vld [vmem:[#allocation8 + $0x70] sm:$0xff]
        %v489 = vld [vmem:[#allocation8 + $0x78] sm:$0xff]
        %v490 = vld [vmem:[#allocation8 + $0x80] sm:$0xff]
        %v491 = vld [vmem:[#allocation8 + $0x88] sm:$0xff]
        %v492 = vld [vmem:[#allocation8 + $0x90] sm:$0xff]
        %v493 = vld [vmem:[#allocation8 + $0x98] sm:$0xff]
        %v494 = vld [vmem:[#allocation8 + $0xa0] sm:$0xff]
        %v495 = vld [vmem:[#allocation8 + $0xa8] sm:$0xff]
        %v496 = vld [vmem:[#allocation8 + $0xb0] sm:$0xff]
        %v497 = vld [vmem:[#allocation8 + $0xb8] sm:$0xff]
        %v498 = vld [vmem:[#allocation8 + $0xc0] sm:$0xff]
        %v499 = vld [vmem:[#allocation8 + $0xc8] sm:$0xff]
        %v500 = vld [vmem:[#allocation8 + $0xd0] sm:$0xff]
        %v501 = vld [vmem:[#allocation8 + $0xd8] sm:$0xff]
        %v502 = vld [vmem:[#allocation8 + $0xe0] sm:$0xff]
        %v503 = vld [vmem:[#allocation8 + $0xe8] sm:$0xff]
        %v504 = vld [vmem:[#allocation8 + $0xf0] sm:$0xff]
        %v505 = vld [vmem:[#allocation8 + $0xf8] sm:$0xff]
        %v506 = vld [vmem:[#allocation8 + $0x100] sm:$0xff]
        %v507 = vld [vmem:[#allocation8 + $0x108] sm:$0xff]
        %v508 = vld [vmem:[#allocation8 + $0x110] sm:$0xff]
        %v509 = vld [vmem:[#allocation8 + $0x118] sm:$0xff]
        %v510 = vld [vmem:[#allocation8 + $0x120] sm:$0xff]
        %v511 = vld [vmem:[#allocation8 + $0x128] sm:$0xff]
        %v512 = vld [vmem:[#allocation8 + $0x130] sm:$0xff]
        %v513 = vld [vmem:[#allocation8 + $0x138] sm:$0xff]
        %v514 = vld [vmem:[#allocation8 + $0x140] sm:$0xff]
        %v515 = vld [vmem:[#allocation8 + $0x148] sm:$0xff]
        %v516 = vld [vmem:[#allocation8 + $0x150] sm:$0xff]
        %v517 = vld [vmem:[#allocation8 + $0x158] sm:$0xff]
        %v518 = vld [vmem:[#allocation8 + $0x160] sm:$0xff]
        %v519 = vld [vmem:[#allocation8 + $0x168] sm:$0xff]
        %v520 = vld [vmem:[#allocation8 + $0x170] sm:$0xff]
        %v521 = vld [vmem:[#allocation8 + $0x178] sm:$0xff]
        %v522 = vld [vmem:[#allocation8 + $0x180] sm:$0xff]
        %v523 = vld [vmem:[#allocation8 + $0x188] sm:$0xff]
        %v524 = vld [vmem:[#allocation8 + $0x190] sm:$0xff]
        %v525 = vld [vmem:[#allocation8 + $0x198] sm:$0xff]
        %v526 = vld [vmem:[#allocation8 + $0x1a0] sm:$0xff]
        %v527 = vld [vmem:[#allocation8 + $0x1a8] sm:$0xff]
        %v528 = vld [vmem:[#allocation8 + $0x1b0] sm:$0xff]
        %v529 = vld [vmem:[#allocation8 + $0x1b8] sm:$0xff]
        %v530 = vld [vmem:[#allocation8 + $0x1c0] sm:$0xff]
        %v531 = vld [vmem:[#allocation8 + $0x1c8] sm:$0xff]
        %v532 = vld [vmem:[#allocation8 + $0x1d0] sm:$0xff]
        %v533 = vld [vmem:[#allocation8 + $0x1d8] sm:$0xff]
        %v534 = vld [vmem:[#allocation8 + $0x1e0] sm:$0xff]
        %v535 = vld [vmem:[#allocation8 + $0x1e8] sm:$0xff]
        %v536 = vld [vmem:[#allocation8 + $0x1f0] sm:$0xff]
        %v537 = vld [vmem:[#allocation8 + $0x1f8] sm:$0xff]
        %v602 = vunpack.c.l.b16 %v474
        %v603 = vunpack.c.h.b16 %v474
        %v604 = vunpack.c.l.b16 %v475
        %v605 = vunpack.c.h.b16 %v475
        %v606 = vunpack.c.l.b16 %v476
        %v607 = vunpack.c.h.b16 %v476
        %v608 = vunpack.c.l.b16 %v477
        %v609 = vunpack.c.h.b16 %v477
        %v610 = vunpack.c.l.b16 %v478
        %v611 = vunpack.c.h.b16 %v478
        %v612 = vunpack.c.l.b16 %v479
        %v613 = vunpack.c.h.b16 %v479
        %v614 = vunpack.c.l.b16 %v480
        %v615 = vunpack.c.h.b16 %v480
        %v616 = vunpack.c.l.b16 %v481
        %v617 = vunpack.c.h.b16 %v481
        %v618 = vunpack.c.l.b16 %v482
        %v619 = vunpack.c.h.b16 %v482
        %v620 = vunpack.c.l.b16 %v483
        %v621 = vunpack.c.h.b16 %v483
        %v622 = vunpack.c.l.b16 %v484
        %v623 = vunpack.c.h.b16 %v484
        %v624 = vunpack.c.l.b16 %v485
        %v625 = vunpack.c.h.b16 %v485
        %v626 = vunpack.c.l.b16 %v486
        %v627 = vunpack.c.h.b16 %v486
        %v628 = vunpack.c.l.b16 %v487
        %v629 = vunpack.c.h.b16 %v487
        %v630 = vunpack.c.l.b16 %v488
        %v631 = vunpack.c.h.b16 %v488
        %v632 = vunpack.c.l.b16 %v489
        %v633 = vunpack.c.h.b16 %v489
        %v634 = vunpack.c.l.b16 %v490
        %v635 = vunpack.c.h.b16 %v490
        %v636 = vunpack.c.l.b16 %v491
        %v637 = vunpack.c.h.b16 %v491
        %v638 = vunpack.c.l.b16 %v492
        %v639 = vunpack.c.h.b16 %v492
        %v640 = vunpack.c.l.b16 %v493
        %v641 = vunpack.c.h.b16 %v493
        %v642 = vunpack.c.l.b16 %v494
        %v643 = vunpack.c.h.b16 %v494
        %v644 = vunpack.c.l.b16 %v495
        %v645 = vunpack.c.h.b16 %v495
        %v646 = vunpack.c.l.b16 %v496
        %v647 = vunpack.c.h.b16 %v496
        %v648 = vunpack.c.l.b16 %v497
        %v649 = vunpack.c.h.b16 %v497
        %v650 = vunpack.c.l.b16 %v498
        %v651 = vunpack.c.h.b16 %v498
        %v652 = vunpack.c.l.b16 %v499
        %v653 = vunpack.c.h.b16 %v499
        %v654 = vunpack.c.l.b16 %v500
        %v655 = vunpack.c.h.b16 %v500
        %v656 = vunpack.c.l.b16 %v501
        %v657 = vunpack.c.h.b16 %v501
        %v658 = vunpack.c.l.b16 %v502
        %v659 = vunpack.c.h.b16 %v502
        %v660 = vunpack.c.l.b16 %v503
        %v661 = vunpack.c.h.b16 %v503
        %v662 = vunpack.c.l.b16 %v504
        %v663 = vunpack.c.h.b16 %v504
        %v664 = vunpack.c.l.b16 %v505
        %v665 = vunpack.c.h.b16 %v505
        %v666 = vunpack.c.l.b16 %v506
        %v667 = vunpack.c.h.b16 %v506
        %v668 = vunpack.c.l.b16 %v507
        %v669 = vunpack.c.h.b16 %v507
        %v670 = vunpack.c.l.b16 %v508
        %v671 = vunpack.c.h.b16 %v508
        %v672 = vunpack.c.l.b16 %v509
        %v673 = vunpack.c.h.b16 %v509
        %v674 = vunpack.c.l.b16 %v510
        %v675 = vunpack.c.h.b16 %v510
        %v676 = vunpack.c.l.b16 %v511
        %v677 = vunpack.c.h.b16 %v511
        %v678 = vunpack.c.l.b16 %v512
        %v679 = vunpack.c.h.b16 %v512
        %v680 = vunpack.c.l.b16 %v513
        %v681 = vunpack.c.h.b16 %v513
        %v682 = vunpack.c.l.b16 %v514
        %v683 = vunpack.c.h.b16 %v514
        %v684 = vunpack.c.l.b16 %v515
        %v685 = vunpack.c.h.b16 %v515
        %v686 = vunpack.c.l.b16 %v516
        %v687 = vunpack.c.h.b16 %v516
        %v688 = vunpack.c.l.b16 %v517
        %v689 = vunpack.c.h.b16 %v517
        %v690 = vunpack.c.l.b16 %v518
        %v691 = vunpack.c.h.b16 %v518
        %v692 = vunpack.c.l.b16 %v519
        %v693 = vunpack.c.h.b16 %v519
        %v694 = vunpack.c.l.b16 %v520
        %v695 = vunpack.c.h.b16 %v520
        %v696 = vunpack.c.l.b16 %v521
        %v697 = vunpack.c.h.b16 %v521
        %v698 = vunpack.c.l.b16 %v522
        %v699 = vunpack.c.h.b16 %v522
        %v700 = vunpack.c.l.b16 %v523
        %v701 = vunpack.c.h.b16 %v523
        %v702 = vunpack.c.l.b16 %v524
        %v703 = vunpack.c.h.b16 %v524
        %v704 = vunpack.c.l.b16 %v525
        %v705 = vunpack.c.h.b16 %v525
        %v706 = vunpack.c.l.b16 %v526
        %v707 = vunpack.c.h.b16 %v526
        %v708 = vunpack.c.l.b16 %v527
        %v709 = vunpack.c.h.b16 %v527
        %v710 = vunpack.c.l.b16 %v528
        %v711 = vunpack.c.h.b16 %v528
        %v712 = vunpack.c.l.b16 %v529
        %v713 = vunpack.c.h.b16 %v529
        %v714 = vunpack.c.l.b16 %v530
        %v715 = vunpack.c.h.b16 %v530
        %v716 = vunpack.c.l.b16 %v531
        %v717 = vunpack.c.h.b16 %v531
        %v718 = vunpack.c.l.b16 %v532
        %v719 = vunpack.c.h.b16 %v532
        %v720 = vunpack.c.l.b16 %v533
        %v721 = vunpack.c.h.b16 %v533
        %v722 = vunpack.c.l.b16 %v534
        %v723 = vunpack.c.h.b16 %v534
        %v724 = vunpack.c.l.b16 %v535
        %v725 = vunpack.c.h.b16 %v535
        %v726 = vunpack.c.l.b16 %v536
        %v727 = vunpack.c.h.b16 %v536
        %v728 = vunpack.c.l.b16 %v537
        %v729 = vunpack.c.h.b16 %v537
        %v730 = vpack.c.b16 %v606, %v602
        %v731 = vpack.c.b16 %v607, %v603
        %v732 = vpack.c.b16 %v608, %v604
        %v733 = vpack.c.b16 %v609, %v605
        %v734 = vpack.c.b16 %v614, %v610
        %v735 = vpack.c.b16 %v615, %v611
        %v736 = vpack.c.b16 %v616, %v612
        %v737 = vpack.c.b16 %v617, %v613
        %v738 = vpack.c.b16 %v622, %v618
        %v739 = vpack.c.b16 %v623, %v619
        %v740 = vpack.c.b16 %v624, %v620
        %v741 = vpack.c.b16 %v625, %v621
        %v742 = vpack.c.b16 %v630, %v626
        %v743 = vpack.c.b16 %v631, %v627
        %v744 = vpack.c.b16 %v632, %v628
        %v745 = vpack.c.b16 %v633, %v629
        %v746 = vpack.c.b16 %v638, %v634
        %v747 = vpack.c.b16 %v639, %v635
        %v748 = vpack.c.b16 %v640, %v636
        %v749 = vpack.c.b16 %v641, %v637
        %v750 = vpack.c.b16 %v646, %v642
        %v751 = vpack.c.b16 %v647, %v643
        %v752 = vpack.c.b16 %v648, %v644
        %v753 = vpack.c.b16 %v649, %v645
        %v754 = vpack.c.b16 %v654, %v650
        %v755 = vpack.c.b16 %v655, %v651
        %v756 = vpack.c.b16 %v656, %v652
        %v757 = vpack.c.b16 %v657, %v653
        %v758 = vpack.c.b16 %v662, %v658
        %v759 = vpack.c.b16 %v663, %v659
        %v760 = vpack.c.b16 %v664, %v660
        %v761 = vpack.c.b16 %v665, %v661
        %v762 = vpack.c.b16 %v670, %v666
        %v763 = vpack.c.b16 %v671, %v667
        %v764 = vpack.c.b16 %v672, %v668
        %v765 = vpack.c.b16 %v673, %v669
        %v766 = vpack.c.b16 %v678, %v674
        %v767 = vpack.c.b16 %v679, %v675
        %v768 = vpack.c.b16 %v680, %v676
        %v769 = vpack.c.b16 %v681, %v677
        %v770 = vpack.c.b16 %v686, %v682
        %v771 = vpack.c.b16 %v687, %v683
        %v772 = vpack.c.b16 %v688, %v684
        %v773 = vpack.c.b16 %v689, %v685
        %v774 = vpack.c.b16 %v694, %v690
        %v775 = vpack.c.b16 %v695, %v691
        %v776 = vpack.c.b16 %v696, %v692
        %v777 = vpack.c.b16 %v697, %v693
        %v778 = vpack.c.b16 %v702, %v698
        %v779 = vpack.c.b16 %v703, %v699
        %v780 = vpack.c.b16 %v704, %v700
        %v781 = vpack.c.b16 %v705, %v701
        %v782 = vpack.c.b16 %v710, %v706
        %v783 = vpack.c.b16 %v711, %v707
        %v784 = vpack.c.b16 %v712, %v708
        %v785 = vpack.c.b16 %v713, %v709
        %v786 = vpack.c.b16 %v718, %v714
        %v787 = vpack.c.b16 %v719, %v715
        %v788 = vpack.c.b16 %v720, %v716
        %v789 = vpack.c.b16 %v721, %v717
        %v790 = vpack.c.b16 %v726, %v722
        %v791 = vpack.c.b16 %v727, %v723
        %v792 = vpack.c.b16 %v728, %v724
        %v793 = vpack.c.b16 %v729, %v725
        %858 = vmatprep.subr.bf16.mxu0 %v759
        %859 = vmatpush1.bf16.msra.mxu0 %v758
        %860 = vmatprep.subr.bf16.mxu0 %v755
        %861 = vmatpush1.bf16.msra.mxu0 %v754
        %862 = vmatprep.subr.bf16.mxu0 %v751
        %863 = vmatpush1.bf16.msra.mxu0 %v750
        %864 = vmatprep.subr.bf16.mxu0 %v747
        %865 = vmatpush1.bf16.msra.mxu0 %v746
        %866 = vmatprep.subr.bf16.mxu0 %v743
        %867 = vmatpush1.bf16.msra.mxu0 %v742
        %868 = vmatprep.subr.bf16.mxu0 %v739
        %869 = vmatpush1.bf16.msra.mxu0 %v738
        %870 = vmatprep.subr.bf16.mxu0 %v735
        %871 = vmatpush1.bf16.msra.mxu0 %v734
        %872 = vmatprep.subr.bf16.mxu0 %v731
        %873 = vmatpush1.bf16.msra.mxu0 %v730
        %874 = vmatprep.subr.bf16.mxu0 %v791
        %875 = vmatpush2.bf16.msra.mxu0 %v790
        %876 = vmatprep.subr.bf16.mxu0 %v787
        %877 = vmatpush2.bf16.msra.mxu0 %v786
        %878 = vmatprep.subr.bf16.mxu0 %v783
        %879 = vmatpush2.bf16.msra.mxu0 %v782
        %880 = vmatprep.subr.bf16.mxu0 %v779
        %881 = vmatpush2.bf16.msra.mxu0 %v778
        %882 = vmatprep.subr.bf16.mxu0 %v775
        %883 = vmatpush2.bf16.msra.mxu0 %v774
        %884 = vmatprep.subr.bf16.mxu0 %v771
        %885 = vmatpush2.bf16.msra.mxu0 %v770
        %886 = vmatprep.subr.bf16.mxu0 %v767
        %887 = vmatpush2.bf16.msra.mxu0 %v766
        %888 = vmatprep.subr.bf16.mxu0 %v763
        %889 = vmatpush2.bf16.msra.mxu0 %v762
        %890 = vmatprep.mubr.bf16.mxu0 %v473
        %891 = vmatmul.mubr.bf16.gmra.mxu0 %v472
        %v892 = vpop.f32.mrf.mxu0
        %v893 = vadd.f32 0.0, %v892
        %v894 = vpop.f32.mrf.mxu0
        %v895 = vadd.f32 0.0, %v894
        %v896 = vpop.f32.mrf.mxu0
        %v897 = vpop.f32.mrf.mxu0
        %898 = vdwg.mxu0
        %899 = vmatprep.subr.bf16.mxu0 %v761
        %900 = vmatpush1.bf16.msra.mxu0 %v760
        %901 = vmatprep.subr.bf16.mxu0 %v757
        %902 = vmatpush1.bf16.msra.mxu0 %v756
        %903 = vmatprep.subr.bf16.mxu0 %v753
        %904 = vmatpush1.bf16.msra.mxu0 %v752
        %905 = vmatprep.subr.bf16.mxu0 %v749
        %906 = vmatpush1.bf16.msra.mxu0 %v748
        %907 = vmatprep.subr.bf16.mxu0 %v745
        %908 = vmatpush1.bf16.msra.mxu0 %v744
        %909 = vmatprep.subr.bf16.mxu0 %v741
        %910 = vmatpush1.bf16.msra.mxu0 %v740
        %911 = vmatprep.subr.bf16.mxu0 %v737
        %912 = vmatpush1.bf16.msra.mxu0 %v736
        %913 = vmatprep.subr.bf16.mxu0 %v733
        %914 = vmatpush1.bf16.msra.mxu0 %v732
        %915 = vmatprep.subr.bf16.mxu0 %v793
        %916 = vmatpush2.bf16.msra.mxu0 %v792
        %917 = vmatprep.subr.bf16.mxu0 %v789
        %918 = vmatpush2.bf16.msra.mxu0 %v788
        %919 = vmatprep.subr.bf16.mxu0 %v785
        %920 = vmatpush2.bf16.msra.mxu0 %v784
        %921 = vmatprep.subr.bf16.mxu0 %v781
        %922 = vmatpush2.bf16.msra.mxu0 %v780
        %923 = vmatprep.subr.bf16.mxu0 %v777
        %924 = vmatpush2.bf16.msra.mxu0 %v776
        %925 = vmatprep.subr.bf16.mxu0 %v773
        %926 = vmatpush2.bf16.msra.mxu0 %v772
        %927 = vmatprep.subr.bf16.mxu0 %v769
        %928 = vmatpush2.bf16.msra.mxu0 %v768
        %929 = vmatprep.subr.bf16.mxu0 %v765
        %930 = vmatpush2.bf16.msra.mxu0 %v764
        %931 = vmatprep.mubr.bf16.mxu0 %v473
        %932 = vmatmul.mubr.bf16.gmra.mxu0 %v472
        %v933 = vpop.f32.mrf.mxu0
        %v934 = vadd.f32 0.0, %v933
        %v935 = vpop.f32.mrf.mxu0
        %v936 = vadd.f32 0.0, %v935
        %v937 = vpop.f32.mrf.mxu0
        %v938 = vpop.f32.mrf.mxu0
        %939 = vdwg.mxu0
        %v940 = vpack.c.bf16 %v893, %v893
        %v941 = vpack.c.bf16 %v895, %v895
        %v942 = vpack.c.bf16 %v934, %v934
        %v943 = vpack.c.bf16 %v936, %v936
        %v944 = vld [vmem:[%s4] sm:$0xf]
        %v946 = vlaneseq
        %v947 = vshrl.u32 %v946, 7
        %v948 = vsub.s32 0, %v947
        %v949 = vrot.slane %v944, %v948
        %v950 = vlaneseq
        %v951 = vshrl.u32 %v950, 7
        %v952 = vsub.s32 1, %v951
        %v953 = vrot.slane %v944, %v952
        %v954 = vlaneseq
        %v955 = vshrl.u32 %v954, 7
        %v956 = vsub.s32 2, %v955
        %v957 = vrot.slane %v944, %v956
        %v958 = vlaneseq
        %v959 = vshrl.u32 %v958, 7
        %v960 = vsub.s32 3, %v959
        %v961 = vrot.slane %v944, %v960
        %v966 = vpack.c.bf16 %v949, %v949
        %v967 = vpack.c.bf16 %v953, %v953
        %v968 = vpack.c.bf16 %v957, %v957
        %v969 = vpack.c.bf16 %v961, %v961
        %v971 = vpack.i.b16 %v966, %v966
        %v973 = vlaneseq
        %v974 = vshrl.u32 %v973, 7
        %v975 = vsub.s32 0, %v974
        %v976 = vrot.slane %v971, %v975
        %v978 = vpack.i.b16 %v967, %v967
        %v980 = vlaneseq
        %v981 = vshrl.u32 %v980, 7
        %v982 = vsub.s32 0, %v981
        %v983 = vrot.slane %v978, %v982
        %v985 = vpack.i.b16 %v968, %v968
        %v987 = vlaneseq
        %v988 = vshrl.u32 %v987, 7
        %v989 = vsub.s32 0, %v988
        %v990 = vrot.slane %v985, %v989
        %v992 = vpack.i.b16 %v969, %v969
        %v994 = vlaneseq
        %v995 = vshrl.u32 %v994, 7
        %v996 = vsub.s32 0, %v995
        %v997 = vrot.slane %v992, %v996
        %v998 = vadd.bf16 %v940, %v976
        %v999 = vadd.bf16 %v941, %v983
        %v1000 = vadd.bf16 %v942, %v990
        %v1001 = vadd.bf16 %v943, %v997
        %v1002 = vmul.bf16 %v998, %v998
        %v1003 = vmul.bf16 %v999, %v999
        %v1004 = vmul.bf16 %v1000, %v1000
        %v1005 = vmul.bf16 %v1001, %v1001
        %v1006 = vmul.bf16 %v1002, %v998
        %v1007 = vmul.bf16 %v1003, %v999
        %v1008 = vmul.bf16 %v1004, %v1000
        %v1009 = vmul.bf16 %v1005, %v1001
        %v1010 = vmul.bf16 %v1006, 1027030327
        %v1011 = vmul.bf16 %v1007, 1027030327
        %v1012 = vmul.bf16 %v1008, 1027030327
        %v1013 = vmul.bf16 %v1009, 1027030327
        %v1014 = vadd.bf16 %v998, %v1010
        %v1015 = vadd.bf16 %v999, %v1011
        %v1016 = vadd.bf16 %v1000, %v1012
        %v1017 = vadd.bf16 %v1001, %v1013
        %v1018 = vmul.bf16 %v1014, 1061961548
        %v1019 = vmul.bf16 %v1015, 1061961548
        %v1020 = vmul.bf16 %v1016, 1061961548
        %v1021 = vmul.bf16 %v1017, 1061961548
        %v1022 = vmul.bf16 %v998, 1056980736
        %v1023 = vmul.bf16 %v999, 1056980736
        %v1024 = vmul.bf16 %v1000, 1056980736
        %v1025 = vmul.bf16 %v1001, 1056980736
        %v1026 = vtanh.bf16.pop %v1018
        %v1027 = vtanh.bf16.pop %v1019
        %v1028 = vtanh.bf16.pop %v1020
        %v1029 = vtanh.bf16.pop %v1021
        %v1030 = vadd.bf16 %v1026, 1065369472
        %v1031 = vadd.bf16 %v1027, 1065369472
        %v1032 = vadd.bf16 %v1028, 1065369472
        %v1033 = vadd.bf16 %v1029, 1065369472
        %v1034 = vmul.bf16 %v1022, %v1030
        %v1035 = vmul.bf16 %v1023, %v1031
        %v1036 = vmul.bf16 %v1024, %v1032
        %v1037 = vmul.bf16 %v1025, %v1033
        %v1038 = vld [vmem:[#allocation10] sm:$0xff]
        %v1039 = vld [vmem:[#allocation10 + $0x8] sm:$0xff]
        %v1040 = vld [vmem:[#allocation10 + $0x10] sm:$0xff]
        %v1041 = vld [vmem:[#allocation10 + $0x18] sm:$0xff]
        %v1042 = vld [vmem:[#allocation10 + $0x20] sm:$0xff]
        %v1043 = vld [vmem:[#allocation10 + $0x28] sm:$0xff]
        %v1044 = vld [vmem:[#allocation10 + $0x30] sm:$0xff]
        %v1045 = vld [vmem:[#allocation10 + $0x38] sm:$0xff]
        %v1046 = vld [vmem:[#allocation10 + $0x40] sm:$0xff]
        %v1047 = vld [vmem:[#allocation10 + $0x48] sm:$0xff]
        %v1048 = vld [vmem:[#allocation10 + $0x50] sm:$0xff]
        %v1049 = vld [vmem:[#allocation10 + $0x58] sm:$0xff]
        %v1050 = vld [vmem:[#allocation10 + $0x60] sm:$0xff]
        %v1051 = vld [vmem:[#allocation10 + $0x68] sm:$0xff]
        %v1052 = vld [vmem:[#allocation10 + $0x70] sm:$0xff]
        %v1053 = vld [vmem:[#allocation10 + $0x78] sm:$0xff]
        %v1054 = vld [vmem:[#allocation10 + $0x80] sm:$0xff]
        %v1055 = vld [vmem:[#allocation10 + $0x88] sm:$0xff]
        %v1056 = vld [vmem:[#allocation10 + $0x90] sm:$0xff]
        %v1057 = vld [vmem:[#allocation10 + $0x98] sm:$0xff]
        %v1058 = vld [vmem:[#allocation10 + $0xa0] sm:$0xff]
        %v1059 = vld [vmem:[#allocation10 + $0xa8] sm:$0xff]
        %v1060 = vld [vmem:[#allocation10 + $0xb0] sm:$0xff]
        %v1061 = vld [vmem:[#allocation10 + $0xb8] sm:$0xff]
        %v1062 = vld [vmem:[#allocation10 + $0xc0] sm:$0xff]
        %v1063 = vld [vmem:[#allocation10 + $0xc8] sm:$0xff]
        %v1064 = vld [vmem:[#allocation10 + $0xd0] sm:$0xff]
        %v1065 = vld [vmem:[#allocation10 + $0xd8] sm:$0xff]
        %v1066 = vld [vmem:[#allocation10 + $0xe0] sm:$0xff]
        %v1067 = vld [vmem:[#allocation10 + $0xe8] sm:$0xff]
        %v1068 = vld [vmem:[#allocation10 + $0xf0] sm:$0xff]
        %v1069 = vld [vmem:[#allocation10 + $0xf8] sm:$0xff]
        %v1070 = vld [vmem:[#allocation10 + $0x100] sm:$0xff]
        %v1071 = vld [vmem:[#allocation10 + $0x108] sm:$0xff]
        %v1072 = vld [vmem:[#allocation10 + $0x110] sm:$0xff]
        %v1073 = vld [vmem:[#allocation10 + $0x118] sm:$0xff]
        %v1074 = vld [vmem:[#allocation10 + $0x120] sm:$0xff]
        %v1075 = vld [vmem:[#allocation10 + $0x128] sm:$0xff]
        %v1076 = vld [vmem:[#allocation10 + $0x130] sm:$0xff]
        %v1077 = vld [vmem:[#allocation10 + $0x138] sm:$0xff]
        %v1078 = vld [vmem:[#allocation10 + $0x140] sm:$0xff]
        %v1079 = vld [vmem:[#allocation10 + $0x148] sm:$0xff]
        %v1080 = vld [vmem:[#allocation10 + $0x150] sm:$0xff]
        %v1081 = vld [vmem:[#allocation10 + $0x158] sm:$0xff]
        %v1082 = vld [vmem:[#allocation10 + $0x160] sm:$0xff]
        %v1083 = vld [vmem:[#allocation10 + $0x168] sm:$0xff]
        %v1084 = vld [vmem:[#allocation10 + $0x170] sm:$0xff]
        %v1085 = vld [vmem:[#allocation10 + $0x178] sm:$0xff]
        %v1086 = vld [vmem:[#allocation10 + $0x180] sm:$0xff]
        %v1087 = vld [vmem:[#allocation10 + $0x188] sm:$0xff]
        %v1088 = vld [vmem:[#allocation10 + $0x190] sm:$0xff]
        %v1089 = vld [vmem:[#allocation10 + $0x198] sm:$0xff]
        %v1090 = vld [vmem:[#allocation10 + $0x1a0] sm:$0xff]
        %v1091 = vld [vmem:[#allocation10 + $0x1a8] sm:$0xff]
        %v1092 = vld [vmem:[#allocation10 + $0x1b0] sm:$0xff]
        %v1093 = vld [vmem:[#allocation10 + $0x1b8] sm:$0xff]
        %v1094 = vld [vmem:[#allocation10 + $0x1c0] sm:$0xff]
        %v1095 = vld [vmem:[#allocation10 + $0x1c8] sm:$0xff]
        %v1096 = vld [vmem:[#allocation10 + $0x1d0] sm:$0xff]
        %v1097 = vld [vmem:[#allocation10 + $0x1d8] sm:$0xff]
        %v1098 = vld [vmem:[#allocation10 + $0x1e0] sm:$0xff]
        %v1099 = vld [vmem:[#allocation10 + $0x1e8] sm:$0xff]
        %v1100 = vld [vmem:[#allocation10 + $0x1f0] sm:$0xff]
        %v1101 = vld [vmem:[#allocation10 + $0x1f8] sm:$0xff]
        %v1102 = vld [vmem:[#allocation10 + $0x200] sm:$0xff]
        %v1103 = vld [vmem:[#allocation10 + $0x208] sm:$0xff]
        %v1104 = vld [vmem:[#allocation10 + $0x210] sm:$0xff]
        %v1105 = vld [vmem:[#allocation10 + $0x218] sm:$0xff]
        %v1106 = vld [vmem:[#allocation10 + $0x220] sm:$0xff]
        %v1107 = vld [vmem:[#allocation10 + $0x228] sm:$0xff]
        %v1108 = vld [vmem:[#allocation10 + $0x230] sm:$0xff]
        %v1109 = vld [vmem:[#allocation10 + $0x238] sm:$0xff]
        %v1110 = vld [vmem:[#allocation10 + $0x240] sm:$0xff]
        %v1111 = vld [vmem:[#allocation10 + $0x248] sm:$0xff]
        %v1112 = vld [vmem:[#allocation10 + $0x250] sm:$0xff]
        %v1113 = vld [vmem:[#allocation10 + $0x258] sm:$0xff]
        %v1114 = vld [vmem:[#allocation10 + $0x260] sm:$0xff]
        %v1115 = vld [vmem:[#allocation10 + $0x268] sm:$0xff]
        %v1116 = vld [vmem:[#allocation10 + $0x270] sm:$0xff]
        %v1117 = vld [vmem:[#allocation10 + $0x278] sm:$0xff]
        %v1118 = vld [vmem:[#allocation10 + $0x280] sm:$0xff]
        %v1119 = vld [vmem:[#allocation10 + $0x288] sm:$0xff]
        %v1120 = vld [vmem:[#allocation10 + $0x290] sm:$0xff]
        %v1121 = vld [vmem:[#allocation10 + $0x298] sm:$0xff]
        %v1122 = vld [vmem:[#allocation10 + $0x2a0] sm:$0xff]
        %v1123 = vld [vmem:[#allocation10 + $0x2a8] sm:$0xff]
        %v1124 = vld [vmem:[#allocation10 + $0x2b0] sm:$0xff]
        %v1125 = vld [vmem:[#allocation10 + $0x2b8] sm:$0xff]
        %v1126 = vld [vmem:[#allocation10 + $0x2c0] sm:$0xff]
        %v1127 = vld [vmem:[#allocation10 + $0x2c8] sm:$0xff]
        %v1128 = vld [vmem:[#allocation10 + $0x2d0] sm:$0xff]
        %v1129 = vld [vmem:[#allocation10 + $0x2d8] sm:$0xff]
        %v1130 = vld [vmem:[#allocation10 + $0x2e0] sm:$0xff]
        %v1131 = vld [vmem:[#allocation10 + $0x2e8] sm:$0xff]
        %v1132 = vld [vmem:[#allocation10 + $0x2f0] sm:$0xff]
        %v1133 = vld [vmem:[#allocation10 + $0x2f8] sm:$0xff]
        %v1134 = vld [vmem:[#allocation10 + $0x300] sm:$0xff]
        %v1135 = vld [vmem:[#allocation10 + $0x308] sm:$0xff]
        %v1136 = vld [vmem:[#allocation10 + $0x310] sm:$0xff]
        %v1137 = vld [vmem:[#allocation10 + $0x318] sm:$0xff]
        %v1138 = vld [vmem:[#allocation10 + $0x320] sm:$0xff]
        %v1139 = vld [vmem:[#allocation10 + $0x328] sm:$0xff]
        %v1140 = vld [vmem:[#allocation10 + $0x330] sm:$0xff]
        %v1141 = vld [vmem:[#allocation10 + $0x338] sm:$0xff]
        %v1142 = vld [vmem:[#allocation10 + $0x340] sm:$0xff]
        %v1143 = vld [vmem:[#allocation10 + $0x348] sm:$0xff]
        %v1144 = vld [vmem:[#allocation10 + $0x350] sm:$0xff]
        %v1145 = vld [vmem:[#allocation10 + $0x358] sm:$0xff]
        %v1146 = vld [vmem:[#allocation10 + $0x360] sm:$0xff]
        %v1147 = vld [vmem:[#allocation10 + $0x368] sm:$0xff]
        %v1148 = vld [vmem:[#allocation10 + $0x370] sm:$0xff]
        %v1149 = vld [vmem:[#allocation10 + $0x378] sm:$0xff]
        %v1150 = vld [vmem:[#allocation10 + $0x380] sm:$0xff]
        %v1151 = vld [vmem:[#allocation10 + $0x388] sm:$0xff]
        %v1152 = vld [vmem:[#allocation10 + $0x390] sm:$0xff]
        %v1153 = vld [vmem:[#allocation10 + $0x398] sm:$0xff]
        %v1154 = vld [vmem:[#allocation10 + $0x3a0] sm:$0xff]
        %v1155 = vld [vmem:[#allocation10 + $0x3a8] sm:$0xff]
        %v1156 = vld [vmem:[#allocation10 + $0x3b0] sm:$0xff]
        %v1157 = vld [vmem:[#allocation10 + $0x3b8] sm:$0xff]
        %v1158 = vld [vmem:[#allocation10 + $0x3c0] sm:$0xff]
        %v1159 = vld [vmem:[#allocation10 + $0x3c8] sm:$0xff]
        %v1160 = vld [vmem:[#allocation10 + $0x3d0] sm:$0xff]
        %v1161 = vld [vmem:[#allocation10 + $0x3d8] sm:$0xff]
        %v1162 = vld [vmem:[#allocation10 + $0x3e0] sm:$0xff]
        %v1163 = vld [vmem:[#allocation10 + $0x3e8] sm:$0xff]
        %v1164 = vld [vmem:[#allocation10 + $0x3f0] sm:$0xff]
        %v1165 = vld [vmem:[#allocation10 + $0x3f8] sm:$0xff]
        %v1294 = vunpack.c.l.b16 %v1038
        %v1295 = vunpack.c.h.b16 %v1038
        %v1296 = vunpack.c.l.b16 %v1039
        %v1297 = vunpack.c.h.b16 %v1039
        %v1298 = vunpack.c.l.b16 %v1040
        %v1299 = vunpack.c.h.b16 %v1040
        %v1300 = vunpack.c.l.b16 %v1041
        %v1301 = vunpack.c.h.b16 %v1041
        %v1302 = vunpack.c.l.b16 %v1042
        %v1303 = vunpack.c.h.b16 %v1042
        %v1304 = vunpack.c.l.b16 %v1043
        %v1305 = vunpack.c.h.b16 %v1043
        %v1306 = vunpack.c.l.b16 %v1044
        %v1307 = vunpack.c.h.b16 %v1044
        %v1308 = vunpack.c.l.b16 %v1045
        %v1309 = vunpack.c.h.b16 %v1045
        %v1310 = vunpack.c.l.b16 %v1046
        %v1311 = vunpack.c.h.b16 %v1046
        %v1312 = vunpack.c.l.b16 %v1047
        %v1313 = vunpack.c.h.b16 %v1047
        %v1314 = vunpack.c.l.b16 %v1048
        %v1315 = vunpack.c.h.b16 %v1048
        %v1316 = vunpack.c.l.b16 %v1049
        %v1317 = vunpack.c.h.b16 %v1049
        %v1318 = vunpack.c.l.b16 %v1050
        %v1319 = vunpack.c.h.b16 %v1050
        %v1320 = vunpack.c.l.b16 %v1051
        %v1321 = vunpack.c.h.b16 %v1051
        %v1322 = vunpack.c.l.b16 %v1052
        %v1323 = vunpack.c.h.b16 %v1052
        %v1324 = vunpack.c.l.b16 %v1053
        %v1325 = vunpack.c.h.b16 %v1053
        %v1326 = vunpack.c.l.b16 %v1054
        %v1327 = vunpack.c.h.b16 %v1054
        %v1328 = vunpack.c.l.b16 %v1055
        %v1329 = vunpack.c.h.b16 %v1055
        %v1330 = vunpack.c.l.b16 %v1056
        %v1331 = vunpack.c.h.b16 %v1056
        %v1332 = vunpack.c.l.b16 %v1057
        %v1333 = vunpack.c.h.b16 %v1057
        %v1334 = vunpack.c.l.b16 %v1058
        %v1335 = vunpack.c.h.b16 %v1058
        %v1336 = vunpack.c.l.b16 %v1059
        %v1337 = vunpack.c.h.b16 %v1059
        %v1338 = vunpack.c.l.b16 %v1060
        %v1339 = vunpack.c.h.b16 %v1060
        %v1340 = vunpack.c.l.b16 %v1061
        %v1341 = vunpack.c.h.b16 %v1061
        %v1342 = vunpack.c.l.b16 %v1062
        %v1343 = vunpack.c.h.b16 %v1062
        %v1344 = vunpack.c.l.b16 %v1063
        %v1345 = vunpack.c.h.b16 %v1063
        %v1346 = vunpack.c.l.b16 %v1064
        %v1347 = vunpack.c.h.b16 %v1064
        %v1348 = vunpack.c.l.b16 %v1065
        %v1349 = vunpack.c.h.b16 %v1065
        %v1350 = vunpack.c.l.b16 %v1066
        %v1351 = vunpack.c.h.b16 %v1066
        %v1352 = vunpack.c.l.b16 %v1067
        %v1353 = vunpack.c.h.b16 %v1067
        %v1354 = vunpack.c.l.b16 %v1068
        %v1355 = vunpack.c.h.b16 %v1068
        %v1356 = vunpack.c.l.b16 %v1069
        %v1357 = vunpack.c.h.b16 %v1069
        %v1358 = vunpack.c.l.b16 %v1070
        %v1359 = vunpack.c.h.b16 %v1070
        %v1360 = vunpack.c.l.b16 %v1071
        %v1361 = vunpack.c.h.b16 %v1071
        %v1362 = vunpack.c.l.b16 %v1072
        %v1363 = vunpack.c.h.b16 %v1072
        %v1364 = vunpack.c.l.b16 %v1073
        %v1365 = vunpack.c.h.b16 %v1073
        %v1366 = vunpack.c.l.b16 %v1074
        %v1367 = vunpack.c.h.b16 %v1074
        %v1368 = vunpack.c.l.b16 %v1075
        %v1369 = vunpack.c.h.b16 %v1075
        %v1370 = vunpack.c.l.b16 %v1076
        %v1371 = vunpack.c.h.b16 %v1076
        %v1372 = vunpack.c.l.b16 %v1077
        %v1373 = vunpack.c.h.b16 %v1077
        %v1374 = vunpack.c.l.b16 %v1078
        %v1375 = vunpack.c.h.b16 %v1078
        %v1376 = vunpack.c.l.b16 %v1079
        %v1377 = vunpack.c.h.b16 %v1079
        %v1378 = vunpack.c.l.b16 %v1080
        %v1379 = vunpack.c.h.b16 %v1080
        %v1380 = vunpack.c.l.b16 %v1081
        %v1381 = vunpack.c.h.b16 %v1081
        %v1382 = vunpack.c.l.b16 %v1082
        %v1383 = vunpack.c.h.b16 %v1082
        %v1384 = vunpack.c.l.b16 %v1083
        %v1385 = vunpack.c.h.b16 %v1083
        %v1386 = vunpack.c.l.b16 %v1084
        %v1387 = vunpack.c.h.b16 %v1084
        %v1388 = vunpack.c.l.b16 %v1085
        %v1389 = vunpack.c.h.b16 %v1085
        %v1390 = vunpack.c.l.b16 %v1086
        %v1391 = vunpack.c.h.b16 %v1086
        %v1392 = vunpack.c.l.b16 %v1087
        %v1393 = vunpack.c.h.b16 %v1087
        %v1394 = vunpack.c.l.b16 %v1088
        %v1395 = vunpack.c.h.b16 %v1088
        %v1396 = vunpack.c.l.b16 %v1089
        %v1397 = vunpack.c.h.b16 %v1089
        %v1398 = vunpack.c.l.b16 %v1090
        %v1399 = vunpack.c.h.b16 %v1090
        %v1400 = vunpack.c.l.b16 %v1091
        %v1401 = vunpack.c.h.b16 %v1091
        %v1402 = vunpack.c.l.b16 %v1092
        %v1403 = vunpack.c.h.b16 %v1092
        %v1404 = vunpack.c.l.b16 %v1093
        %v1405 = vunpack.c.h.b16 %v1093
        %v1406 = vunpack.c.l.b16 %v1094
        %v1407 = vunpack.c.h.b16 %v1094
        %v1408 = vunpack.c.l.b16 %v1095
        %v1409 = vunpack.c.h.b16 %v1095
        %v1410 = vunpack.c.l.b16 %v1096
        %v1411 = vunpack.c.h.b16 %v1096
        %v1412 = vunpack.c.l.b16 %v1097
        %v1413 = vunpack.c.h.b16 %v1097
        %v1414 = vunpack.c.l.b16 %v1098
        %v1415 = vunpack.c.h.b16 %v1098
        %v1416 = vunpack.c.l.b16 %v1099
        %v1417 = vunpack.c.h.b16 %v1099
        %v1418 = vunpack.c.l.b16 %v1100
        %v1419 = vunpack.c.h.b16 %v1100
        %v1420 = vunpack.c.l.b16 %v1101
        %v1421 = vunpack.c.h.b16 %v1101
        %v1422 = vunpack.c.l.b16 %v1102
        %v1423 = vunpack.c.h.b16 %v1102
        %v1424 = vunpack.c.l.b16 %v1103
        %v1425 = vunpack.c.h.b16 %v1103
        %v1426 = vunpack.c.l.b16 %v1104
        %v1427 = vunpack.c.h.b16 %v1104
        %v1428 = vunpack.c.l.b16 %v1105
        %v1429 = vunpack.c.h.b16 %v1105
        %v1430 = vunpack.c.l.b16 %v1106
        %v1431 = vunpack.c.h.b16 %v1106
        %v1432 = vunpack.c.l.b16 %v1107
        %v1433 = vunpack.c.h.b16 %v1107
        %v1434 = vunpack.c.l.b16 %v1108
        %v1435 = vunpack.c.h.b16 %v1108
        %v1436 = vunpack.c.l.b16 %v1109
        %v1437 = vunpack.c.h.b16 %v1109
        %v1438 = vunpack.c.l.b16 %v1110
        %v1439 = vunpack.c.h.b16 %v1110
        %v1440 = vunpack.c.l.b16 %v1111
        %v1441 = vunpack.c.h.b16 %v1111
        %v1442 = vunpack.c.l.b16 %v1112
        %v1443 = vunpack.c.h.b16 %v1112
        %v1444 = vunpack.c.l.b16 %v1113
        %v1445 = vunpack.c.h.b16 %v1113
        %v1446 = vunpack.c.l.b16 %v1114
        %v1447 = vunpack.c.h.b16 %v1114
        %v1448 = vunpack.c.l.b16 %v1115
        %v1449 = vunpack.c.h.b16 %v1115
        %v1450 = vunpack.c.l.b16 %v1116
        %v1451 = vunpack.c.h.b16 %v1116
        %v1452 = vunpack.c.l.b16 %v1117
        %v1453 = vunpack.c.h.b16 %v1117
        %v1454 = vunpack.c.l.b16 %v1118
        %v1455 = vunpack.c.h.b16 %v1118
        %v1456 = vunpack.c.l.b16 %v1119
        %v1457 = vunpack.c.h.b16 %v1119
        %v1458 = vunpack.c.l.b16 %v1120
        %v1459 = vunpack.c.h.b16 %v1120
        %v1460 = vunpack.c.l.b16 %v1121
        %v1461 = vunpack.c.h.b16 %v1121
        %v1462 = vunpack.c.l.b16 %v1122
        %v1463 = vunpack.c.h.b16 %v1122
        %v1464 = vunpack.c.l.b16 %v1123
        %v1465 = vunpack.c.h.b16 %v1123
        %v1466 = vunpack.c.l.b16 %v1124
        %v1467 = vunpack.c.h.b16 %v1124
        %v1468 = vunpack.c.l.b16 %v1125
        %v1469 = vunpack.c.h.b16 %v1125
        %v1470 = vunpack.c.l.b16 %v1126
        %v1471 = vunpack.c.h.b16 %v1126
        %v1472 = vunpack.c.l.b16 %v1127
        %v1473 = vunpack.c.h.b16 %v1127
        %v1474 = vunpack.c.l.b16 %v1128
        %v1475 = vunpack.c.h.b16 %v1128
        %v1476 = vunpack.c.l.b16 %v1129
        %v1477 = vunpack.c.h.b16 %v1129
        %v1478 = vunpack.c.l.b16 %v1130
        %v1479 = vunpack.c.h.b16 %v1130
        %v1480 = vunpack.c.l.b16 %v1131
        %v1481 = vunpack.c.h.b16 %v1131
        %v1482 = vunpack.c.l.b16 %v1132
        %v1483 = vunpack.c.h.b16 %v1132
        %v1484 = vunpack.c.l.b16 %v1133
        %v1485 = vunpack.c.h.b16 %v1133
        %v1486 = vunpack.c.l.b16 %v1134
        %v1487 = vunpack.c.h.b16 %v1134
        %v1488 = vunpack.c.l.b16 %v1135
        %v1489 = vunpack.c.h.b16 %v1135
        %v1490 = vunpack.c.l.b16 %v1136
        %v1491 = vunpack.c.h.b16 %v1136
        %v1492 = vunpack.c.l.b16 %v1137
        %v1493 = vunpack.c.h.b16 %v1137
        %v1494 = vunpack.c.l.b16 %v1138
        %v1495 = vunpack.c.h.b16 %v1138
        %v1496 = vunpack.c.l.b16 %v1139
        %v1497 = vunpack.c.h.b16 %v1139
        %v1498 = vunpack.c.l.b16 %v1140
        %v1499 = vunpack.c.h.b16 %v1140
        %v1500 = vunpack.c.l.b16 %v1141
        %v1501 = vunpack.c.h.b16 %v1141
        %v1502 = vunpack.c.l.b16 %v1142
        %v1503 = vunpack.c.h.b16 %v1142
        %v1504 = vunpack.c.l.b16 %v1143
        %v1505 = vunpack.c.h.b16 %v1143
        %v1506 = vunpack.c.l.b16 %v1144
        %v1507 = vunpack.c.h.b16 %v1144
        %v1508 = vunpack.c.l.b16 %v1145
        %v1509 = vunpack.c.h.b16 %v1145
        %v1510 = vunpack.c.l.b16 %v1146
        %v1511 = vunpack.c.h.b16 %v1146
        %v1512 = vunpack.c.l.b16 %v1147
        %v1513 = vunpack.c.h.b16 %v1147
        %v1514 = vunpack.c.l.b16 %v1148
        %v1515 = vunpack.c.h.b16 %v1148
        %v1516 = vunpack.c.l.b16 %v1149
        %v1517 = vunpack.c.h.b16 %v1149
        %v1518 = vunpack.c.l.b16 %v1150
        %v1519 = vunpack.c.h.b16 %v1150
        %v1520 = vunpack.c.l.b16 %v1151
        %v1521 = vunpack.c.h.b16 %v1151
        %v1522 = vunpack.c.l.b16 %v1152
        %v1523 = vunpack.c.h.b16 %v1152
        %v1524 = vunpack.c.l.b16 %v1153
        %v1525 = vunpack.c.h.b16 %v1153
        %v1526 = vunpack.c.l.b16 %v1154
        %v1527 = vunpack.c.h.b16 %v1154
        %v1528 = vunpack.c.l.b16 %v1155
        %v1529 = vunpack.c.h.b16 %v1155
        %v1530 = vunpack.c.l.b16 %v1156
        %v1531 = vunpack.c.h.b16 %v1156
        %v1532 = vunpack.c.l.b16 %v1157
        %v1533 = vunpack.c.h.b16 %v1157
        %v1534 = vunpack.c.l.b16 %v1158
        %v1535 = vunpack.c.h.b16 %v1158
        %v1536 = vunpack.c.l.b16 %v1159
        %v1537 = vunpack.c.h.b16 %v1159
        %v1538 = vunpack.c.l.b16 %v1160
        %v1539 = vunpack.c.h.b16 %v1160
        %v1540 = vunpack.c.l.b16 %v1161
        %v1541 = vunpack.c.h.b16 %v1161
        %v1542 = vunpack.c.l.b16 %v1162
        %v1543 = vunpack.c.h.b16 %v1162
        %v1544 = vunpack.c.l.b16 %v1163
        %v1545 = vunpack.c.h.b16 %v1163
        %v1546 = vunpack.c.l.b16 %v1164
        %v1547 = vunpack.c.h.b16 %v1164
        %v1548 = vunpack.c.l.b16 %v1165
        %v1549 = vunpack.c.h.b16 %v1165
        %v1550 = vpack.c.b16 %v1298, %v1294
        %v1551 = vpack.c.b16 %v1299, %v1295
        %v1552 = vpack.c.b16 %v1300, %v1296
        %v1553 = vpack.c.b16 %v1301, %v1297
        %v1554 = vpack.c.b16 %v1306, %v1302
        %v1555 = vpack.c.b16 %v1307, %v1303
        %v1556 = vpack.c.b16 %v1308, %v1304
        %v1557 = vpack.c.b16 %v1309, %v1305
        %v1558 = vpack.c.b16 %v1314, %v1310
        %v1559 = vpack.c.b16 %v1315, %v1311
        %v1560 = vpack.c.b16 %v1316, %v1312
        %v1561 = vpack.c.b16 %v1317, %v1313
        %v1562 = vpack.c.b16 %v1322, %v1318
        %v1563 = vpack.c.b16 %v1323, %v1319
        %v1564 = vpack.c.b16 %v1324, %v1320
        %v1565 = vpack.c.b16 %v1325, %v1321
        %v1566 = vpack.c.b16 %v1330, %v1326
        %v1567 = vpack.c.b16 %v1331, %v1327
        %v1568 = vpack.c.b16 %v1332, %v1328
        %v1569 = vpack.c.b16 %v1333, %v1329
        %v1570 = vpack.c.b16 %v1338, %v1334
        %v1571 = vpack.c.b16 %v1339, %v1335
        %v1572 = vpack.c.b16 %v1340, %v1336
        %v1573 = vpack.c.b16 %v1341, %v1337
        %v1574 = vpack.c.b16 %v1346, %v1342
        %v1575 = vpack.c.b16 %v1347, %v1343
        %v1576 = vpack.c.b16 %v1348, %v1344
        %v1577 = vpack.c.b16 %v1349, %v1345
        %v1578 = vpack.c.b16 %v1354, %v1350
        %v1579 = vpack.c.b16 %v1355, %v1351
        %v1580 = vpack.c.b16 %v1356, %v1352
        %v1581 = vpack.c.b16 %v1357, %v1353
        %v1582 = vpack.c.b16 %v1362, %v1358
        %v1583 = vpack.c.b16 %v1363, %v1359
        %v1584 = vpack.c.b16 %v1364, %v1360
        %v1585 = vpack.c.b16 %v1365, %v1361
        %v1586 = vpack.c.b16 %v1370, %v1366
        %v1587 = vpack.c.b16 %v1371, %v1367
        %v1588 = vpack.c.b16 %v1372, %v1368
        %v1589 = vpack.c.b16 %v1373, %v1369
        %v1590 = vpack.c.b16 %v1378, %v1374
        %v1591 = vpack.c.b16 %v1379, %v1375
        %v1592 = vpack.c.b16 %v1380, %v1376
        %v1593 = vpack.c.b16 %v1381, %v1377
        %v1594 = vpack.c.b16 %v1386, %v1382
        %v1595 = vpack.c.b16 %v1387, %v1383
        %v1596 = vpack.c.b16 %v1388, %v1384
        %v1597 = vpack.c.b16 %v1389, %v1385
        %v1598 = vpack.c.b16 %v1394, %v1390
        %v1599 = vpack.c.b16 %v1395, %v1391
        %v1600 = vpack.c.b16 %v1396, %v1392
        %v1601 = vpack.c.b16 %v1397, %v1393
        %v1602 = vpack.c.b16 %v1402, %v1398
        %v1603 = vpack.c.b16 %v1403, %v1399
        %v1604 = vpack.c.b16 %v1404, %v1400
        %v1605 = vpack.c.b16 %v1405, %v1401
        %v1606 = vpack.c.b16 %v1410, %v1406
        %v1607 = vpack.c.b16 %v1411, %v1407
        %v1608 = vpack.c.b16 %v1412, %v1408
        %v1609 = vpack.c.b16 %v1413, %v1409
        %v1610 = vpack.c.b16 %v1418, %v1414
        %v1611 = vpack.c.b16 %v1419, %v1415
        %v1612 = vpack.c.b16 %v1420, %v1416
        %v1613 = vpack.c.b16 %v1421, %v1417
        %v1614 = vpack.c.b16 %v1426, %v1422
        %v1615 = vpack.c.b16 %v1427, %v1423
        %v1616 = vpack.c.b16 %v1428, %v1424
        %v1617 = vpack.c.b16 %v1429, %v1425
        %v1618 = vpack.c.b16 %v1434, %v1430
        %v1619 = vpack.c.b16 %v1435, %v1431
        %v1620 = vpack.c.b16 %v1436, %v1432
        %v1621 = vpack.c.b16 %v1437, %v1433
        %v1622 = vpack.c.b16 %v1442, %v1438
        %v1623 = vpack.c.b16 %v1443, %v1439
        %v1624 = vpack.c.b16 %v1444, %v1440
        %v1625 = vpack.c.b16 %v1445, %v1441
        %v1626 = vpack.c.b16 %v1450, %v1446
        %v1627 = vpack.c.b16 %v1451, %v1447
        %v1628 = vpack.c.b16 %v1452, %v1448
        %v1629 = vpack.c.b16 %v1453, %v1449
        %v1630 = vpack.c.b16 %v1458, %v1454
        %v1631 = vpack.c.b16 %v1459, %v1455
        %v1632 = vpack.c.b16 %v1460, %v1456
        %v1633 = vpack.c.b16 %v1461, %v1457
        %v1634 = vpack.c.b16 %v1466, %v1462
        %v1635 = vpack.c.b16 %v1467, %v1463
        %v1636 = vpack.c.b16 %v1468, %v1464
        %v1637 = vpack.c.b16 %v1469, %v1465
        %v1638 = vpack.c.b16 %v1474, %v1470
        %v1639 = vpack.c.b16 %v1475, %v1471
        %v1640 = vpack.c.b16 %v1476, %v1472
        %v1641 = vpack.c.b16 %v1477, %v1473
        %v1642 = vpack.c.b16 %v1482, %v1478
        %v1643 = vpack.c.b16 %v1483, %v1479
        %v1644 = vpack.c.b16 %v1484, %v1480
        %v1645 = vpack.c.b16 %v1485, %v1481
        %v1646 = vpack.c.b16 %v1490, %v1486
        %v1647 = vpack.c.b16 %v1491, %v1487
        %v1648 = vpack.c.b16 %v1492, %v1488
        %v1649 = vpack.c.b16 %v1493, %v1489
        %v1650 = vpack.c.b16 %v1498, %v1494
        %v1651 = vpack.c.b16 %v1499, %v1495
        %v1652 = vpack.c.b16 %v1500, %v1496
        %v1653 = vpack.c.b16 %v1501, %v1497
        %v1654 = vpack.c.b16 %v1506, %v1502
        %v1655 = vpack.c.b16 %v1507, %v1503
        %v1656 = vpack.c.b16 %v1508, %v1504
        %v1657 = vpack.c.b16 %v1509, %v1505
        %v1658 = vpack.c.b16 %v1514, %v1510
        %v1659 = vpack.c.b16 %v1515, %v1511
        %v1660 = vpack.c.b16 %v1516, %v1512
        %v1661 = vpack.c.b16 %v1517, %v1513
        %v1662 = vpack.c.b16 %v1522, %v1518
        %v1663 = vpack.c.b16 %v1523, %v1519
        %v1664 = vpack.c.b16 %v1524, %v1520
        %v1665 = vpack.c.b16 %v1525, %v1521
        %v1666 = vpack.c.b16 %v1530, %v1526
        %v1667 = vpack.c.b16 %v1531, %v1527
        %v1668 = vpack.c.b16 %v1532, %v1528
        %v1669 = vpack.c.b16 %v1533, %v1529
        %v1670 = vpack.c.b16 %v1538, %v1534
        %v1671 = vpack.c.b16 %v1539, %v1535
        %v1672 = vpack.c.b16 %v1540, %v1536
        %v1673 = vpack.c.b16 %v1541, %v1537
        %v1674 = vpack.c.b16 %v1546, %v1542
        %v1675 = vpack.c.b16 %v1547, %v1543
        %v1676 = vpack.c.b16 %v1548, %v1544
        %v1677 = vpack.c.b16 %v1549, %v1545
        %1806 = vmatprep.subr.bf16.mxu0 %v1579
        %1807 = vmatpush1.bf16.msra.mxu0 %v1578
        %1808 = vmatprep.subr.bf16.mxu0 %v1575
        %1809 = vmatpush1.bf16.msra.mxu0 %v1574
        %1810 = vmatprep.subr.bf16.mxu0 %v1571
        %1811 = vmatpush1.bf16.msra.mxu0 %v1570
        %1812 = vmatprep.subr.bf16.mxu0 %v1567
        %1813 = vmatpush1.bf16.msra.mxu0 %v1566
        %1814 = vmatprep.subr.bf16.mxu0 %v1563
        %1815 = vmatpush1.bf16.msra.mxu0 %v1562
        %1816 = vmatprep.subr.bf16.mxu0 %v1559
        %1817 = vmatpush1.bf16.msra.mxu0 %v1558
        %1818 = vmatprep.subr.bf16.mxu0 %v1555
        %1819 = vmatpush1.bf16.msra.mxu0 %v1554
        %1820 = vmatprep.subr.bf16.mxu0 %v1551
        %1821 = vmatpush1.bf16.msra.mxu0 %v1550
        %1822 = vmatprep.subr.bf16.mxu0 %v1611
        %1823 = vmatpush2.bf16.msra.mxu0 %v1610
        %1824 = vmatprep.subr.bf16.mxu0 %v1607
        %1825 = vmatpush2.bf16.msra.mxu0 %v1606
        %1826 = vmatprep.subr.bf16.mxu0 %v1603
        %1827 = vmatpush2.bf16.msra.mxu0 %v1602
        %1828 = vmatprep.subr.bf16.mxu0 %v1599
        %1829 = vmatpush2.bf16.msra.mxu0 %v1598
        %1830 = vmatprep.subr.bf16.mxu0 %v1595
        %1831 = vmatpush2.bf16.msra.mxu0 %v1594
        %1832 = vmatprep.subr.bf16.mxu0 %v1591
        %1833 = vmatpush2.bf16.msra.mxu0 %v1590
        %1834 = vmatprep.subr.bf16.mxu0 %v1587
        %1835 = vmatpush2.bf16.msra.mxu0 %v1586
        %1836 = vmatprep.subr.bf16.mxu0 %v1583
        %1837 = vmatpush2.bf16.msra.mxu0 %v1582
        %1838 = vmatprep.mubr.bf16.mxu0 %v1035
        %1839 = vmatmul.mubr.bf16.gmra.mxu0 %v1034
        %v1840 = vpop.f32.mrf.mxu0
        %v1841 = vadd.f32 0.0, %v1840
        %v1842 = vpop.f32.mrf.mxu0
        %v1843 = vadd.f32 0.0, %v1842
        %v1844 = vpop.f32.mrf.mxu0
        %v1845 = vpop.f32.mrf.mxu0
        %1846 = vdwg.mxu0
        %1847 = vmatprep.subr.bf16.mxu0 %v1643
        %1848 = vmatpush1.bf16.msra.mxu0 %v1642
        %1849 = vmatprep.subr.bf16.mxu0 %v1639
        %1850 = vmatpush1.bf16.msra.mxu0 %v1638
        %1851 = vmatprep.subr.bf16.mxu0 %v1635
        %1852 = vmatpush1.bf16.msra.mxu0 %v1634
        %1853 = vmatprep.subr.bf16.mxu0 %v1631
        %1854 = vmatpush1.bf16.msra.mxu0 %v1630
        %1855 = vmatprep.subr.bf16.mxu0 %v1627
        %1856 = vmatpush1.bf16.msra.mxu0 %v1626
        %1857 = vmatprep.subr.bf16.mxu0 %v1623
        %1858 = vmatpush1.bf16.msra.mxu0 %v1622
        %1859 = vmatprep.subr.bf16.mxu0 %v1619
        %1860 = vmatpush1.bf16.msra.mxu0 %v1618
        %1861 = vmatprep.subr.bf16.mxu0 %v1615
        %1862 = vmatpush1.bf16.msra.mxu0 %v1614
        %1863 = vmatprep.subr.bf16.mxu0 %v1675
        %1864 = vmatpush2.bf16.msra.mxu0 %v1674
        %1865 = vmatprep.subr.bf16.mxu0 %v1671
        %1866 = vmatpush2.bf16.msra.mxu0 %v1670
        %1867 = vmatprep.subr.bf16.mxu0 %v1667
        %1868 = vmatpush2.bf16.msra.mxu0 %v1666
        %1869 = vmatprep.subr.bf16.mxu0 %v1663
        %1870 = vmatpush2.bf16.msra.mxu0 %v1662
        %1871 = vmatprep.subr.bf16.mxu0 %v1659
        %1872 = vmatpush2.bf16.msra.mxu0 %v1658
        %1873 = vmatprep.subr.bf16.mxu0 %v1655
        %1874 = vmatpush2.bf16.msra.mxu0 %v1654
        %1875 = vmatprep.subr.bf16.mxu0 %v1651
        %1876 = vmatpush2.bf16.msra.mxu0 %v1650
        %1877 = vmatprep.subr.bf16.mxu0 %v1647
        %1878 = vmatpush2.bf16.msra.mxu0 %v1646
        %1879 = vmatprep.mubr.bf16.mxu0 %v1037
        %1880 = vmatmul.mubr.bf16.gmra.mxu0 %v1036
        %v1881 = vpop.f32.mrf.mxu0
        %v1882 = vadd.f32 %v1841, %v1881
        %v1883 = vpop.f32.mrf.mxu0
        %v1884 = vadd.f32 %v1843, %v1883
        %v1885 = vpop.f32.mrf.mxu0
        %v1886 = vpop.f32.mrf.mxu0
        %1887 = vdwg.mxu0
        %1888 = vmatprep.subr.bf16.mxu0 %v1581
        %1889 = vmatpush1.bf16.msra.mxu0 %v1580
        %1890 = vmatprep.subr.bf16.mxu0 %v1577
        %1891 = vmatpush1.bf16.msra.mxu0 %v1576
        %1892 = vmatprep.subr.bf16.mxu0 %v1573
        %1893 = vmatpush1.bf16.msra.mxu0 %v1572
        %1894 = vmatprep.subr.bf16.mxu0 %v1569
        %1895 = vmatpush1.bf16.msra.mxu0 %v1568
        %1896 = vmatprep.subr.bf16.mxu0 %v1565
        %1897 = vmatpush1.bf16.msra.mxu0 %v1564
        %1898 = vmatprep.subr.bf16.mxu0 %v1561
        %1899 = vmatpush1.bf16.msra.mxu0 %v1560
        %1900 = vmatprep.subr.bf16.mxu0 %v1557
        %1901 = vmatpush1.bf16.msra.mxu0 %v1556
        %1902 = vmatprep.subr.bf16.mxu0 %v1553
        %1903 = vmatpush1.bf16.msra.mxu0 %v1552
        %1904 = vmatprep.subr.bf16.mxu0 %v1613
        %1905 = vmatpush2.bf16.msra.mxu0 %v1612
        %1906 = vmatprep.subr.bf16.mxu0 %v1609
        %1907 = vmatpush2.bf16.msra.mxu0 %v1608
        %1908 = vmatprep.subr.bf16.mxu0 %v1605
        %1909 = vmatpush2.bf16.msra.mxu0 %v1604
        %1910 = vmatprep.subr.bf16.mxu0 %v1601
        %1911 = vmatpush2.bf16.msra.mxu0 %v1600
        %1912 = vmatprep.subr.bf16.mxu0 %v1597
        %1913 = vmatpush2.bf16.msra.mxu0 %v1596
        %1914 = vmatprep.subr.bf16.mxu0 %v1593
        %1915 = vmatpush2.bf16.msra.mxu0 %v1592
        %1916 = vmatprep.subr.bf16.mxu0 %v1589
        %1917 = vmatpush2.bf16.msra.mxu0 %v1588
        %1918 = vmatprep.subr.bf16.mxu0 %v1585
        %1919 = vmatpush2.bf16.msra.mxu0 %v1584
        %1920 = vmatprep.mubr.bf16.mxu0 %v1035
        %1921 = vmatmul.mubr.bf16.gmra.mxu0 %v1034
        %v1922 = vpop.f32.mrf.mxu0
        %v1923 = vadd.f32 0.0, %v1922
        %v1924 = vpop.f32.mrf.mxu0
        %v1925 = vadd.f32 0.0, %v1924
        %v1926 = vpop.f32.mrf.mxu0
        %v1927 = vpop.f32.mrf.mxu0
        %1928 = vdwg.mxu0
        %1929 = vmatprep.subr.bf16.mxu0 %v1645
        %1930 = vmatpush1.bf16.msra.mxu0 %v1644
        %1931 = vmatprep.subr.bf16.mxu0 %v1641
        %1932 = vmatpush1.bf16.msra.mxu0 %v1640
        %1933 = vmatprep.subr.bf16.mxu0 %v1637
        %1934 = vmatpush1.bf16.msra.mxu0 %v1636
        %1935 = vmatprep.subr.bf16.mxu0 %v1633
        %1936 = vmatpush1.bf16.msra.mxu0 %v1632
        %1937 = vmatprep.subr.bf16.mxu0 %v1629
        %1938 = vmatpush1.bf16.msra.mxu0 %v1628
        %1939 = vmatprep.subr.bf16.mxu0 %v1625
        %1940 = vmatpush1.bf16.msra.mxu0 %v1624
        %1941 = vmatprep.subr.bf16.mxu0 %v1621
        %1942 = vmatpush1.bf16.msra.mxu0 %v1620
        %1943 = vmatprep.subr.bf16.mxu0 %v1617
        %1944 = vmatpush1.bf16.msra.mxu0 %v1616
        %1945 = vmatprep.subr.bf16.mxu0 %v1677
        %1946 = vmatpush2.bf16.msra.mxu0 %v1676
        %1947 = vmatprep.subr.bf16.mxu0 %v1673
        %1948 = vmatpush2.bf16.msra.mxu0 %v1672
        %1949 = vmatprep.subr.bf16.mxu0 %v1669
        %1950 = vmatpush2.bf16.msra.mxu0 %v1668
        %1951 = vmatprep.subr.bf16.mxu0 %v1665
        %1952 = vmatpush2.bf16.msra.mxu0 %v1664
        %1953 = vmatprep.subr.bf16.mxu0 %v1661
        %1954 = vmatpush2.bf16.msra.mxu0 %v1660
        %1955 = vmatprep.subr.bf16.mxu0 %v1657
        %1956 = vmatpush2.bf16.msra.mxu0 %v1656
        %1957 = vmatprep.subr.bf16.mxu0 %v1653
        %1958 = vmatpush2.bf16.msra.mxu0 %v1652
        %1959 = vmatprep.subr.bf16.mxu0 %v1649
        %1960 = vmatpush2.bf16.msra.mxu0 %v1648
        %1961 = vmatprep.mubr.bf16.mxu0 %v1037
        %1962 = vmatmul.mubr.bf16.gmra.mxu0 %v1036
        %v1963 = vpop.f32.mrf.mxu0
        %v1964 = vadd.f32 %v1923, %v1963
        %v1965 = vpop.f32.mrf.mxu0
        %v1966 = vadd.f32 %v1925, %v1965
        %v1967 = vpop.f32.mrf.mxu0
        %v1968 = vpop.f32.mrf.mxu0
        %1969 = vdwg.mxu0
        %v1970 = vpack.c.bf16 %v1882, %v1882
        %v1971 = vpack.c.bf16 %v1884, %v1884
        %v1972 = vpack.c.bf16 %v1964, %v1964
        %v1973 = vpack.c.bf16 %v1966, %v1966
        %v1974 = vld [vmem:[%s6] sm:$0xf]
        %v1976 = vlaneseq
        %v1977 = vshrl.u32 %v1976, 7
        %v1978 = vsub.s32 0, %v1977
        %v1979 = vrot.slane %v1974, %v1978
        %v1980 = vlaneseq
        %v1981 = vshrl.u32 %v1980, 7
        %v1982 = vsub.s32 1, %v1981
        %v1983 = vrot.slane %v1974, %v1982
        %v1984 = vlaneseq
        %v1985 = vshrl.u32 %v1984, 7
        %v1986 = vsub.s32 2, %v1985
        %v1987 = vrot.slane %v1974, %v1986
        %v1988 = vlaneseq
        %v1989 = vshrl.u32 %v1988, 7
        %v1990 = vsub.s32 3, %v1989
        %v1991 = vrot.slane %v1974, %v1990
        %v1996 = vpack.c.bf16 %v1979, %v1979
        %v1997 = vpack.c.bf16 %v1983, %v1983
        %v1998 = vpack.c.bf16 %v1987, %v1987
        %v1999 = vpack.c.bf16 %v1991, %v1991
        %v2001 = vpack.i.b16 %v1996, %v1996
        %v2003 = vlaneseq
        %v2004 = vshrl.u32 %v2003, 7
        %v2005 = vsub.s32 0, %v2004
        %v2006 = vrot.slane %v2001, %v2005
        %v2008 = vpack.i.b16 %v1997, %v1997
        %v2010 = vlaneseq
        %v2011 = vshrl.u32 %v2010, 7
        %v2012 = vsub.s32 0, %v2011
        %v2013 = vrot.slane %v2008, %v2012
        %v2015 = vpack.i.b16 %v1998, %v1998
        %v2017 = vlaneseq
        %v2018 = vshrl.u32 %v2017, 7
        %v2019 = vsub.s32 0, %v2018
        %v2020 = vrot.slane %v2015, %v2019
        %v2022 = vpack.i.b16 %v1999, %v1999
        %v2024 = vlaneseq
        %v2025 = vshrl.u32 %v2024, 7
        %v2026 = vsub.s32 0, %v2025
        %v2027 = vrot.slane %v2022, %v2026
        %v2028 = vadd.bf16 %v1970, %v2006
        %v2029 = vadd.bf16 %v1971, %v2013
        %v2030 = vadd.bf16 %v1972, %v2020
        %v2031 = vadd.bf16 %v1973, %v2027
        %v2032 = vmul.bf16 %v2028, %v2028
        %v2033 = vmul.bf16 %v2029, %v2029
        %v2034 = vmul.bf16 %v2030, %v2030
        %v2035 = vmul.bf16 %v2031, %v2031
        %v2036 = vmul.bf16 %v2032, %v2028
        %v2037 = vmul.bf16 %v2033, %v2029
        %v2038 = vmul.bf16 %v2034, %v2030
        %v2039 = vmul.bf16 %v2035, %v2031
        %v2040 = vmul.bf16 %v2036, 1027030327
        %v2041 = vmul.bf16 %v2037, 1027030327
        %v2042 = vmul.bf16 %v2038, 1027030327
        %v2043 = vmul.bf16 %v2039, 1027030327
        %v2044 = vadd.bf16 %v2028, %v2040
        %v2045 = vadd.bf16 %v2029, %v2041
        %v2046 = vadd.bf16 %v2030, %v2042
        %v2047 = vadd.bf16 %v2031, %v2043
        %v2048 = vmul.bf16 %v2044, 1061961548
        %v2049 = vmul.bf16 %v2045, 1061961548
        %v2050 = vmul.bf16 %v2046, 1061961548
        %v2051 = vmul.bf16 %v2047, 1061961548
        %v2052 = vmul.bf16 %v2028, 1056980736
        %v2053 = vmul.bf16 %v2029, 1056980736
        %v2054 = vmul.bf16 %v2030, 1056980736
        %v2055 = vmul.bf16 %v2031, 1056980736
        %v2056 = vtanh.bf16.pop %v2048
        %v2057 = vtanh.bf16.pop %v2049
        %v2058 = vtanh.bf16.pop %v2050
        %v2059 = vtanh.bf16.pop %v2051
        %v2060 = vadd.bf16 %v2056, 1065369472
        %v2061 = vadd.bf16 %v2057, 1065369472
        %v2062 = vadd.bf16 %v2058, 1065369472
        %v2063 = vadd.bf16 %v2059, 1065369472
        %v2064 = vmul.bf16 %v2052, %v2060
        %v2065 = vmul.bf16 %v2053, %v2061
        %v2066 = vmul.bf16 %v2054, %v2062
        %v2067 = vmul.bf16 %v2055, %v2063
        %v2068 = vld [vmem:[#allocation11] sm:$0xf]
        %v2069 = vld [vmem:[#allocation11 + $0x4] sm:$0xf]
        %v2070 = vld [vmem:[#allocation11 + $0x8] sm:$0xf]
        %v2071 = vld [vmem:[#allocation11 + $0xc] sm:$0xf]
        %v2072 = vld [vmem:[#allocation11 + $0x10] sm:$0xf]
        %v2073 = vld [vmem:[#allocation11 + $0x14] sm:$0xf]
        %v2074 = vld [vmem:[#allocation11 + $0x18] sm:$0xf]
        %v2075 = vld [vmem:[#allocation11 + $0x1c] sm:$0xf]
        %v2076 = vld [vmem:[#allocation11 + $0x20] sm:$0xf]
        %v2077 = vld [vmem:[#allocation11 + $0x24] sm:$0xf]
        %v2078 = vld [vmem:[#allocation11 + $0x28] sm:$0xf]
        %v2079 = vld [vmem:[#allocation11 + $0x2c] sm:$0xf]
        %v2080 = vld [vmem:[#allocation11 + $0x30] sm:$0xf]
        %v2081 = vld [vmem:[#allocation11 + $0x34] sm:$0xf]
        %v2082 = vld [vmem:[#allocation11 + $0x38] sm:$0xf]
        %v2083 = vld [vmem:[#allocation11 + $0x3c] sm:$0xf]
        %v2084 = vld [vmem:[#allocation11 + $0x40] sm:$0xf]
        %v2085 = vld [vmem:[#allocation11 + $0x44] sm:$0xf]
        %v2086 = vld [vmem:[#allocation11 + $0x48] sm:$0xf]
        %v2087 = vld [vmem:[#allocation11 + $0x4c] sm:$0xf]
        %v2088 = vld [vmem:[#allocation11 + $0x50] sm:$0xf]
        %v2089 = vld [vmem:[#allocation11 + $0x54] sm:$0xf]
        %v2090 = vld [vmem:[#allocation11 + $0x58] sm:$0xf]
        %v2091 = vld [vmem:[#allocation11 + $0x5c] sm:$0xf]
        %v2092 = vld [vmem:[#allocation11 + $0x60] sm:$0xf]
        %v2093 = vld [vmem:[#allocation11 + $0x64] sm:$0xf]
        %v2094 = vld [vmem:[#allocation11 + $0x68] sm:$0xf]
        %v2095 = vld [vmem:[#allocation11 + $0x6c] sm:$0xf]
        %v2096 = vld [vmem:[#allocation11 + $0x70] sm:$0xf]
        %v2097 = vld [vmem:[#allocation11 + $0x74] sm:$0xf]
        %v2098 = vld [vmem:[#allocation11 + $0x78] sm:$0xf]
        %v2099 = vld [vmem:[#allocation11 + $0x7c] sm:$0xf]
        %v2100 = vld [vmem:[#allocation11 + $0x80] sm:$0xf]
        %v2101 = vld [vmem:[#allocation11 + $0x84] sm:$0xf]
        %v2102 = vld [vmem:[#allocation11 + $0x88] sm:$0xf]
        %v2103 = vld [vmem:[#allocation11 + $0x8c] sm:$0xf]
        %v2104 = vld [vmem:[#allocation11 + $0x90] sm:$0xf]
        %v2105 = vld [vmem:[#allocation11 + $0x94] sm:$0xf]
        %v2106 = vld [vmem:[#allocation11 + $0x98] sm:$0xf]
        %v2107 = vld [vmem:[#allocation11 + $0x9c] sm:$0xf]
        %v2108 = vld [vmem:[#allocation11 + $0xa0] sm:$0xf]
        %v2109 = vld [vmem:[#allocation11 + $0xa4] sm:$0xf]
        %v2110 = vld [vmem:[#allocation11 + $0xa8] sm:$0xf]
        %v2111 = vld [vmem:[#allocation11 + $0xac] sm:$0xf]
        %v2112 = vld [vmem:[#allocation11 + $0xb0] sm:$0xf]
        %v2113 = vld [vmem:[#allocation11 + $0xb4] sm:$0xf]
        %v2114 = vld [vmem:[#allocation11 + $0xb8] sm:$0xf]
        %v2115 = vld [vmem:[#allocation11 + $0xbc] sm:$0xf]
        %v2116 = vld [vmem:[#allocation11 + $0xc0] sm:$0xf]
        %v2117 = vld [vmem:[#allocation11 + $0xc4] sm:$0xf]
        %v2118 = vld [vmem:[#allocation11 + $0xc8] sm:$0xf]
        %v2119 = vld [vmem:[#allocation11 + $0xcc] sm:$0xf]
        %v2120 = vld [vmem:[#allocation11 + $0xd0] sm:$0xf]
        %v2121 = vld [vmem:[#allocation11 + $0xd4] sm:$0xf]
        %v2122 = vld [vmem:[#allocation11 + $0xd8] sm:$0xf]
        %v2123 = vld [vmem:[#allocation11 + $0xdc] sm:$0xf]
        %v2124 = vld [vmem:[#allocation11 + $0xe0] sm:$0xf]
        %v2125 = vld [vmem:[#allocation11 + $0xe4] sm:$0xf]
        %v2126 = vld [vmem:[#allocation11 + $0xe8] sm:$0xf]
        %v2127 = vld [vmem:[#allocation11 + $0xec] sm:$0xf]
        %v2128 = vld [vmem:[#allocation11 + $0xf0] sm:$0xf]
        %v2129 = vld [vmem:[#allocation11 + $0xf4] sm:$0xf]
        %v2130 = vld [vmem:[#allocation11 + $0xf8] sm:$0xf]
        %v2131 = vld [vmem:[#allocation11 + $0xfc] sm:$0xf]
        %v2132 = vld [vmem:[%s8] sm:$0x1]
        %v2134 = vlaneseq
        %v2135 = vshrl.u32 %v2134, 7
        %v2136 = vsub.s32 0, %v2135
        %v2137 = vrot.slane %v2132, %v2136
        %v2203 = vunpack.c.l.b16 %v2068
        %v2204 = vunpack.c.l.b16 %v2069
        %v2205 = vunpack.c.l.b16 %v2070
        %v2206 = vunpack.c.l.b16 %v2071
        %v2207 = vunpack.c.l.b16 %v2072
        %v2208 = vunpack.c.l.b16 %v2073
        %v2209 = vunpack.c.l.b16 %v2074
        %v2210 = vunpack.c.l.b16 %v2075
        %v2211 = vunpack.c.l.b16 %v2076
        %v2212 = vunpack.c.l.b16 %v2077
        %v2213 = vunpack.c.l.b16 %v2078
        %v2214 = vunpack.c.l.b16 %v2079
        %v2215 = vunpack.c.l.b16 %v2080
        %v2216 = vunpack.c.l.b16 %v2081
        %v2217 = vunpack.c.l.b16 %v2082
        %v2218 = vunpack.c.l.b16 %v2083
        %v2219 = vunpack.c.l.b16 %v2084
        %v2220 = vunpack.c.l.b16 %v2085
        %v2221 = vunpack.c.l.b16 %v2086
        %v2222 = vunpack.c.l.b16 %v2087
        %v2223 = vunpack.c.l.b16 %v2088
        %v2224 = vunpack.c.l.b16 %v2089
        %v2225 = vunpack.c.l.b16 %v2090
        %v2226 = vunpack.c.l.b16 %v2091
        %v2227 = vunpack.c.l.b16 %v2092
        %v2228 = vunpack.c.l.b16 %v2093
        %v2229 = vunpack.c.l.b16 %v2094
        %v2230 = vunpack.c.l.b16 %v2095
        %v2231 = vunpack.c.l.b16 %v2096
        %v2232 = vunpack.c.l.b16 %v2097
        %v2233 = vunpack.c.l.b16 %v2098
        %v2234 = vunpack.c.l.b16 %v2099
        %v2235 = vunpack.c.l.b16 %v2100
        %v2236 = vunpack.c.l.b16 %v2101
        %v2237 = vunpack.c.l.b16 %v2102
        %v2238 = vunpack.c.l.b16 %v2103
        %v2239 = vunpack.c.l.b16 %v2104
        %v2240 = vunpack.c.l.b16 %v2105
        %v2241 = vunpack.c.l.b16 %v2106
        %v2242 = vunpack.c.l.b16 %v2107
        %v2243 = vunpack.c.l.b16 %v2108
        %v2244 = vunpack.c.l.b16 %v2109
        %v2245 = vunpack.c.l.b16 %v2110
        %v2246 = vunpack.c.l.b16 %v2111
        %v2247 = vunpack.c.l.b16 %v2112
        %v2248 = vunpack.c.l.b16 %v2113
        %v2249 = vunpack.c.l.b16 %v2114
        %v2250 = vunpack.c.l.b16 %v2115
        %v2251 = vunpack.c.l.b16 %v2116
        %v2252 = vunpack.c.l.b16 %v2117
        %v2253 = vunpack.c.l.b16 %v2118
        %v2254 = vunpack.c.l.b16 %v2119
        %v2255 = vunpack.c.l.b16 %v2120
        %v2256 = vunpack.c.l.b16 %v2121
        %v2257 = vunpack.c.l.b16 %v2122
        %v2258 = vunpack.c.l.b16 %v2123
        %v2259 = vunpack.c.l.b16 %v2124
        %v2260 = vunpack.c.l.b16 %v2125
        %v2261 = vunpack.c.l.b16 %v2126
        %v2262 = vunpack.c.l.b16 %v2127
        %v2263 = vunpack.c.l.b16 %v2128
        %v2264 = vunpack.c.l.b16 %v2129
        %v2265 = vunpack.c.l.b16 %v2130
        %v2266 = vunpack.c.l.b16 %v2131
        %v2267 = vpack.c.b16 %v2204, %v2203
        %v2268 = vpack.c.b16 %v2206, %v2205
        %v2269 = vpack.c.b16 %v2208, %v2207
        %v2270 = vpack.c.b16 %v2210, %v2209
        %v2271 = vpack.c.b16 %v2212, %v2211
        %v2272 = vpack.c.b16 %v2214, %v2213
        %v2273 = vpack.c.b16 %v2216, %v2215
        %v2274 = vpack.c.b16 %v2218, %v2217
        %v2275 = vpack.c.b16 %v2220, %v2219
        %v2276 = vpack.c.b16 %v2222, %v2221
        %v2277 = vpack.c.b16 %v2224, %v2223
        %v2278 = vpack.c.b16 %v2226, %v2225
        %v2279 = vpack.c.b16 %v2228, %v2227
        %v2280 = vpack.c.b16 %v2230, %v2229
        %v2281 = vpack.c.b16 %v2232, %v2231
        %v2282 = vpack.c.b16 %v2234, %v2233
        %v2283 = vpack.c.b16 %v2236, %v2235
        %v2284 = vpack.c.b16 %v2238, %v2237
        %v2285 = vpack.c.b16 %v2240, %v2239
        %v2286 = vpack.c.b16 %v2242, %v2241
        %v2287 = vpack.c.b16 %v2244, %v2243
        %v2288 = vpack.c.b16 %v2246, %v2245
        %v2289 = vpack.c.b16 %v2248, %v2247
        %v2290 = vpack.c.b16 %v2250, %v2249
        %v2291 = vpack.c.b16 %v2252, %v2251
        %v2292 = vpack.c.b16 %v2254, %v2253
        %v2293 = vpack.c.b16 %v2256, %v2255
        %v2294 = vpack.c.b16 %v2258, %v2257
        %v2295 = vpack.c.b16 %v2260, %v2259
        %v2296 = vpack.c.b16 %v2262, %v2261
        %v2297 = vpack.c.b16 %v2264, %v2263
        %v2298 = vpack.c.b16 %v2266, %v2265
        %2331 = vmatprep.subr.bf16.mxu0 0
        %2332 = vmatpush1.bf16.msra.mxu0 %v2274
        %2333 = vmatprep.subr.bf16.mxu0 0
        %2334 = vmatpush1.bf16.msra.mxu0 %v2273
        %2335 = vmatprep.subr.bf16.mxu0 0
        %2336 = vmatpush1.bf16.msra.mxu0 %v2272
        %2337 = vmatprep.subr.bf16.mxu0 0
        %2338 = vmatpush1.bf16.msra.mxu0 %v2271
        %2339 = vmatprep.subr.bf16.mxu0 0
        %2340 = vmatpush1.bf16.msra.mxu0 %v2270
        %2341 = vmatprep.subr.bf16.mxu0 0
        %2342 = vmatpush1.bf16.msra.mxu0 %v2269
        %2343 = vmatprep.subr.bf16.mxu0 0
        %2344 = vmatpush1.bf16.msra.mxu0 %v2268
        %2345 = vmatprep.subr.bf16.mxu0 0
        %2346 = vmatpush1.bf16.msra.mxu0 %v2267
        %2347 = vmatprep.subr.bf16.mxu0 0
        %2348 = vmatpush2.bf16.msra.mxu0 %v2282
        %2349 = vmatprep.subr.bf16.mxu0 0
        %2350 = vmatpush2.bf16.msra.mxu0 %v2281
        %2351 = vmatprep.subr.bf16.mxu0 0
        %2352 = vmatpush2.bf16.msra.mxu0 %v2280
        %2353 = vmatprep.subr.bf16.mxu0 0
        %2354 = vmatpush2.bf16.msra.mxu0 %v2279
        %2355 = vmatprep.subr.bf16.mxu0 0
        %2356 = vmatpush2.bf16.msra.mxu0 %v2278
        %2357 = vmatprep.subr.bf16.mxu0 0
        %2358 = vmatpush2.bf16.msra.mxu0 %v2277
        %2359 = vmatprep.subr.bf16.mxu0 0
        %2360 = vmatpush2.bf16.msra.mxu0 %v2276
        %2361 = vmatprep.subr.bf16.mxu0 0
        %2362 = vmatpush2.bf16.msra.mxu0 %v2275
        %2363 = vmatprep.mubr.bf16.mxu0 %v2065
        %2364 = vmatmul.mubr.bf16.gmra.mxu0 %v2064
        %v2365 = vpop.f32.mrf.mxu0
        %v2366 = vadd.f32 %v2137, %v2365
        %v2367 = vpop.f32.mrf.mxu0
        %v2368 = vpop.f32.mrf.mxu0
        %v2369 = vpop.f32.mrf.mxu0
        %2370 = vdwg.mxu0
        %2371 = vmatprep.subr.bf16.mxu0 0
        %2372 = vmatpush1.bf16.msra.mxu0 %v2290
        %2373 = vmatprep.subr.bf16.mxu0 0
        %2374 = vmatpush1.bf16.msra.mxu0 %v2289
        %2375 = vmatprep.subr.bf16.mxu0 0
        %2376 = vmatpush1.bf16.msra.mxu0 %v2288
        %2377 = vmatprep.subr.bf16.mxu0 0
        %2378 = vmatpush1.bf16.msra.mxu0 %v2287
        %2379 = vmatprep.subr.bf16.mxu0 0
        %2380 = vmatpush1.bf16.msra.mxu0 %v2286
        %2381 = vmatprep.subr.bf16.mxu0 0
        %2382 = vmatpush1.bf16.msra.mxu0 %v2285
        %2383 = vmatprep.subr.bf16.mxu0 0
        %2384 = vmatpush1.bf16.msra.mxu0 %v2284
        %2385 = vmatprep.subr.bf16.mxu0 0
        %2386 = vmatpush1.bf16.msra.mxu0 %v2283
        %2387 = vmatprep.subr.bf16.mxu0 0
        %2388 = vmatpush2.bf16.msra.mxu0 %v2298
        %2389 = vmatprep.subr.bf16.mxu0 0
        %2390 = vmatpush2.bf16.msra.mxu0 %v2297
        %2391 = vmatprep.subr.bf16.mxu0 0
        %2392 = vmatpush2.bf16.msra.mxu0 %v2296
        %2393 = vmatprep.subr.bf16.mxu0 0
        %2394 = vmatpush2.bf16.msra.mxu0 %v2295
        %2395 = vmatprep.subr.bf16.mxu0 0
        %2396 = vmatpush2.bf16.msra.mxu0 %v2294
        %2397 = vmatprep.subr.bf16.mxu0 0
        %2398 = vmatpush2.bf16.msra.mxu0 %v2293
        %2399 = vmatprep.subr.bf16.mxu0 0
        %2400 = vmatpush2.bf16.msra.mxu0 %v2292
        %2401 = vmatprep.subr.bf16.mxu0 0
        %2402 = vmatpush2.bf16.msra.mxu0 %v2291
        %2403 = vmatprep.mubr.bf16.mxu0 %v2067
        %2404 = vmatmul.mubr.bf16.gmra.mxu0 %v2066
        %v2405 = vpop.f32.mrf.mxu0
        %v2406 = vadd.f32 %v2366, %v2405
        %v2407 = vpop.f32.mrf.mxu0
        %v2408 = vpop.f32.mrf.mxu0
        %v2409 = vpop.f32.mrf.mxu0
        %2410 = vdwg.mxu0
        %v2411 = vmul.f32 %v2406, %v2406
        %2412 = vadd.xlane.f32.xlu0 %v2411
        %v2413 = vpop.xlane.xlu0 %2412
        %v2414 = vmax.f32 %v2413, 1e-24
        %v2415 = vrsqrt.pop %v2414
        %v2416 = vmul.f32 %v2406, %v2415
        %2417 = vst [vmem:[%s417] sm:$0xff] %v2416
        %s2418 = sand.u32 %s231, 1
        %s2419 = scalar_lea.sflag [#allocation4], %s2418
        %s2420 = sand.u32 %s231, 1
        %s2421 = smul.addr %s2420, 8
        %s2422 = scalar_lea.vmem [#allocation13], %s2421
        // Predicated region
        $region81: #{tpu_custom_call.1} parent=55 // pred_check
          %p2423 = pneg %p241
        $region82: #{tpu_custom_call.1} parent=55 // pred_check_branch
          %2425 = sbr.rel (%p2423) target = $region84
        $region83: #{tpu_custom_call.1} parent=55 // pred_region
          %s2427 = ssub.s32 128, 128
          %2428 = vsyncadd %s2419, %s2427
          %s2429 = smul.addr %s29, 128
          %s2430 = scalar_lea.hbm %s9, %s2429
          %s2432 = sshll.u32 %s2422, 4
          %s2433 = int_to_ptr.vmem [resolvable:$true] %s2432
          %2435 = dma.vmem_to_hbm [thread:$0]  %s2433, 128, %s2430, %s2419
        $region84: #{tpu_custom_call.1} parent=55 // pred_fallthru
          _
      $region56: #{tpu_custom_call.1} parent=5 // pred_fallthru
        _
      %p2436 = scmp.le.s32.totalorder 2, %s24
      // Predicated region
      $region85: #{tpu_custom_call.1} parent=5 // pred_check
        %p2437 = pneg %p2436
      $region86: #{tpu_custom_call.1} parent=5 // pred_check_branch
        %2439 = sbr.rel (%p2437) target = $region88
      $region87: #{tpu_custom_call.1} parent=5 // pred_region
        %s2440 = ssub.s32 %s24, 2
        // Predicated region
        $region89: #{tpu_custom_call.1} parent=87 // pred_check
          %p2441 = pneg %p247
        $region90: #{tpu_custom_call.1} parent=87 // pred_check_branch
          %2443 = sbr.rel (%p2441) target = $region92
        $region91: #{tpu_custom_call.1} parent=87 // pred_region
          %s2444 = sand.u32 %s232, 1
          %s2445 = scalar_lea.sflag [#allocation4], %s2444
          %s2446 = sand.u32 %s232, 1
          %s2447 = smul.addr %s2446, 8
          %s2448 = scalar_lea.vmem [#allocation13], %s2447
          %2449 = dma.done %s2445, 128
        $region92: #{tpu_custom_call.1} parent=87 // pred_fallthru
          _
      $region88: #{tpu_custom_call.1} parent=5 // pred_fallthru
        _
    $region6: #{tpu_custom_call.1} parent=1 // loop_footer
      %s28 = sadd.s32 1, %s24
    $region7: #{tpu_custom_call.1} parent=1 // loop_footer_branch
      %23 = sbr.rel target = $region3
    $region8: #{tpu_custom_call.1} parent=1 // loop_exit
      _
    %2450 = vsyncpa [#allocation3], 1
    %s2451 = scalar_lea.sflag [#allocation3], 1
    %2452 = vsyncpa %s2451, 1
    %2453 = vsyncpa [#allocation6], 1
    %2454 = vsyncpa [#allocation9], 1
    %2455 = vsyncpa [#allocation12], 1
    %2456 = vsyncpa [#allocation4], 1
    %s2457 = scalar_lea.sflag [#allocation4], 1
    %2458 = vsyncpa %s2457, 1

</llo_original>
